<compile_context>
chip_gen: v5e
topology: v5e:2x2
jax: 0.10.0
libtpu: 0.0.40
codegen_flags: <defaults>
</compile_context>

<pallas_src>
import functools

import jax
import jax.numpy as jnp
from jax.experimental import pallas as pl
from jax.experimental.pallas import tpu as pltpu


def _round_up(x, m):
    return (x + m - 1) // m * m


def _mosaic_params(dim_sems, block_bytes):
    # Generous scoped-VMEM request: double-buffered blocks + margin, floored at
    # 16 MiB (v5e default scoped limit) and capped at 64 MiB (v7x physical).
    limit = int(min(max(2 * block_bytes + (8 << 20), 16 << 20), 64 << 20))
    return pltpu.CompilerParams(dimension_semantics=dim_sems,
                                vmem_limit_bytes=limit)


# ---------------------------------------------------------------------------
# Kernel 1: hoisted input-side projection (parallel over stacked (t*B) rows)
#   gates_x = relu(x @ W_in + b_in) @ W_ih + (b_ih + b_hh)
# ---------------------------------------------------------------------------
def _inproj_kernel(x_ref, w_in_ref, b_in_ref, w_ih_ref, b_g_ref, gx_ref):
    x0 = jnp.maximum(
        jnp.dot(x_ref[...], w_in_ref[...], preferred_element_type=jnp.float32)
        + b_in_ref[...], 0.0)
    gx_ref[...] = (
        jnp.dot(x0, w_ih_ref[...], preferred_element_type=jnp.float32)
        + b_g_ref[...])


# ---------------------------------------------------------------------------
# Kernel 2: sequential LSTM recurrence.  Grid = (batch tiles [parallel],
# time blocks [arbitrary]); T_BLK steps per grid iteration; h/c carried in
# VMEM scratch across the time-block axis.
# ---------------------------------------------------------------------------
def _recurrent_kernel(gx_ref, w_hh_ref, h_out_ref, h_scr, c_scr, *, t_blk, hp):
    @pl.when(pl.program_id(1) == 0)     # new batch tile -> reset carried state
    def _():
        h_scr[...] = jnp.zeros_like(h_scr)
        c_scr[...] = jnp.zeros_like(c_scr)

    w_hh = w_hh_ref[...]                # hoisted load, resident across steps

    def step(s, carry):
        gates = gx_ref[s] + jnp.dot(h_scr[...], w_hh,
                                    preferred_element_type=jnp.float32)
        # gate slices are lane-aligned (hp is a multiple of 128) -> pure views
        gate_i = jax.nn.sigmoid(gates[:, 0 * hp:1 * hp])
        gate_f = jax.nn.sigmoid(gates[:, 1 * hp:2 * hp])
        gate_c = jnp.tanh(gates[:, 2 * hp:3 * hp])
        gate_o = jax.nn.sigmoid(gates[:, 3 * hp:4 * hp])
        c1 = gate_f * c_scr[...] + gate_i * gate_c
        h1 = gate_o * jnp.tanh(c1)
        h_scr[...] = h1
        c_scr[...] = c1
        h_out_ref[s] = h1               # lane-dense (B_tile, Hp) store
        return carry

    jax.lax.fori_loop(0, t_blk, step, 0, unroll=True)


def kuai_lstm_forward(x, params, *, t_blk=16, vmem_budget_per_buf=4 << 20):
    """x: (nt, ngrid, nx) f32 -> (nt, ngrid, ny) f32 (eval-mode KuaiLstm)."""
    nt, B, nx = x.shape
    w_in_t, b_in = params["w_in_t"], params["b_in"]
    w_ih_t, b_ih = params["w_ih_t"], params["b_ih"]
    w_hh_t, b_hh = params["w_hh_t"], params["b_hh"]
    w_out_t, b_out = params["w_out_t"], params["b_out"]
    H = w_in_t.shape[1]

    # ---- alignment / tiling choices ---------------------------------------
    Hp = _round_up(H, 128)                     # lane-aligned gates & h
    if B <= 128:
        B_pad = B_tile = _round_up(B, 8)
    else:                                      # megacore: parallel batch tiles
        B_pad, B_tile = _round_up(B, 128), 128

    t_blk = max(1, min(t_blk, nt))
    while t_blk > 1 and t_blk * B_pad * 4 * Hp * 4 > vmem_budget_per_buf:
        t_blk = max(1, t_blk // 2)             # keep blocks VMEM-safe (v7x)
    nt_pad = _round_up(nt, t_blk)

    # ---- zero-pad weights so padded hidden units stay exactly 0 -----------
    def _pad2(a, r, c):
        return jnp.zeros((r, c), a.dtype).at[:a.shape[0], :a.shape[1]].set(a)

    def _pad_gates(a, rows_pad):               # (rows, 4H) -> (rows_pad, 4*Hp)
        rows = a.shape[0]
        a4 = a.reshape(rows, 4, H)
        out = jnp.zeros((rows_pad, 4, Hp), a.dtype).at[:rows, :, :H].set(a4)
        return out.reshape(rows_pad, 4 * Hp)

    w_in_p = _pad2(w_in_t, nx, Hp)             # (nx, Hp)
    b_in_p = _pad2(b_in, 1, Hp)                # (1, Hp)
    w_ih_p = _pad_gates(w_ih_t, Hp)            # (Hp, 4Hp)
    w_hh_p = _pad_gates(w_hh_t, Hp)            # (Hp, 4Hp)
    b_g_p = _pad_gates(b_ih + b_hh, 1)         # (1, 4Hp) fused LSTM bias

    x_p = jnp.zeros((nt_pad, B_pad, nx), jnp.float32).at[:nt, :B, :].set(x)
    x2 = x_p.reshape(nt_pad * B_pad, nx)

    # ---- 1) hoisted input projection (big parallel matmuls) ---------------
    n_rows = nt_pad * B_pad
    r_blk = t_blk * B_pad
    full = lambda a: pl.BlockSpec(a.shape, lambda r: (0,) * a.ndim)
    in_blk_bytes = 4 * (r_blk * nx + r_blk * 4 * Hp
                        + nx * Hp + Hp + Hp * 4 * Hp + 4 * Hp)
    gx2 = pl.pallas_call(
        _inproj_kernel,
        out_shape=jax.ShapeDtypeStruct((n_rows, 4 * Hp), jnp.float32),
        grid_spec=pltpu.PrefetchScalarGridSpec(
            num_scalar_prefetch=0,
            grid=(n_rows // r_blk,),
            in_specs=[pl.BlockSpec((r_blk, nx), lambda r: (r, 0)),
                      full(w_in_p), full(b_in_p), full(w_ih_p), full(b_g_p)],
            out_specs=pl.BlockSpec((r_blk, 4 * Hp), lambda r: (r, 0)),
        ),
        compiler_params=_mosaic_params(("parallel",), in_blk_bytes),
        cost_estimate=pl.CostEstimate(
            flops=2 * n_rows * (nx * Hp + Hp * 4 * Hp),
            transcendentals=0,
            bytes_accessed=4 * (n_rows * nx + n_rows * 4 * Hp
                                + nx * Hp + Hp * 4 * Hp + 5 * Hp)),
    )(x2, w_in_p, b_in_p, w_ih_p, b_g_p)
    gates_x = gx2.reshape(nt_pad, B_pad, 4 * Hp)

    # ---- 2) sequential recurrence ------------------------------------------
    rec_blk_bytes = 4 * (t_blk * B_tile * 4 * Hp + Hp * 4 * Hp
                         + t_blk * B_tile * Hp + 2 * B_tile * Hp)
    kernel = functools.partial(_recurrent_kernel, t_blk=t_blk, hp=Hp)
    h_stack = pl.pallas_call(
        kernel,
        out_shape=jax.ShapeDtypeStruct((nt_pad, B_pad, Hp), jnp.float32),
        grid_spec=pltpu.PrefetchScalarGridSpec(
            num_scalar_prefetch=0,
            grid=(B_pad // B_tile, nt_pad // t_blk),   # batch outer, time inner
            in_specs=[
                pl.BlockSpec((t_blk, B_tile, 4 * Hp), lambda b, t: (t, b, 0)),
                pl.BlockSpec((Hp, 4 * Hp), lambda b, t: (0, 0)),
            ],
            out_specs=pl.BlockSpec((t_blk, B_tile, Hp), lambda b, t: (t, b, 0)),
            scratch_shapes=[pltpu.VMEM((B_tile, Hp), jnp.float32),   # h carry
                            pltpu.VMEM((B_tile, Hp), jnp.float32)],  # c carry
        ),
        compiler_params=_mosaic_params(("parallel", "arbitrary"),
                                       rec_blk_bytes),
        cost_estimate=pl.CostEstimate(
            flops=2 * nt_pad * B_pad * Hp * 4 * Hp + 12 * nt_pad * B_pad * Hp,
            transcendentals=5 * nt_pad * B_pad * Hp,
            bytes_accessed=4 * (nt_pad * B_pad * 5 * Hp + Hp * 4 * Hp)),
    )(gates_x, w_hh_p)

    # ---- 3) hoisted output projection (plain XLA, per perf review) --------
    h_real = h_stack[:nt, :B, :H]
    return jnp.dot(h_real, w_out_t, preferred_element_type=jnp.float32) + b_out


def kuai_lstm_reference(x, params):
    """Pure-JAX reference (lax.scan) for correctness checking."""
    w_in_t, b_in = params["w_in_t"], params["b_in"]
    w_ih_t, b_ih = params["w_ih_t"], params["b_ih"]
    w_hh_t, b_hh = params["w_hh_t"], params["b_hh"]
    w_out_t, b_out = params["w_out_t"], params["b_out"]
    H = w_in_t.shape[1]
    B = x.shape[1]

    def step(carry, xt):
        h0, c0 = carry
        x0 = jnp.maximum(xt @ w_in_t + b_in, 0.0)
        gates = x0 @ w_ih_t + b_ih + h0 @ w_hh_t + b_hh
        gi = jax.nn.sigmoid(gates[:, 0 * H:1 * H])
        gf = jax.nn.sigmoid(gates[:, 1 * H:2 * H])
        gc = jnp.tanh(gates[:, 2 * H:3 * H])
        go = jax.nn.sigmoid(gates[:, 3 * H:4 * H])
        c1 = gf * c0 + gi * gc
        h1 = go * jnp.tanh(c1)
        return (h1, c1), h1 @ w_out_t + b_out

    init = (jnp.zeros((B, H), jnp.float32), jnp.zeros((B, H), jnp.float32))
    _, ys = jax.lax.scan(step, init, x)
    return ys


def init_params(key, nx, ny, hidden):
    """Deterministic init mirroring the module's __init__ shapes."""
    ks = jax.random.split(key, 8)
    stdv_lin_in = 1.0 / jnp.sqrt(nx)
    stdv_lstm = 1.0 / jnp.sqrt(hidden)
    stdv_lin_out = 1.0 / jnp.sqrt(hidden)
    u = lambda k, shape, s: jax.random.uniform(
        k, shape, jnp.float32, minval=-s, maxval=s)
    return {
        "w_in_t": u(ks[0], (nx, hidden), stdv_lin_in),       # linearIn
        "b_in":   u(ks[1], (1, hidden), stdv_lin_in),
        "w_ih_t": u(ks[2], (hidden, 4 * hidden), stdv_lstm),  # tied-gate LSTM
        "w_hh_t": u(ks[3], (hidden, 4 * hidden), stdv_lstm),
        "b_ih":   u(ks[4], (1, 4 * hidden), stdv_lstm),
        "b_hh":   u(ks[5], (1, 4 * hidden), stdv_lstm),
        "w_out_t": u(ks[6], (hidden, ny), stdv_lin_out),      # linearOut
        "b_out":   u(ks[7], (1, ny), stdv_lin_out),
    }


if __name__ == "__main__":
    fwd = jax.jit(kuai_lstm_forward,
                  static_argnames=("t_blk", "vmem_budget_per_buf"))

    key = jax.random.PRNGKey(0)
    kx, kp, k2x, k2p = jax.random.split(key, 4)

    # Primary test: (time, grid cells, input features) as the module expects.
    nt, ngrid, nx = 8, 16, 4
    hidden, ny = 32, 1
    x = jax.random.normal(kx, (nt, ngrid, nx), jnp.float32)
    params = init_params(kp, nx, ny, hidden)

    out = jax.block_until_ready(fwd(x, params))
    ref = jax.block_until_ready(kuai_lstm_reference(x, params))
    assert out.shape == (nt, ngrid, ny)
    err = float(jnp.max(jnp.abs(out - ref)))
    assert err < 2e-5, f"primary max err {err}"

    # Secondary test: exercises the time / batch / hidden padding paths.
    nt2, ngrid2, nx2, hidden2, ny2 = 11, 10, 5, 48, 2
    x2 = jax.random.normal(k2x, (nt2, ngrid2, nx2), jnp.float32)
    params2 = init_params(k2p, nx2, ny2, hidden2)
    out2 = jax.block_until_ready(fwd(x2, params2, t_blk=4))
    ref2 = jax.block_until_ready(kuai_lstm_reference(x2, params2))
    assert out2.shape == (nt2, ngrid2, ny2)
    err2 = float(jnp.max(jnp.abs(out2 - ref2)))
    assert err2 < 2e-5, f"secondary max err {err2}"

    print("KERNEL_OK")
</pallas_src>

<mosaic_0001>
module attributes {stable_mosaic.version = 11 : i64} {
  func.func @_inproj_kernel(%arg0: i32, %arg1: memref<128x4xf32, #tpu.memory_space<vmem>>, %arg2: memref<4x128xf32, #tpu.memory_space<vmem>>, %arg3: memref<1x128xf32, #tpu.memory_space<vmem>>, %arg4: memref<128x512xf32, #tpu.memory_space<vmem>>, %arg5: memref<1x512xf32, #tpu.memory_space<vmem>>, %arg6: memref<128x512xf32, #tpu.memory_space<vmem>>) attributes {dimension_semantics = [#tpu.dimension_semantics<parallel>], iteration_bounds = array<i64: 1>, scalar_prefetch = 0 : i64, scratch_operands = 0 : i64, tpu.core_type = #tpu.core_type<tc>, window_params = [{transform_indices = @transform_0, window_bounds = array<i64: 128, 4>}, {pipeline_mode = #tpu.pipeline_mode<synchronous>, transform_indices = @transform_1, window_bounds = array<i64: 4, 128>}, {pipeline_mode = #tpu.pipeline_mode<synchronous>, transform_indices = @transform_2, window_bounds = array<i64: 1, 128>}, {pipeline_mode = #tpu.pipeline_mode<synchronous>, transform_indices = @transform_3, window_bounds = array<i64: 128, 512>}, {pipeline_mode = #tpu.pipeline_mode<synchronous>, transform_indices = @transform_4, window_bounds = array<i64: 1, 512>}, {transform_indices = @transform_5, window_bounds = array<i64: 128, 512>}]} {
    %c0 = arith.constant 0 : index
    %c0_0 = arith.constant 0 : index
    %0 = vector.load %arg1[%c0, %c0_0] : memref<128x4xf32, #tpu.memory_space<vmem>>, vector<128x4xf32>
    %c0_1 = arith.constant 0 : index
    %c0_2 = arith.constant 0 : index
    %1 = vector.load %arg2[%c0_1, %c0_2] : memref<4x128xf32, #tpu.memory_space<vmem>>, vector<4x128xf32>
    %cst = arith.constant dense<0.000000e+00> : vector<128x128xf32>
    %2 = tpu.matmul %0, %1, %cst {dimension_numbers = #tpu.dot_dimension_numbers<[1], [0], [0], [1], [0, 0, 1, 1], [], []>} : vector<128x4xf32>, vector<4x128xf32>, vector<128x128xf32> -> vector<128x128xf32>
    %c0_3 = arith.constant 0 : index
    %c0_4 = arith.constant 0 : index
    %3 = vector.load %arg3[%c0_3, %c0_4] : memref<1x128xf32, #tpu.memory_space<vmem>>, vector<1x128xf32>
    %4 = vector.broadcast %3 : vector<1x128xf32> to vector<128x128xf32>
    %5 = arith.addf %2, %4 : vector<128x128xf32>
    %cst_5 = arith.constant 0.000000e+00 : f32
    %6 = vector.broadcast %cst_5 : f32 to vector<128x128xf32>
    %7 = arith.maximumf %5, %6 : vector<128x128xf32>
    %c0_6 = arith.constant 0 : index
    %c0_7 = arith.constant 0 : index
    %8 = vector.load %arg4[%c0_6, %c0_7] : memref<128x512xf32, #tpu.memory_space<vmem>>, vector<128x512xf32>
    %cst_8 = arith.constant dense<0.000000e+00> : vector<128x512xf32>
    %9 = tpu.matmul %7, %8, %cst_8 {dimension_numbers = #tpu.dot_dimension_numbers<[1], [0], [0], [1], [0, 0, 1, 1], [], []>} : vector<128x128xf32>, vector<128x512xf32>, vector<128x512xf32> -> vector<128x512xf32>
    %c0_9 = arith.constant 0 : index
    %c0_10 = arith.constant 0 : index
    %10 = vector.load %arg5[%c0_9, %c0_10] : memref<1x512xf32, #tpu.memory_space<vmem>>, vector<1x512xf32>
    %11 = vector.broadcast %10 : vector<1x512xf32> to vector<128x512xf32>
    %12 = arith.addf %9, %11 : vector<128x512xf32>
    %c0_11 = arith.constant 0 : index
    %c0_12 = arith.constant 0 : index
    %13 = vector.load %arg6[%c0_11, %c0_12] : memref<128x512xf32, #tpu.memory_space<vmem>>, vector<128x512xf32>
    tpu.vector_store %arg6[%c0_11, %c0_12], %12 {strides = array<i32>} : memref<128x512xf32, #tpu.memory_space<vmem>>, vector<128x512xf32>,
    return
  }
  func.func @transform_0(%arg0: i32) -> (i32, i32) {
    %c0_i32 = arith.constant 0 : i32
    %c0_i32_0 = arith.constant 0 : i32
    return %arg0, %c0_i32 : i32, i32
  }
  func.func @transform_1(%arg0: i32) -> (i32, i32) {
    %c0_i32 = arith.constant 0 : i32
    %c0_i32_0 = arith.constant 0 : i32
    %c0_i32_1 = arith.constant 0 : i32
    return %c0_i32, %c0_i32_0 : i32, i32
  }
  func.func @transform_2(%arg0: i32) -> (i32, i32) {
    %c0_i32 = arith.constant 0 : i32
    %c0_i32_0 = arith.constant 0 : i32
    %c0_i32_1 = arith.constant 0 : i32
    return %c0_i32, %c0_i32_0 : i32, i32
  }
  func.func @transform_3(%arg0: i32) -> (i32, i32) {
    %c0_i32 = arith.constant 0 : i32
    %c0_i32_0 = arith.constant 0 : i32
    %c0_i32_1 = arith.constant 0 : i32
    return %c0_i32, %c0_i32_0 : i32, i32
  }
  func.func @transform_4(%arg0: i32) -> (i32, i32) {
    %c0_i32 = arith.constant 0 : i32
    %c0_i32_0 = arith.constant 0 : i32
    %c0_i32_1 = arith.constant 0 : i32
    return %c0_i32, %c0_i32_0 : i32, i32
  }
  func.func @transform_5(%arg0: i32) -> (i32, i32) {
    %c0_i32 = arith.constant 0 : i32
    %c0_i32_0 = arith.constant 0 : i32
    return %arg0, %c0_i32 : i32, i32
  }
}

module attributes {stable_mosaic.version = 11 : i64} {
  func.func @_recurrent_kernel(%arg0: i32, %arg1: i32, %arg2: memref<8x16x512xf32, #tpu.memory_space<vmem>>, %arg3: memref<128x512xf32, #tpu.memory_space<vmem>>, %arg4: memref<8x16x128xf32, #tpu.memory_space<vmem>>, %arg5: memref<16x128xf32, #tpu.memory_space<vmem>>, %arg6: memref<16x128xf32, #tpu.memory_space<vmem>>) attributes {dimension_semantics = [#tpu.dimension_semantics<parallel>, #tpu.dimension_semantics<arbitrary>], iteration_bounds = array<i64: 1, 1>, scalar_prefetch = 0 : i64, scratch_operands = 2 : i64, tpu.core_type = #tpu.core_type<tc>, window_params = [{transform_indices = @transform_0, window_bounds = array<i64: 8, 16, 512>}, {pipeline_mode = #tpu.pipeline_mode<synchronous>, transform_indices = @transform_1, window_bounds = array<i64: 128, 512>}, {transform_indices = @transform_2, window_bounds = array<i64: 8, 16, 128>}]} {
    %c0_i32 = arith.constant 0 : i32
    %0 = arith.cmpi eq, %arg1, %c0_i32 : i32
    %1 = arith.extui %0 : i1 to i32
    %c0_i32_0 = arith.constant 0 : i32
    %2 = arith.cmpi ne, %1, %c0_i32_0 : i32
    scf.if %2 {
      %cst_130 = arith.constant 0.000000e+00 : f32
      %308 = vector.broadcast %cst_130 : f32 to vector<16x128xf32>
      %c0_131 = arith.constant 0 : index
      %c0_132 = arith.constant 0 : index
      %309 = vector.load %arg5[%c0_131, %c0_132] : memref<16x128xf32, #tpu.memory_space<vmem>>, vector<16x128xf32>
      tpu.vector_store %arg5[%c0_131, %c0_132], %308 {strides = array<i32>} : memref<16x128xf32, #tpu.memory_space<vmem>>, vector<16x128xf32>,
      %cst_133 = arith.constant 0.000000e+00 : f32
      %310 = vector.broadcast %cst_133 : f32 to vector<16x128xf32>
      %c0_134 = arith.constant 0 : index
      %c0_135 = arith.constant 0 : index
      %311 = vector.load %arg6[%c0_134, %c0_135] : memref<16x128xf32, #tpu.memory_space<vmem>>, vector<16x128xf32>
      tpu.vector_store %arg6[%c0_134, %c0_135], %310 {strides = array<i32>} : memref<16x128xf32, #tpu.memory_space<vmem>>, vector<16x128xf32>,
    } else {
    }
    %c0 = arith.constant 0 : index
    %c0_1 = arith.constant 0 : index
    %3 = vector.load %arg3[%c0, %c0_1] : memref<128x512xf32, #tpu.memory_space<vmem>>, vector<128x512xf32>
    %c0_i32_2 = arith.constant 0 : i32
    %4 = arith.index_cast %c0_i32_2 : i32 to index
    %c0_3 = arith.constant 0 : index
    %c0_4 = arith.constant 0 : index
    %5 = vector.load %arg2[%4, %c0_3, %c0_4] : memref<8x16x512xf32, #tpu.memory_space<vmem>>, vector<1x16x512xf32>
    %6 = vector.shape_cast %5 : vector<1x16x512xf32> to vector<16x512xf32>
    %c0_5 = arith.constant 0 : index
    %c0_6 = arith.constant 0 : index
    %7 = vector.load %arg5[%c0_5, %c0_6] : memref<16x128xf32, #tpu.memory_space<vmem>>, vector<16x128xf32>
    %cst = arith.constant dense<0.000000e+00> : vector<16x512xf32>
    %8 = tpu.matmul %7, %3, %cst {dimension_numbers = #tpu.dot_dimension_numbers<[1], [0], [0], [1], [0, 0, 1, 1], [], []>} : vector<16x128xf32>, vector<128x512xf32>, vector<16x512xf32> -> vector<16x512xf32>
    %9 = arith.addf %6, %8 : vector<16x512xf32>
    %10 = vector.extract_strided_slice %9 {offsets = [0, 0], sizes = [16, 128], strides = [1, 1]} : vector<16x512xf32> to vector<16x128xf32>
    %11 = arith.negf %10 : vector<16x128xf32>
    %12 = math.exp %11 : vector<16x128xf32>
    %cst_7 = arith.constant 1.000000e+00 : f32
    %13 = vector.broadcast %cst_7 : f32 to vector<16x128xf32>
    %14 = arith.addf %13, %12 : vector<16x128xf32>
    %15 = arith.divf %13, %14 : vector<16x128xf32>
    %16 = vector.extract_strided_slice %9 {offsets = [0, 128], sizes = [16, 128], strides = [1, 1]} : vector<16x512xf32> to vector<16x128xf32>
    %17 = arith.negf %16 : vector<16x128xf32>
    %18 = math.exp %17 : vector<16x128xf32>
    %cst_8 = arith.constant 1.000000e+00 : f32
    %19 = vector.broadcast %cst_8 : f32 to vector<16x128xf32>
    %20 = arith.addf %19, %18 : vector<16x128xf32>
    %21 = arith.divf %19, %20 : vector<16x128xf32>
    %22 = vector.extract_strided_slice %9 {offsets = [0, 256], sizes = [16, 128], strides = [1, 1]} : vector<16x512xf32> to vector<16x128xf32>
    %23 = math.tanh %22 : vector<16x128xf32>
    %24 = vector.extract_strided_slice %9 {offsets = [0, 384], sizes = [16, 128], strides = [1, 1]} : vector<16x512xf32> to vector<16x128xf32>
    %25 = arith.negf %24 : vector<16x128xf32>
    %26 = math.exp %25 : vector<16x128xf32>
    %cst_9 = arith.constant 1.000000e+00 : f32
    %27 = vector.broadcast %cst_9 : f32 to vector<16x128xf32>
    %28 = arith.addf %27, %26 : vector<16x128xf32>
    %29 = arith.divf %27, %28 : vector<16x128xf32>
    %c0_10 = arith.constant 0 : index
    %c0_11 = arith.constant 0 : index
    %30 = vector.load %arg6[%c0_10, %c0_11] : memref<16x128xf32, #tpu.memory_space<vmem>>, vector<16x128xf32>
    %31 = arith.mulf %21, %30 : vector<16x128xf32>
    %32 = arith.mulf %15, %23 : vector<16x128xf32>
    %33 = arith.addf %31, %32 : vector<16x128xf32>
    %34 = math.tanh %33 : vector<16x128xf32>
    %35 = arith.mulf %29, %34 : vector<16x128xf32>
    %c0_12 = arith.constant 0 : index
    %c0_13 = arith.constant 0 : index
    %36 = vector.load %arg5[%c0_12, %c0_13] : memref<16x128xf32, #tpu.memory_space<vmem>>, vector<16x128xf32>
    tpu.vector_store %arg5[%c0_12, %c0_13], %35 {strides = array<i32>} : memref<16x128xf32, #tpu.memory_space<vmem>>, vector<16x128xf32>,
    %c0_14 = arith.constant 0 : index
    %c0_15 = arith.constant 0 : index
    %37 = vector.load %arg6[%c0_14, %c0_15] : memref<16x128xf32, #tpu.memory_space<vmem>>, vector<16x128xf32>
    tpu.vector_store %arg6[%c0_14, %c0_15], %33 {strides = array<i32>} : memref<16x128xf32, #tpu.memory_space<vmem>>, vector<16x128xf32>,
    %38 = arith.index_cast %c0_i32_2 : i32 to index
    %c0_16 = arith.constant 0 : index
    %c0_17 = arith.constant 0 : index
    %39 = vector.load %arg4[%38, %c0_16, %c0_17] : memref<8x16x128xf32, #tpu.memory_space<vmem>>, vector<1x16x128xf32>
    %40 = vector.shape_cast %39 : vector<1x16x128xf32> to vector<16x128xf32>
    %41 = vector.shape_cast %35 : vector<16x128xf32> to vector<1x16x128xf32>
    tpu.vector_store %arg4[%38, %c0_16, %c0_17], %41 {strides = array<i32>} : memref<8x16x128xf32, #tpu.memory_space<vmem>>, vector<1x16x128xf32>,
    %c1_i32 = arith.constant 1 : i32
    %42 = arith.index_cast %c1_i32 : i32 to index
    %c0_18 = arith.constant 0 : index
    %c0_19 = arith.constant 0 : index
    %43 = vector.load %arg2[%42, %c0_18, %c0_19] : memref<8x16x512xf32, #tpu.memory_space<vmem>>, vector<1x16x512xf32>
    %44 = vector.shape_cast %43 : vector<1x16x512xf32> to vector<16x512xf32>
    %c0_20 = arith.constant 0 : index
    %c0_21 = arith.constant 0 : index
    %45 = vector.load %arg5[%c0_20, %c0_21] : memref<16x128xf32, #tpu.memory_space<vmem>>, vector<16x128xf32>
    %cst_22 = arith.constant dense<0.000000e+00> : vector<16x512xf32>
    %46 = tpu.matmul %45, %3, %cst_22 {dimension_numbers = #tpu.dot_dimension_numbers<[1], [0], [0], [1], [0, 0, 1, 1], [], []>} : vector<16x128xf32>, vector<128x512xf32>, vector<16x512xf32> -> vector<16x512xf32>
    %47 = arith.addf %44, %46 : vector<16x512xf32>
    %48 = vector.extract_strided_slice %47 {offsets = [0, 0], sizes = [16, 128], strides = [1, 1]} : vector<16x512xf32> to vector<16x128xf32>
    %49 = arith.negf %48 : vector<16x128xf32>
    %50 = math.exp %49 : vector<16x128xf32>
    %cst_23 = arith.constant 1.000000e+00 : f32
    %51 = vector.broadcast %cst_23 : f32 to vector<16x128xf32>
    %52 = arith.addf %51, %50 : vector<16x128xf32>
    %53 = arith.divf %51, %52 : vector<16x128xf32>
    %54 = vector.extract_strided_slice %47 {offsets = [0, 128], sizes = [16, 128], strides = [1, 1]} : vector<16x512xf32> to vector<16x128xf32>
    %55 = arith.negf %54 : vector<16x128xf32>
    %56 = math.exp %55 : vector<16x128xf32>
    %cst_24 = arith.constant 1.000000e+00 : f32
    %57 = vector.broadcast %cst_24 : f32 to vector<16x128xf32>
    %58 = arith.addf %57, %56 : vector<16x128xf32>
    %59 = arith.divf %57, %58 : vector<16x128xf32>
    %60 = vector.extract_strided_slice %47 {offsets = [0, 256], sizes = [16, 128], strides = [1, 1]} : vector<16x512xf32> to vector<16x128xf32>
    %61 = math.tanh %60 : vector<16x128xf32>
    %62 = vector.extract_strided_slice %47 {offsets = [0, 384], sizes = [16, 128], strides = [1, 1]} : vector<16x512xf32> to vector<16x128xf32>
    %63 = arith.negf %62 : vector<16x128xf32>
    %64 = math.exp %63 : vector<16x128xf32>
    %cst_25 = arith.constant 1.000000e+00 : f32
    %65 = vector.broadcast %cst_25 : f32 to vector<16x128xf32>
    %66 = arith.addf %65, %64 : vector<16x128xf32>
    %67 = arith.divf %65, %66 : vector<16x128xf32>
    %c0_26 = arith.constant 0 : index
    %c0_27 = arith.constant 0 : index
    %68 = vector.load %arg6[%c0_26, %c0_27] : memref<16x128xf32, #tpu.memory_space<vmem>>, vector<16x128xf32>
    %69 = arith.mulf %59, %68 : vector<16x128xf32>
    %70 = arith.mulf %53, %61 : vector<16x128xf32>
    %71 = arith.addf %69, %70 : vector<16x128xf32>
    %72 = math.tanh %71 : vector<16x128xf32>
    %73 = arith.mulf %67, %72 : vector<16x128xf32>
    %c0_28 = arith.constant 0 : index
    %c0_29 = arith.constant 0 : index
    %74 = vector.load %arg5[%c0_28, %c0_29] : memref<16x128xf32, #tpu.memory_space<vmem>>, vector<16x128xf32>
    tpu.vector_store %arg5[%c0_28, %c0_29], %73 {strides = array<i32>} : memref<16x128xf32, #tpu.memory_space<vmem>>, vector<16x128xf32>,
    %c0_30 = arith.constant 0 : index
    %c0_31 = arith.constant 0 : index
    %75 = vector.load %arg6[%c0_30, %c0_31] : memref<16x128xf32, #tpu.memory_space<vmem>>, vector<16x128xf32>
    tpu.vector_store %arg6[%c0_30, %c0_31], %71 {strides = array<i32>} : memref<16x128xf32, #tpu.memory_space<vmem>>, vector<16x128xf32>,
    %76 = arith.index_cast %c1_i32 : i32 to index
    %c0_32 = arith.constant 0 : index
    %c0_33 = arith.constant 0 : index
    %77 = vector.load %arg4[%76, %c0_32, %c0_33] : memref<8x16x128xf32, #tpu.memory_space<vmem>>, vector<1x16x128xf32>
    %78 = vector.shape_cast %77 : vector<1x16x128xf32> to vector<16x128xf32>
    %79 = vector.shape_cast %73 : vector<16x128xf32> to vector<1x16x128xf32>
    tpu.vector_store %arg4[%76, %c0_32, %c0_33], %79 {strides = array<i32>} : memref<8x16x128xf32, #tpu.memory_space<vmem>>, vector<1x16x128xf32>,
    %c2_i32 = arith.constant 2 : i32
    %80 = arith.index_cast %c2_i32 : i32 to index
    %c0_34 = arith.constant 0 : index
    %c0_35 = arith.constant 0 : index
    %81 = vector.load %arg2[%80, %c0_34, %c0_35] : memref<8x16x512xf32, #tpu.memory_space<vmem>>, vector<1x16x512xf32>
    %82 = vector.shape_cast %81 : vector<1x16x512xf32> to vector<16x512xf32>
    %c0_36 = arith.constant 0 : index
    %c0_37 = arith.constant 0 : index
    %83 = vector.load %arg5[%c0_36, %c0_37] : memref<16x128xf32, #tpu.memory_space<vmem>>, vector<16x128xf32>
    %cst_38 = arith.constant dense<0.000000e+00> : vector<16x512xf32>
    %84 = tpu.matmul %83, %3, %cst_38 {dimension_numbers = #tpu.dot_dimension_numbers<[1], [0], [0], [1], [0, 0, 1, 1], [], []>} : vector<16x128xf32>, vector<128x512xf32>, vector<16x512xf32> -> vector<16x512xf32>
    %85 = arith.addf %82, %84 : vector<16x512xf32>
    %86 = vector.extract_strided_slice %85 {offsets = [0, 0], sizes = [16, 128], strides = [1, 1]} : vector<16x512xf32> to vector<16x128xf32>
    %87 = arith.negf %86 : vector<16x128xf32>
    %88 = math.exp %87 : vector<16x128xf32>
    %cst_39 = arith.constant 1.000000e+00 : f32
    %89 = vector.broadcast %cst_39 : f32 to vector<16x128xf32>
    %90 = arith.addf %89, %88 : vector<16x128xf32>
    %91 = arith.divf %89, %90 : vector<16x128xf32>
    %92 = vector.extract_strided_slice %85 {offsets = [0, 128], sizes = [16, 128], strides = [1, 1]} : vector<16x512xf32> to vector<16x128xf32>
    %93 = arith.negf %92 : vector<16x128xf32>
    %94 = math.exp %93 : vector<16x128xf32>
    %cst_40 = arith.constant 1.000000e+00 : f32
    %95 = vector.broadcast %cst_40 : f32 to vector<16x128xf32>
    %96 = arith.addf %95, %94 : vector<16x128xf32>
    %97 = arith.divf %95, %96 : vector<16x128xf32>
    %98 = vector.extract_strided_slice %85 {offsets = [0, 256], sizes = [16, 128], strides = [1, 1]} : vector<16x512xf32> to vector<16x128xf32>
    %99 = math.tanh %98 : vector<16x128xf32>
    %100 = vector.extract_strided_slice %85 {offsets = [0, 384], sizes = [16, 128], strides = [1, 1]} : vector<16x512xf32> to vector<16x128xf32>
    %101 = arith.negf %100 : vector<16x128xf32>
    %102 = math.exp %101 : vector<16x128xf32>
    %cst_41 = arith.constant 1.000000e+00 : f32
    %103 = vector.broadcast %cst_41 : f32 to vector<16x128xf32>
    %104 = arith.addf %103, %102 : vector<16x128xf32>
    %105 = arith.divf %103, %104 : vector<16x128xf32>
    %c0_42 = arith.constant 0 : index
    %c0_43 = arith.constant 0 : index
    %106 = vector.load %arg6[%c0_42, %c0_43] : memref<16x128xf32, #tpu.memory_space<vmem>>, vector<16x128xf32>
    %107 = arith.mulf %97, %106 : vector<16x128xf32>
    %108 = arith.mulf %91, %99 : vector<16x128xf32>
    %109 = arith.addf %107, %108 : vector<16x128xf32>
    %110 = math.tanh %109 : vector<16x128xf32>
    %111 = arith.mulf %105, %110 : vector<16x128xf32>
    %c0_44 = arith.constant 0 : index
    %c0_45 = arith.constant 0 : index
    %112 = vector.load %arg5[%c0_44, %c0_45] : memref<16x128xf32, #tpu.memory_space<vmem>>, vector<16x128xf32>
    tpu.vector_store %arg5[%c0_44, %c0_45], %111 {strides = array<i32>} : memref<16x128xf32, #tpu.memory_space<vmem>>, vector<16x128xf32>,
    %c0_46 = arith.constant 0 : index
    %c0_47 = arith.constant 0 : index
    %113 = vector.load %arg6[%c0_46, %c0_47] : memref<16x128xf32, #tpu.memory_space<vmem>>, vector<16x128xf32>
    tpu.vector_store %arg6[%c0_46, %c0_47], %109 {strides = array<i32>} : memref<16x128xf32, #tpu.memory_space<vmem>>, vector<16x128xf32>,
    %114 = arith.index_cast %c2_i32 : i32 to index
    %c0_48 = arith.constant 0 : index
    %c0_49 = arith.constant 0 : index
    %115 = vector.load %arg4[%114, %c0_48, %c0_49] : memref<8x16x128xf32, #tpu.memory_space<vmem>>, vector<1x16x128xf32>
    %116 = vector.shape_cast %115 : vector<1x16x128xf32> to vector<16x128xf32>
    %117 = vector.shape_cast %111 : vector<16x128xf32> to vector<1x16x128xf32>
    tpu.vector_store %arg4[%114, %c0_48, %c0_49], %117 {strides = array<i32>} : memref<8x16x128xf32, #tpu.memory_space<vmem>>, vector<1x16x128xf32>,
    %c3_i32 = arith.constant 3 : i32
    %118 = arith.index_cast %c3_i32 : i32 to index
    %c0_50 = arith.constant 0 : index
    %c0_51 = arith.constant 0 : index
    %119 = vector.load %arg2[%118, %c0_50, %c0_51] : memref<8x16x512xf32, #tpu.memory_space<vmem>>, vector<1x16x512xf32>
    %120 = vector.shape_cast %119 : vector<1x16x512xf32> to vector<16x512xf32>
    %c0_52 = arith.constant 0 : index
    %c0_53 = arith.constant 0 : index
    %121 = vector.load %arg5[%c0_52, %c0_53] : memref<16x128xf32, #tpu.memory_space<vmem>>, vector<16x128xf32>
    %cst_54 = arith.constant dense<0.000000e+00> : vector<16x512xf32>
    %122 = tpu.matmul %121, %3, %cst_54 {dimension_numbers = #tpu.dot_dimension_numbers<[1], [0], [0], [1], [0, 0, 1, 1], [], []>} : vector<16x128xf32>, vector<128x512xf32>, vector<16x512xf32> -> vector<16x512xf32>
    %123 = arith.addf %120, %122 : vector<16x512xf32>
    %124 = vector.extract_strided_slice %123 {offsets = [0, 0], sizes = [16, 128], strides = [1, 1]} : vector<16x512xf32> to vector<16x128xf32>
    %125 = arith.negf %124 : vector<16x128xf32>
    %126 = math.exp %125 : vector<16x128xf32>
    %cst_55 = arith.constant 1.000000e+00 : f32
    %127 = vector.broadcast %cst_55 : f32 to vector<16x128xf32>
    %128 = arith.addf %127, %126 : vector<16x128xf32>
    %129 = arith.divf %127, %128 : vector<16x128xf32>
    %130 = vector.extract_strided_slice %123 {offsets = [0, 128], sizes = [16, 128], strides = [1, 1]} : vector<16x512xf32> to vector<16x128xf32>
    %131 = arith.negf %130 : vector<16x128xf32>
    %132 = math.exp %131 : vector<16x128xf32>
    %cst_56 = arith.constant 1.000000e+00 : f32
    %133 = vector.broadcast %cst_56 : f32 to vector<16x128xf32>
    %134 = arith.addf %133, %132 : vector<16x128xf32>
    %135 = arith.divf %133, %134 : vector<16x128xf32>
    %136 = vector.extract_strided_slice %123 {offsets = [0, 256], sizes = [16, 128], strides = [1, 1]} : vector<16x512xf32> to vector<16x128xf32>
    %137 = math.tanh %136 : vector<16x128xf32>
    %138 = vector.extract_strided_slice %123 {offsets = [0, 384], sizes = [16, 128], strides = [1, 1]} : vector<16x512xf32> to vector<16x128xf32>
    %139 = arith.negf %138 : vector<16x128xf32>
    %140 = math.exp %139 : vector<16x128xf32>
    %cst_57 = arith.constant 1.000000e+00 : f32
    %141 = vector.broadcast %cst_57 : f32 to vector<16x128xf32>
    %142 = arith.addf %141, %140 : vector<16x128xf32>
    %143 = arith.divf %141, %142 : vector<16x128xf32>
    %c0_58 = arith.constant 0 : index
    %c0_59 = arith.constant 0 : index
    %144 = vector.load %arg6[%c0_58, %c0_59] : memref<16x128xf32, #tpu.memory_space<vmem>>, vector<16x128xf32>
    %145 = arith.mulf %135, %144 : vector<16x128xf32>
    %146 = arith.mulf %129, %137 : vector<16x128xf32>
    %147 = arith.addf %145, %146 : vector<16x128xf32>
    %148 = math.tanh %147 : vector<16x128xf32>
    %149 = arith.mulf %143, %148 : vector<16x128xf32>
    %c0_60 = arith.constant 0 : index
    %c0_61 = arith.constant 0 : index
    %150 = vector.load %arg5[%c0_60, %c0_61] : memref<16x128xf32, #tpu.memory_space<vmem>>, vector<16x128xf32>
    tpu.vector_store %arg5[%c0_60, %c0_61], %149 {strides = array<i32>} : memref<16x128xf32, #tpu.memory_space<vmem>>, vector<16x128xf32>,
    %c0_62 = arith.constant 0 : index
    %c0_63 = arith.constant 0 : index
    %151 = vector.load %arg6[%c0_62, %c0_63] : memref<16x128xf32, #tpu.memory_space<vmem>>, vector<16x128xf32>
    tpu.vector_store %arg6[%c0_62, %c0_63], %147 {strides = array<i32>} : memref<16x128xf32, #tpu.memory_space<vmem>>, vector<16x128xf32>,
    %152 = arith.index_cast %c3_i32 : i32 to index
    %c0_64 = arith.constant 0 : index
    %c0_65 = arith.constant 0 : index
    %153 = vector.load %arg4[%152, %c0_64, %c0_65] : memref<8x16x128xf32, #tpu.memory_space<vmem>>, vector<1x16x128xf32>
    %154 = vector.shape_cast %153 : vector<1x16x128xf32> to vector<16x128xf32>
    %155 = vector.shape_cast %149 : vector<16x128xf32> to vector<1x16x128xf32>
    tpu.vector_store %arg4[%152, %c0_64, %c0_65], %155 {strides = array<i32>} : memref<8x16x128xf32, #tpu.memory_space<vmem>>, vector<1x16x128xf32>,
    %c4_i32 = arith.constant 4 : i32
    %156 = arith.index_cast %c4_i32 : i32 to index
    %c0_66 = arith.constant 0 : index
    %c0_67 = arith.constant 0 : index
    %157 = vector.load %arg2[%156, %c0_66, %c0_67] : memref<8x16x512xf32, #tpu.memory_space<vmem>>, vector<1x16x512xf32>
    %158 = vector.shape_cast %157 : vector<1x16x512xf32> to vector<16x512xf32>
    %c0_68 = arith.constant 0 : index
    %c0_69 = arith.constant 0 : index
    %159 = vector.load %arg5[%c0_68, %c0_69] : memref<16x128xf32, #tpu.memory_space<vmem>>, vector<16x128xf32>
    %cst_70 = arith.constant dense<0.000000e+00> : vector<16x512xf32>
    %160 = tpu.matmul %159, %3, %cst_70 {dimension_numbers = #tpu.dot_dimension_numbers<[1], [0], [0], [1], [0, 0, 1, 1], [], []>} : vector<16x128xf32>, vector<128x512xf32>, vector<16x512xf32> -> vector<16x512xf32>
    %161 = arith.addf %158, %160 : vector<16x512xf32>
    %162 = vector.extract_strided_slice %161 {offsets = [0, 0], sizes = [16, 128], strides = [1, 1]} : vector<16x512xf32> to vector<16x128xf32>
    %163 = arith.negf %162 : vector<16x128xf32>
    %164 = math.exp %163 : vector<16x128xf32>
    %cst_71 = arith.constant 1.000000e+00 : f32
    %165 = vector.broadcast %cst_71 : f32 to vector<16x128xf32>
    %166 = arith.addf %165, %164 : vector<16x128xf32>
    %167 = arith.divf %165, %166 : vector<16x128xf32>
    %168 = vector.extract_strided_slice %161 {offsets = [0, 128], sizes = [16, 128], strides = [1, 1]} : vector<16x512xf32> to vector<16x128xf32>
    %169 = arith.negf %168 : vector<16x128xf32>
    %170 = math.exp %169 : vector<16x128xf32>
    %cst_72 = arith.constant 1.000000e+00 : f32
    %171 = vector.broadcast %cst_72 : f32 to vector<16x128xf32>
    %172 = arith.addf %171, %170 : vector<16x128xf32>
    %173 = arith.divf %171, %172 : vector<16x128xf32>
    %174 = vector.extract_strided_slice %161 {offsets = [0, 256], sizes = [16, 128], strides = [1, 1]} : vector<16x512xf32> to vector<16x128xf32>
    %175 = math.tanh %174 : vector<16x128xf32>
    %176 = vector.extract_strided_slice %161 {offsets = [0, 384], sizes = [16, 128], strides = [1, 1]} : vector<16x512xf32> to vector<16x128xf32>
    %177 = arith.negf %176 : vector<16x128xf32>
    %178 = math.exp %177 : vector<16x128xf32>
    %cst_73 = arith.constant 1.000000e+00 : f32
    %179 = vector.broadcast %cst_73 : f32 to vector<16x128xf32>
    %180 = arith.addf %179, %178 : vector<16x128xf32>
    %181 = arith.divf %179, %180 : vector<16x128xf32>
    %c0_74 = arith.constant 0 : index
    %c0_75 = arith.constant 0 : index
    %182 = vector.load %arg6[%c0_74, %c0_75] : memref<16x128xf32, #tpu.memory_space<vmem>>, vector<16x128xf32>
    %183 = arith.mulf %173, %182 : vector<16x128xf32>
    %184 = arith.mulf %167, %175 : vector<16x128xf32>
    %185 = arith.addf %183, %184 : vector<16x128xf32>
    %186 = math.tanh %185 : vector<16x128xf32>
    %187 = arith.mulf %181, %186 : vector<16x128xf32>
    %c0_76 = arith.constant 0 : index
    %c0_77 = arith.constant 0 : index
    %188 = vector.load %arg5[%c0_76, %c0_77] : memref<16x128xf32, #tpu.memory_space<vmem>>, vector<16x128xf32>
    tpu.vector_store %arg5[%c0_76, %c0_77], %187 {strides = array<i32>} : memref<16x128xf32, #tpu.memory_space<vmem>>, vector<16x128xf32>,
    %c0_78 = arith.constant 0 : index
    %c0_79 = arith.constant 0 : index
    %189 = vector.load %arg6[%c0_78, %c0_79] : memref<16x128xf32, #tpu.memory_space<vmem>>, vector<16x128xf32>
    tpu.vector_store %arg6[%c0_78, %c0_79], %185 {strides = array<i32>} : memref<16x128xf32, #tpu.memory_space<vmem>>, vector<16x128xf32>,
    %190 = arith.index_cast %c4_i32 : i32 to index
    %c0_80 = arith.constant 0 : index
    %c0_81 = arith.constant 0 : index
    %191 = vector.load %arg4[%190, %c0_80, %c0_81] : memref<8x16x128xf32, #tpu.memory_space<vmem>>, vector<1x16x128xf32>
    %192 = vector.shape_cast %191 : vector<1x16x128xf32> to vector<16x128xf32>
    %193 = vector.shape_cast %187 : vector<16x128xf32> to vector<1x16x128xf32>
    tpu.vector_store %arg4[%190, %c0_80, %c0_81], %193 {strides = array<i32>} : memref<8x16x128xf32, #tpu.memory_space<vmem>>, vector<1x16x128xf32>,
    %c5_i32 = arith.constant 5 : i32
    %194 = arith.index_cast %c5_i32 : i32 to index
    %c0_82 = arith.constant 0 : index
    %c0_83 = arith.constant 0 : index
    %195 = vector.load %arg2[%194, %c0_82, %c0_83] : memref<8x16x512xf32, #tpu.memory_space<vmem>>, vector<1x16x512xf32>
    %196 = vector.shape_cast %195 : vector<1x16x512xf32> to vector<16x512xf32>
    %c0_84 = arith.constant 0 : index
    %c0_85 = arith.constant 0 : index
    %197 = vector.load %arg5[%c0_84, %c0_85] : memref<16x128xf32, #tpu.memory_space<vmem>>, vector<16x128xf32>
    %cst_86 = arith.constant dense<0.000000e+00> : vector<16x512xf32>
    %198 = tpu.matmul %197, %3, %cst_86 {dimension_numbers = #tpu.dot_dimension_numbers<[1], [0], [0], [1], [0, 0, 1, 1], [], []>} : vector<16x128xf32>, vector<128x512xf32>, vector<16x512xf32> -> vector<16x512xf32>
    %199 = arith.addf %196, %198 : vector<16x512xf32>
    %200 = vector.extract_strided_slice %199 {offsets = [0, 0], sizes = [16, 128], strides = [1, 1]} : vector<16x512xf32> to vector<16x128xf32>
    %201 = arith.negf %200 : vector<16x128xf32>
    %202 = math.exp %201 : vector<16x128xf32>
    %cst_87 = arith.constant 1.000000e+00 : f32
    %203 = vector.broadcast %cst_87 : f32 to vector<16x128xf32>
    %204 = arith.addf %203, %202 : vector<16x128xf32>
    %205 = arith.divf %203, %204 : vector<16x128xf32>
    %206 = vector.extract_strided_slice %199 {offsets = [0, 128], sizes = [16, 128], strides = [1, 1]} : vector<16x512xf32> to vector<16x128xf32>
    %207 = arith.negf %206 : vector<16x128xf32>
    %208 = math.exp %207 : vector<16x128xf32>
    %cst_88 = arith.constant 1.000000e+00 : f32
    %209 = vector.broadcast %cst_88 : f32 to vector<16x128xf32>
    %210 = arith.addf %209, %208 : vector<16x128xf32>
    %211 = arith.divf %209, %210 : vector<16x128xf32>
    %212 = vector.extract_strided_slice %199 {offsets = [0, 256], sizes = [16, 128], strides = [1, 1]} : vector<16x512xf32> to vector<16x128xf32>
    %213 = math.tanh %212 : vector<16x128xf32>
    %214 = vector.extract_strided_slice %199 {offsets = [0, 384], sizes = [16, 128], strides = [1, 1]} : vector<16x512xf32> to vector<16x128xf32>
    %215 = arith.negf %214 : vector<16x128xf32>
    %216 = math.exp %215 : vector<16x128xf32>
    %cst_89 = arith.constant 1.000000e+00 : f32
    %217 = vector.broadcast %cst_89 : f32 to vector<16x128xf32>
    %218 = arith.addf %217, %216 : vector<16x128xf32>
    %219 = arith.divf %217, %218 : vector<16x128xf32>
    %c0_90 = arith.constant 0 : index
    %c0_91 = arith.constant 0 : index
    %220 = vector.load %arg6[%c0_90, %c0_91] : memref<16x128xf32, #tpu.memory_space<vmem>>, vector<16x128xf32>
    %221 = arith.mulf %211, %220 : vector<16x128xf32>
    %222 = arith.mulf %205, %213 : vector<16x128xf32>
    %223 = arith.addf %221, %222 : vector<16x128xf32>
    %224 = math.tanh %223 : vector<16x128xf32>
    %225 = arith.mulf %219, %224 : vector<16x128xf32>
    %c0_92 = arith.constant 0 : index
    %c0_93 = arith.constant 0 : index
    %226 = vector.load %arg5[%c0_92, %c0_93] : memref<16x128xf32, #tpu.memory_space<vmem>>, vector<16x128xf32>
    tpu.vector_store %arg5[%c0_92, %c0_93], %225 {strides = array<i32>} : memref<16x128xf32, #tpu.memory_space<vmem>>, vector<16x128xf32>,
    %c0_94 = arith.constant 0 : index
    %c0_95 = arith.constant 0 : index
    %227 = vector.load %arg6[%c0_94, %c0_95] : memref<16x128xf32, #tpu.memory_space<vmem>>, vector<16x128xf32>
    tpu.vector_store %arg6[%c0_94, %c0_95], %223 {strides = array<i32>} : memref<16x128xf32, #tpu.memory_space<vmem>>, vector<16x128xf32>,
    %228 = arith.index_cast %c5_i32 : i32 to index
    %c0_96 = arith.constant 0 : index
    %c0_97 = arith.constant 0 : index
    %229 = vector.load %arg4[%228, %c0_96, %c0_97] : memref<8x16x128xf32, #tpu.memory_space<vmem>>, vector<1x16x128xf32>
    %230 = vector.shape_cast %229 : vector<1x16x128xf32> to vector<16x128xf32>
    %231 = vector.shape_cast %225 : vector<16x128xf32> to vector<1x16x128xf32>
    tpu.vector_store %arg4[%228, %c0_96, %c0_97], %231 {strides = array<i32>} : memref<8x16x128xf32, #tpu.memory_space<vmem>>, vector<1x16x128xf32>,
    %c6_i32 = arith.constant 6 : i32
    %232 = arith.index_cast %c6_i32 : i32 to index
    %c0_98 = arith.constant 0 : index
    %c0_99 = arith.constant 0 : index
    %233 = vector.load %arg2[%232, %c0_98, %c0_99] : memref<8x16x512xf32, #tpu.memory_space<vmem>>, vector<1x16x512xf32>
    %234 = vector.shape_cast %233 : vector<1x16x512xf32> to vector<16x512xf32>
    %c0_100 = arith.constant 0 : index
    %c0_101 = arith.constant 0 : index
    %235 = vector.load %arg5[%c0_100, %c0_101] : memref<16x128xf32, #tpu.memory_space<vmem>>, vector<16x128xf32>
    %cst_102 = arith.constant dense<0.000000e+00> : vector<16x512xf32>
    %236 = tpu.matmul %235, %3, %cst_102 {dimension_numbers = #tpu.dot_dimension_numbers<[1], [0], [0], [1], [0, 0, 1, 1], [], []>} : vector<16x128xf32>, vector<128x512xf32>, vector<16x512xf32> -> vector<16x512xf32>
    %237 = arith.addf %234, %236 : vector<16x512xf32>
    %238 = vector.extract_strided_slice %237 {offsets = [0, 0], sizes = [16, 128], strides = [1, 1]} : vector<16x512xf32> to vector<16x128xf32>
    %239 = arith.negf %238 : vector<16x128xf32>
    %240 = math.exp %239 : vector<16x128xf32>
    %cst_103 = arith.constant 1.000000e+00 : f32
    %241 = vector.broadcast %cst_103 : f32 to vector<16x128xf32>
    %242 = arith.addf %241, %240 : vector<16x128xf32>
    %243 = arith.divf %241, %242 : vector<16x128xf32>
    %244 = vector.extract_strided_slice %237 {offsets = [0, 128], sizes = [16, 128], strides = [1, 1]} : vector<16x512xf32> to vector<16x128xf32>
    %245 = arith.negf %244 : vector<16x128xf32>
    %246 = math.exp %245 : vector<16x128xf32>
    %cst_104 = arith.constant 1.000000e+00 : f32
    %247 = vector.broadcast %cst_104 : f32 to vector<16x128xf32>
    %248 = arith.addf %247, %246 : vector<16x128xf32>
    %249 = arith.divf %247, %248 : vector<16x128xf32>
    %250 = vector.extract_strided_slice %237 {offsets = [0, 256], sizes = [16, 128], strides = [1, 1]} : vector<16x512xf32> to vector<16x128xf32>
    %251 = math.tanh %250 : vector<16x128xf32>
    %252 = vector.extract_strided_slice %237 {offsets = [0, 384], sizes = [16, 128], strides = [1, 1]} : vector<16x512xf32> to vector<16x128xf32>
    %253 = arith.negf %252 : vector<16x128xf32>
    %254 = math.exp %253 : vector<16x128xf32>
    %cst_105 = arith.constant 1.000000e+00 : f32
    %255 = vector.broadcast %cst_105 : f32 to vector<16x128xf32>
    %256 = arith.addf %255, %254 : vector<16x128xf32>
    %257 = arith.divf %255, %256 : vector<16x128xf32>
    %c0_106 = arith.constant 0 : index
    %c0_107 = arith.constant 0 : index
    %258 = vector.load %arg6[%c0_106, %c0_107] : memref<16x128xf32, #tpu.memory_space<vmem>>, vector<16x128xf32>
    %259 = arith.mulf %249, %258 : vector<16x128xf32>
    %260 = arith.mulf %243, %251 : vector<16x128xf32>
    %261 = arith.addf %259, %260 : vector<16x128xf32>
    %262 = math.tanh %261 : vector<16x128xf32>
    %263 = arith.mulf %257, %262 : vector<16x128xf32>
    %c0_108 = arith.constant 0 : index
    %c0_109 = arith.constant 0 : index
    %264 = vector.load %arg5[%c0_108, %c0_109] : memref<16x128xf32, #tpu.memory_space<vmem>>, vector<16x128xf32>
    tpu.vector_store %arg5[%c0_108, %c0_109], %263 {strides = array<i32>} : memref<16x128xf32, #tpu.memory_space<vmem>>, vector<16x128xf32>,
    %c0_110 = arith.constant 0 : index
    %c0_111 = arith.constant 0 : index
    %265 = vector.load %arg6[%c0_110, %c0_111] : memref<16x128xf32, #tpu.memory_space<vmem>>, vector<16x128xf32>
    tpu.vector_store %arg6[%c0_110, %c0_111], %261 {strides = array<i32>} : memref<16x128xf32, #tpu.memory_space<vmem>>, vector<16x128xf32>,
    %266 = arith.index_cast %c6_i32 : i32 to index
    %c0_112 = arith.constant 0 : index
    %c0_113 = arith.constant 0 : index
    %267 = vector.load %arg4[%266, %c0_112, %c0_113] : memref<8x16x128xf32, #tpu.memory_space<vmem>>, vector<1x16x128xf32>
    %268 = vector.shape_cast %267 : vector<1x16x128xf32> to vector<16x128xf32>
    %269 = vector.shape_cast %263 : vector<16x128xf32> to vector<1x16x128xf32>
    tpu.vector_store %arg4[%266, %c0_112, %c0_113], %269 {strides = array<i32>} : memref<8x16x128xf32, #tpu.memory_space<vmem>>, vector<1x16x128xf32>,
    %c7_i32 = arith.constant 7 : i32
    %270 = arith.index_cast %c7_i32 : i32 to index
    %c0_114 = arith.constant 0 : index
    %c0_115 = arith.constant 0 : index
    %271 = vector.load %arg2[%270, %c0_114, %c0_115] : memref<8x16x512xf32, #tpu.memory_space<vmem>>, vector<1x16x512xf32>
    %272 = vector.shape_cast %271 : vector<1x16x512xf32> to vector<16x512xf32>
    %c0_116 = arith.constant 0 : index
    %c0_117 = arith.constant 0 : index
    %273 = vector.load %arg5[%c0_116, %c0_117] : memref<16x128xf32, #tpu.memory_space<vmem>>, vector<16x128xf32>
    %cst_118 = arith.constant dense<0.000000e+00> : vector<16x512xf32>
    %274 = tpu.matmul %273, %3, %cst_118 {dimension_numbers = #tpu.dot_dimension_numbers<[1], [0], [0], [1], [0, 0, 1, 1], [], []>} : vector<16x128xf32>, vector<128x512xf32>, vector<16x512xf32> -> vector<16x512xf32>
    %275 = arith.addf %272, %274 : vector<16x512xf32>
    %276 = vector.extract_strided_slice %275 {offsets = [0, 0], sizes = [16, 128], strides = [1, 1]} : vector<16x512xf32> to vector<16x128xf32>
    %277 = arith.negf %276 : vector<16x128xf32>
    %278 = math.exp %277 : vector<16x128xf32>
    %cst_119 = arith.constant 1.000000e+00 : f32
    %279 = vector.broadcast %cst_119 : f32 to vector<16x128xf32>
    %280 = arith.addf %279, %278 : vector<16x128xf32>
    %281 = arith.divf %279, %280 : vector<16x128xf32>
    %282 = vector.extract_strided_slice %275 {offsets = [0, 128], sizes = [16, 128], strides = [1, 1]} : vector<16x512xf32> to vector<16x128xf32>
    %283 = arith.negf %282 : vector<16x128xf32>
    %284 = math.exp %283 : vector<16x128xf32>
    %cst_120 = arith.constant 1.000000e+00 : f32
    %285 = vector.broadcast %cst_120 : f32 to vector<16x128xf32>
    %286 = arith.addf %285, %284 : vector<16x128xf32>
    %287 = arith.divf %285, %286 : vector<16x128xf32>
    %288 = vector.extract_strided_slice %275 {offsets = [0, 256], sizes = [16, 128], strides = [1, 1]} : vector<16x512xf32> to vector<16x128xf32>
    %289 = math.tanh %288 : vector<16x128xf32>
    %290 = vector.extract_strided_slice %275 {offsets = [0, 384], sizes = [16, 128], strides = [1, 1]} : vector<16x512xf32> to vector<16x128xf32>
    %291 = arith.negf %290 : vector<16x128xf32>
    %292 = math.exp %291 : vector<16x128xf32>
    %cst_121 = arith.constant 1.000000e+00 : f32
    %293 = vector.broadcast %cst_121 : f32 to vector<16x128xf32>
    %294 = arith.addf %293, %292 : vector<16x128xf32>
    %295 = arith.divf %293, %294 : vector<16x128xf32>
    %c0_122 = arith.constant 0 : index
    %c0_123 = arith.constant 0 : index
    %296 = vector.load %arg6[%c0_122, %c0_123] : memref<16x128xf32, #tpu.memory_space<vmem>>, vector<16x128xf32>
    %297 = arith.mulf %287, %296 : vector<16x128xf32>
    %298 = arith.mulf %281, %289 : vector<16x128xf32>
    %299 = arith.addf %297, %298 : vector<16x128xf32>
    %300 = math.tanh %299 : vector<16x128xf32>
    %301 = arith.mulf %295, %300 : vector<16x128xf32>
    %c0_124 = arith.constant 0 : index
    %c0_125 = arith.constant 0 : index
    %302 = vector.load %arg5[%c0_124, %c0_125] : memref<16x128xf32, #tpu.memory_space<vmem>>, vector<16x128xf32>
    tpu.vector_store %arg5[%c0_124, %c0_125], %301 {strides = array<i32>} : memref<16x128xf32, #tpu.memory_space<vmem>>, vector<16x128xf32>,
    %c0_126 = arith.constant 0 : index
    %c0_127 = arith.constant 0 : index
    %303 = vector.load %arg6[%c0_126, %c0_127] : memref<16x128xf32, #tpu.memory_space<vmem>>, vector<16x128xf32>
    tpu.vector_store %arg6[%c0_126, %c0_127], %299 {strides = array<i32>} : memref<16x128xf32, #tpu.memory_space<vmem>>, vector<16x128xf32>,
    %304 = arith.index_cast %c7_i32 : i32 to index
    %c0_128 = arith.constant 0 : index
    %c0_129 = arith.constant 0 : index
    %305 = vector.load %arg4[%304, %c0_128, %c0_129] : memref<8x16x128xf32, #tpu.memory_space<vmem>>, vector<1x16x128xf32>
    %306 = vector.shape_cast %305 : vector<1x16x128xf32> to vector<16x128xf32>
    %307 = vector.shape_cast %301 : vector<16x128xf32> to vector<1x16x128xf32>
    tpu.vector_store %arg4[%304, %c0_128, %c0_129], %307 {strides = array<i32>} : memref<8x16x128xf32, #tpu.memory_space<vmem>>, vector<1x16x128xf32>,
    %c8_i32 = arith.constant 8 : i32
    return
  }
  func.func @transform_0(%arg0: i32, %arg1: i32) -> (i32, i32, i32) {
    %c0_i32 = arith.constant 0 : i32
    %c0_i32_0 = arith.constant 0 : i32
    return %arg1, %arg0, %c0_i32 : i32, i32, i32
  }
  func.func @transform_1(%arg0: i32, %arg1: i32) -> (i32, i32) {
    %c0_i32 = arith.constant 0 : i32
    %c0_i32_0 = arith.constant 0 : i32
    %c0_i32_1 = arith.constant 0 : i32
    return %c0_i32, %c0_i32_0 : i32, i32
  }
  func.func @transform_2(%arg0: i32, %arg1: i32) -> (i32, i32, i32) {
    %c0_i32 = arith.constant 0 : i32
    %c0_i32_0 = arith.constant 0 : i32
    return %arg1, %arg0, %c0_i32 : i32, i32, i32
  }
}

</mosaic_0001>

<llo_original>
// kernel: kuai_lstm_forward.2
$region0: #{kuai_lstm_forward.2}
  #allocation0 [shape = 'u32[]', space=smem, size = 0x4, offset = 0x4, fixed_abs, tag = 'smem constant byte address 0x4 - core index']
  #allocation1 [shape = 'u32[72,128]{1,0:T(1,128)}', space=vmem, size = 0x9000, scoped, tag = 'internal scratch']
  %s0 = inlined_call_operand.vmem [shape: f32[128,4], index: 0, kind: input, shape index: {}]
  %s1 = inlined_call_operand.vmem [shape: f32[4,128], index: 1, kind: input, shape index: {}]
  %s2 = inlined_call_operand.vmem [shape: f32[1,128], index: 2, kind: input, shape index: {}]
  %s3 = inlined_call_operand.vmem [shape: f32[128,512], index: 3, kind: input, shape index: {}]
  %s4 = inlined_call_operand.vmem [shape: f32[1,512], index: 4, kind: input, shape index: {}]
  %s5 = inlined_call_operand.vmem [shape: f32[128,512], index: 5, kind: output, shape index: {}]
  %s6 = sld [smem:[#allocation0]]
  $region30: #{kuai_lstm_forward.2} parent=0
    _
  %s8 = ssub.s32 1, %s6
  %s9 = scalar_select 0, %s8, %s6
  // Predicated region
  $region2: #{kuai_lstm_forward.2} parent=0 // pred_check
    _
  $region3: #{kuai_lstm_forward.2} parent=0 // pred_check_branch
    %11 = sbr.rel (0) target = $region5
  $region4: #{kuai_lstm_forward.2} parent=0 // pred_region
    _
  $region5: #{kuai_lstm_forward.2} parent=0 // pred_fallthru
    _
  // Predicated region
  $region6: #{kuai_lstm_forward.2} parent=0 // pred_check
    _
  $region7: #{kuai_lstm_forward.2} parent=0 // pred_check_branch
    %13 = sbr.rel (0) target = $region9
  $region8: #{kuai_lstm_forward.2} parent=0 // pred_region
    _
  $region9: #{kuai_lstm_forward.2} parent=0 // pred_fallthru
    _
  // Predicated region
  $region10: #{kuai_lstm_forward.2} parent=0 // pred_check
    _
  $region11: #{kuai_lstm_forward.2} parent=0 // pred_check_branch
    %15 = sbr.rel (0) target = $region13
  $region12: #{kuai_lstm_forward.2} parent=0 // pred_region
    _
  $region13: #{kuai_lstm_forward.2} parent=0 // pred_fallthru
    _
  // Predicated region
  $region14: #{kuai_lstm_forward.2} parent=0 // pred_check
    _
  $region15: #{kuai_lstm_forward.2} parent=0 // pred_check_branch
    %17 = sbr.rel (0) target = $region17
  $region16: #{kuai_lstm_forward.2} parent=0 // pred_region
    _
  $region17: #{kuai_lstm_forward.2} parent=0 // pred_fallthru
    _
  // Predicated region
  $region18: #{kuai_lstm_forward.2} parent=0 // pred_check
    _
  $region19: #{kuai_lstm_forward.2} parent=0 // pred_check_branch
    %19 = sbr.rel (0) target = $region21
  $region20: #{kuai_lstm_forward.2} parent=0 // pred_region
    _
  $region21: #{kuai_lstm_forward.2} parent=0 // pred_fallthru
    _
  %v20 = vld [vmem:[%s0] sm:$0xff]
  %v21 = vld [vmem:[%s0 + $0x8] sm:$0xff]
  %v22 = vld [vmem:[%s0 + $0x10] sm:$0xff]
  %v23 = vld [vmem:[%s0 + $0x18] sm:$0xff]
  %v24 = vld [vmem:[%s0 + $0x20] sm:$0xff]
  %v25 = vld [vmem:[%s0 + $0x28] sm:$0xff]
  %v26 = vld [vmem:[%s0 + $0x30] sm:$0xff]
  %v27 = vld [vmem:[%s0 + $0x38] sm:$0xff]
  %v28 = vld [vmem:[%s0 + $0x40] sm:$0xff]
  %v29 = vld [vmem:[%s0 + $0x48] sm:$0xff]
  %v30 = vld [vmem:[%s0 + $0x50] sm:$0xff]
  %v31 = vld [vmem:[%s0 + $0x58] sm:$0xff]
  %v32 = vld [vmem:[%s0 + $0x60] sm:$0xff]
  %v33 = vld [vmem:[%s0 + $0x68] sm:$0xff]
  %v34 = vld [vmem:[%s0 + $0x70] sm:$0xff]
  %v35 = vld [vmem:[%s0 + $0x78] sm:$0xff]
  %v36 = vld [vmem:[%s1] sm:$0xf]
  %v37 = vld [vmem:[%s2] sm:$0x1]
  %v39 = vperm.slane %v37, 0
  %vm41 = vcmask 31744
  %v43 = vsel %vm41, %v20, 0
  %v46 = vsel %vm41, %v21, 0
  %v49 = vsel %vm41, %v22, 0
  %v52 = vsel %vm41, %v23, 0
  %v55 = vsel %vm41, %v24, 0
  %v58 = vsel %vm41, %v25, 0
  %v61 = vsel %vm41, %v26, 0
  %v64 = vsel %vm41, %v27, 0
  %v67 = vsel %vm41, %v28, 0
  %v70 = vsel %vm41, %v29, 0
  %v73 = vsel %vm41, %v30, 0
  %v76 = vsel %vm41, %v31, 0
  %v79 = vsel %vm41, %v32, 0
  %v82 = vsel %vm41, %v33, 0
  %v85 = vsel %vm41, %v34, 0
  %v88 = vsel %vm41, %v35, 0
  %vm90 = vcmask 1043456
  %v92 = vsel %vm90, %v36, 0
  %94 = vmatpush.msra.mxu0 0.0
  %95 = vmatpush.msra.mxu0 0.0
  %96 = vmatpush.msra.mxu0 0.0
  %97 = vmatpush.msra.mxu0 0.0
  %98 = vmatpush.msra.mxu0 0.0
  %99 = vmatpush.msra.mxu0 0.0
  %100 = vmatpush.msra.mxu0 0.0
  %101 = vmatpush.msra.mxu0 0.0
  %102 = vmatpush.msra.mxu0 0.0
  %103 = vmatpush.msra.mxu0 0.0
  %104 = vmatpush.msra.mxu0 0.0
  %105 = vmatpush.msra.mxu0 0.0
  %106 = vmatpush.msra.mxu0 0.0
  %107 = vmatpush.msra.mxu0 0.0
  %108 = vmatpush.msra.mxu0 0.0
  %109 = vmatpush.msra.mxu0 %v92
  %110 = vmatmul.f32.gmra.mxu0 %v43
  %v111 = vpop.f32.mrf.mxu0
  %v112 = vadd.f32 %v39, %v111
  %113 = vmatmul.f32.gmra.mxu0 %v46
  %v114 = vpop.f32.mrf.mxu0
  %v115 = vadd.f32 %v39, %v114
  %116 = vmatmul.f32.gmra.mxu0 %v49
  %v117 = vpop.f32.mrf.mxu0
  %v118 = vadd.f32 %v39, %v117
  %119 = vmatmul.f32.gmra.mxu0 %v52
  %v120 = vpop.f32.mrf.mxu0
  %v121 = vadd.f32 %v39, %v120
  %122 = vmatmul.f32.gmra.mxu0 %v55
  %v123 = vpop.f32.mrf.mxu0
  %v124 = vadd.f32 %v39, %v123
  %125 = vmatmul.f32.gmra.mxu0 %v58
  %v126 = vpop.f32.mrf.mxu0
  %v127 = vadd.f32 %v39, %v126
  %128 = vmatmul.f32.gmra.mxu0 %v61
  %v129 = vpop.f32.mrf.mxu0
  %v130 = vadd.f32 %v39, %v129
  %131 = vmatmul.f32.gmra.mxu0 %v64
  %v132 = vpop.f32.mrf.mxu0
  %v133 = vadd.f32 %v39, %v132
  %134 = vmatmul.f32.gmra.mxu0 %v67
  %v135 = vpop.f32.mrf.mxu0
  %v136 = vadd.f32 %v39, %v135
  %137 = vmatmul.f32.gmra.mxu0 %v70
  %v138 = vpop.f32.mrf.mxu0
  %v139 = vadd.f32 %v39, %v138
  %140 = vmatmul.f32.gmra.mxu0 %v73
  %v141 = vpop.f32.mrf.mxu0
  %v142 = vadd.f32 %v39, %v141
  %143 = vmatmul.f32.gmra.mxu0 %v76
  %v144 = vpop.f32.mrf.mxu0
  %v145 = vadd.f32 %v39, %v144
  %146 = vmatmul.f32.gmra.mxu0 %v79
  %v147 = vpop.f32.mrf.mxu0
  %v148 = vadd.f32 %v39, %v147
  %149 = vmatmul.f32.gmra.mxu0 %v82
  %v150 = vpop.f32.mrf.mxu0
  %v151 = vadd.f32 %v39, %v150
  %152 = vmatmul.f32.gmra.mxu0 %v85
  %v153 = vpop.f32.mrf.mxu0
  %v154 = vadd.f32 %v39, %v153
  %155 = vmatmul.f32.gmra.mxu0 %v88
  %v156 = vpop.f32.mrf.mxu0
  %v157 = vadd.f32 %v39, %v156
  %158 = vdwg.mxu0
  %v159 = vmax.f32 %v112, 0.0
  %v160 = vmax.f32 %v115, 0.0
  %v161 = vmax.f32 %v118, 0.0
  %v162 = vmax.f32 %v121, 0.0
  %v163 = vmax.f32 %v124, 0.0
  %v164 = vmax.f32 %v127, 0.0
  %v165 = vmax.f32 %v130, 0.0
  %v166 = vmax.f32 %v133, 0.0
  %v167 = vmax.f32 %v136, 0.0
  %v168 = vmax.f32 %v139, 0.0
  %v169 = vmax.f32 %v142, 0.0
  %v170 = vmax.f32 %v145, 0.0
  %v171 = vmax.f32 %v148, 0.0
  %v172 = vmax.f32 %v151, 0.0
  %v173 = vmax.f32 %v154, 0.0
  %v174 = vmax.f32 %v157, 0.0
  %v175 = vld [vmem:[%s3] sm:$0xff]
  %v176 = vld [vmem:[%s3 + $0x8] sm:$0xff]
  %v177 = vld [vmem:[%s3 + $0x10] sm:$0xff]
  %v178 = vld [vmem:[%s3 + $0x18] sm:$0xff]
  %v179 = vld [vmem:[%s3 + $0x20] sm:$0xff]
  %v180 = vld [vmem:[%s3 + $0x28] sm:$0xff]
  %v181 = vld [vmem:[%s3 + $0x30] sm:$0xff]
  %v182 = vld [vmem:[%s3 + $0x38] sm:$0xff]
  %v183 = vld [vmem:[%s3 + $0x40] sm:$0xff]
  %v184 = vld [vmem:[%s3 + $0x48] sm:$0xff]
  %v185 = vld [vmem:[%s3 + $0x50] sm:$0xff]
  %v186 = vld [vmem:[%s3 + $0x58] sm:$0xff]
  %v187 = vld [vmem:[%s3 + $0x60] sm:$0xff]
  %v188 = vld [vmem:[%s3 + $0x68] sm:$0xff]
  %v189 = vld [vmem:[%s3 + $0x70] sm:$0xff]
  %v190 = vld [vmem:[%s3 + $0x78] sm:$0xff]
  %v191 = vld [vmem:[%s3 + $0x80] sm:$0xff]
  %v192 = vld [vmem:[%s3 + $0x88] sm:$0xff]
  %v193 = vld [vmem:[%s3 + $0x90] sm:$0xff]
  %v194 = vld [vmem:[%s3 + $0x98] sm:$0xff]
  %v195 = vld [vmem:[%s3 + $0xa0] sm:$0xff]
  %v196 = vld [vmem:[%s3 + $0xa8] sm:$0xff]
  %v197 = vld [vmem:[%s3 + $0xb0] sm:$0xff]
  %v198 = vld [vmem:[%s3 + $0xb8] sm:$0xff]
  %v199 = vld [vmem:[%s3 + $0xc0] sm:$0xff]
  %v200 = vld [vmem:[%s3 + $0xc8] sm:$0xff]
  %v201 = vld [vmem:[%s3 + $0xd0] sm:$0xff]
  %v202 = vld [vmem:[%s3 + $0xd8] sm:$0xff]
  %v203 = vld [vmem:[%s3 + $0xe0] sm:$0xff]
  %v204 = vld [vmem:[%s3 + $0xe8] sm:$0xff]
  %v205 = vld [vmem:[%s3 + $0xf0] sm:$0xff]
  %v206 = vld [vmem:[%s3 + $0xf8] sm:$0xff]
  %v207 = vld [vmem:[%s3 + $0x100] sm:$0xff]
  %v208 = vld [vmem:[%s3 + $0x108] sm:$0xff]
  %v209 = vld [vmem:[%s3 + $0x110] sm:$0xff]
  %v210 = vld [vmem:[%s3 + $0x118] sm:$0xff]
  %v211 = vld [vmem:[%s3 + $0x120] sm:$0xff]
  %v212 = vld [vmem:[%s3 + $0x128] sm:$0xff]
  %v213 = vld [vmem:[%s3 + $0x130] sm:$0xff]
  %v214 = vld [vmem:[%s3 + $0x138] sm:$0xff]
  %v215 = vld [vmem:[%s3 + $0x140] sm:$0xff]
  %v216 = vld [vmem:[%s3 + $0x148] sm:$0xff]
  %v217 = vld [vmem:[%s3 + $0x150] sm:$0xff]
  %v218 = vld [vmem:[%s3 + $0x158] sm:$0xff]
  %v219 = vld [vmem:[%s3 + $0x160] sm:$0xff]
  %v220 = vld [vmem:[%s3 + $0x168] sm:$0xff]
  %v221 = vld [vmem:[%s3 + $0x170] sm:$0xff]
  %v222 = vld [vmem:[%s3 + $0x178] sm:$0xff]
  %v223 = vld [vmem:[%s3 + $0x180] sm:$0xff]
  %v224 = vld [vmem:[%s3 + $0x188] sm:$0xff]
  %v225 = vld [vmem:[%s3 + $0x190] sm:$0xff]
  %v226 = vld [vmem:[%s3 + $0x198] sm:$0xff]
  %v227 = vld [vmem:[%s3 + $0x1a0] sm:$0xff]
  %v228 = vld [vmem:[%s3 + $0x1a8] sm:$0xff]
  %v229 = vld [vmem:[%s3 + $0x1b0] sm:$0xff]
  %v230 = vld [vmem:[%s3 + $0x1b8] sm:$0xff]
  %v231 = vld [vmem:[%s3 + $0x1c0] sm:$0xff]
  %v232 = vld [vmem:[%s3 + $0x1c8] sm:$0xff]
  %v233 = vld [vmem:[%s3 + $0x1d0] sm:$0xff]
  %v234 = vld [vmem:[%s3 + $0x1d8] sm:$0xff]
  %v235 = vld [vmem:[%s3 + $0x1e0] sm:$0xff]
  %v236 = vld [vmem:[%s3 + $0x1e8] sm:$0xff]
  %v237 = vld [vmem:[%s3 + $0x1f0] sm:$0xff]
  %v238 = vld [vmem:[%s3 + $0x1f8] sm:$0xff]
  %v239 = vld [vmem:[%s4] sm:$0xf]
  %v241 = vperm.slane %v239, 0
  %v242 = vperm.slane %v239, 1
  %v243 = vperm.slane %v239, 2
  %v244 = vperm.slane %v239, 3
  %249 = vmatpush.msra.mxu0 %v235
  %250 = vmatpush.msra.mxu0 %v231
  %251 = vmatpush.msra.mxu0 %v227
  %252 = vmatpush.msra.mxu0 %v223
  %253 = vmatpush.msra.mxu0 %v219
  %254 = vmatpush.msra.mxu0 %v215
  %255 = vmatpush.msra.mxu0 %v211
  %256 = vmatpush.msra.mxu0 %v207
  %257 = vmatpush.msra.mxu0 %v203
  %258 = vmatpush.msra.mxu0 %v199
  %259 = vmatpush.msra.mxu0 %v195
  %260 = vmatpush.msra.mxu0 %v191
  %261 = vmatpush.msra.mxu0 %v187
  %262 = vmatpush.msra.mxu0 %v183
  %263 = vmatpush.msra.mxu0 %v179
  %264 = vmatpush.msra.mxu0 %v175
  %265 = vmatmul.f32.gmra.mxu0 %v159
  %v266 = vpop.f32.mrf.mxu0
  %v267 = vadd.f32 %v241, %v266
  %268 = vmatmul.f32.gmra.mxu0 %v160
  %v269 = vpop.f32.mrf.mxu0
  %v270 = vadd.f32 %v241, %v269
  %271 = vmatmul.f32.gmra.mxu0 %v161
  %v272 = vpop.f32.mrf.mxu0
  %v273 = vadd.f32 %v241, %v272
  %274 = vmatmul.f32.gmra.mxu0 %v162
  %v275 = vpop.f32.mrf.mxu0
  %v276 = vadd.f32 %v241, %v275
  %277 = vmatmul.f32.gmra.mxu0 %v163
  %v278 = vpop.f32.mrf.mxu0
  %v279 = vadd.f32 %v241, %v278
  %280 = vmatmul.f32.gmra.mxu0 %v164
  %v281 = vpop.f32.mrf.mxu0
  %v282 = vadd.f32 %v241, %v281
  %283 = vmatmul.f32.gmra.mxu0 %v165
  %v284 = vpop.f32.mrf.mxu0
  %v285 = vadd.f32 %v241, %v284
  %286 = vmatmul.f32.gmra.mxu0 %v166
  %v287 = vpop.f32.mrf.mxu0
  %v288 = vadd.f32 %v241, %v287
  %289 = vmatmul.f32.gmra.mxu0 %v167
  %v290 = vpop.f32.mrf.mxu0
  %v291 = vadd.f32 %v241, %v290
  %292 = vmatmul.f32.gmra.mxu0 %v168
  %v293 = vpop.f32.mrf.mxu0
  %v294 = vadd.f32 %v241, %v293
  %295 = vmatmul.f32.gmra.mxu0 %v169
  %v296 = vpop.f32.mrf.mxu0
  %v297 = vadd.f32 %v241, %v296
  %298 = vmatmul.f32.gmra.mxu0 %v170
  %v299 = vpop.f32.mrf.mxu0
  %v300 = vadd.f32 %v241, %v299
  %301 = vmatmul.f32.gmra.mxu0 %v171
  %v302 = vpop.f32.mrf.mxu0
  %v303 = vadd.f32 %v241, %v302
  %304 = vmatmul.f32.gmra.mxu0 %v172
  %v305 = vpop.f32.mrf.mxu0
  %v306 = vadd.f32 %v241, %v305
  %307 = vmatmul.f32.gmra.mxu0 %v173
  %v308 = vpop.f32.mrf.mxu0
  %v309 = vadd.f32 %v241, %v308
  %310 = vmatmul.f32.gmra.mxu0 %v174
  %v311 = vpop.f32.mrf.mxu0
  %v312 = vadd.f32 %v241, %v311
  %313 = vdwg.mxu0
  %314 = vmatpush.msra.mxu0 %v236
  %315 = vmatpush.msra.mxu0 %v232
  %316 = vmatpush.msra.mxu0 %v228
  %317 = vmatpush.msra.mxu0 %v224
  %318 = vmatpush.msra.mxu0 %v220
  %319 = vmatpush.msra.mxu0 %v216
  %320 = vmatpush.msra.mxu0 %v212
  %321 = vmatpush.msra.mxu0 %v208
  %322 = vmatpush.msra.mxu0 %v204
  %323 = vmatpush.msra.mxu0 %v200
  %324 = vmatpush.msra.mxu0 %v196
  %325 = vmatpush.msra.mxu0 %v192
  %326 = vmatpush.msra.mxu0 %v188
  %327 = vmatpush.msra.mxu0 %v184
  %328 = vmatpush.msra.mxu0 %v180
  %329 = vmatpush.msra.mxu0 %v176
  %330 = vmatmul.f32.gmra.mxu0 %v159
  %v331 = vpop.f32.mrf.mxu0
  %v332 = vadd.f32 %v242, %v331
  %333 = vmatmul.f32.gmra.mxu0 %v160
  %v334 = vpop.f32.mrf.mxu0
  %v335 = vadd.f32 %v242, %v334
  %336 = vmatmul.f32.gmra.mxu0 %v161
  %v337 = vpop.f32.mrf.mxu0
  %v338 = vadd.f32 %v242, %v337
  %339 = vmatmul.f32.gmra.mxu0 %v162
  %v340 = vpop.f32.mrf.mxu0
  %v341 = vadd.f32 %v242, %v340
  %342 = vmatmul.f32.gmra.mxu0 %v163
  %v343 = vpop.f32.mrf.mxu0
  %v344 = vadd.f32 %v242, %v343
  %345 = vmatmul.f32.gmra.mxu0 %v164
  %v346 = vpop.f32.mrf.mxu0
  %v347 = vadd.f32 %v242, %v346
  %348 = vmatmul.f32.gmra.mxu0 %v165
  %v349 = vpop.f32.mrf.mxu0
  %v350 = vadd.f32 %v242, %v349
  %351 = vmatmul.f32.gmra.mxu0 %v166
  %v352 = vpop.f32.mrf.mxu0
  %v353 = vadd.f32 %v242, %v352
  %354 = vmatmul.f32.gmra.mxu0 %v167
  %v355 = vpop.f32.mrf.mxu0
  %v356 = vadd.f32 %v242, %v355
  %357 = vmatmul.f32.gmra.mxu0 %v168
  %v358 = vpop.f32.mrf.mxu0
  %v359 = vadd.f32 %v242, %v358
  %360 = vmatmul.f32.gmra.mxu0 %v169
  %v361 = vpop.f32.mrf.mxu0
  %v362 = vadd.f32 %v242, %v361
  %363 = vmatmul.f32.gmra.mxu0 %v170
  %v364 = vpop.f32.mrf.mxu0
  %v365 = vadd.f32 %v242, %v364
  %366 = vmatmul.f32.gmra.mxu0 %v171
  %v367 = vpop.f32.mrf.mxu0
  %v368 = vadd.f32 %v242, %v367
  %369 = vmatmul.f32.gmra.mxu0 %v172
  %v370 = vpop.f32.mrf.mxu0
  %v371 = vadd.f32 %v242, %v370
  %372 = vmatmul.f32.gmra.mxu0 %v173
  %v373 = vpop.f32.mrf.mxu0
  %v374 = vadd.f32 %v242, %v373
  %375 = vmatmul.f32.gmra.mxu0 %v174
  %v376 = vpop.f32.mrf.mxu0
  %v377 = vadd.f32 %v242, %v376
  %378 = vdwg.mxu0
  %379 = vmatpush.msra.mxu0 %v237
  %380 = vmatpush.msra.mxu0 %v233
  %381 = vmatpush.msra.mxu0 %v229
  %382 = vmatpush.msra.mxu0 %v225
  %383 = vmatpush.msra.mxu0 %v221
  %384 = vmatpush.msra.mxu0 %v217
  %385 = vmatpush.msra.mxu0 %v213
  %386 = vmatpush.msra.mxu0 %v209
  %387 = vmatpush.msra.mxu0 %v205
  %388 = vmatpush.msra.mxu0 %v201
  %389 = vmatpush.msra.mxu0 %v197
  %390 = vmatpush.msra.mxu0 %v193
  %391 = vmatpush.msra.mxu0 %v189
  %392 = vmatpush.msra.mxu0 %v185
  %393 = vmatpush.msra.mxu0 %v181
  %394 = vmatpush.msra.mxu0 %v177
  %395 = vmatmul.f32.gmra.mxu0 %v159
  %v396 = vpop.f32.mrf.mxu0
  %v397 = vadd.f32 %v243, %v396
  %398 = vmatmul.f32.gmra.mxu0 %v160
  %v399 = vpop.f32.mrf.mxu0
  %v400 = vadd.f32 %v243, %v399
  %401 = vmatmul.f32.gmra.mxu0 %v161
  %v402 = vpop.f32.mrf.mxu0
  %v403 = vadd.f32 %v243, %v402
  %404 = vmatmul.f32.gmra.mxu0 %v162
  %v405 = vpop.f32.mrf.mxu0
  %v406 = vadd.f32 %v243, %v405
  %407 = vmatmul.f32.gmra.mxu0 %v163
  %v408 = vpop.f32.mrf.mxu0
  %v409 = vadd.f32 %v243, %v408
  %410 = vmatmul.f32.gmra.mxu0 %v164
  %v411 = vpop.f32.mrf.mxu0
  %v412 = vadd.f32 %v243, %v411
  %413 = vmatmul.f32.gmra.mxu0 %v165
  %v414 = vpop.f32.mrf.mxu0
  %v415 = vadd.f32 %v243, %v414
  %416 = vmatmul.f32.gmra.mxu0 %v166
  %v417 = vpop.f32.mrf.mxu0
  %v418 = vadd.f32 %v243, %v417
  %419 = vmatmul.f32.gmra.mxu0 %v167
  %v420 = vpop.f32.mrf.mxu0
  %v421 = vadd.f32 %v243, %v420
  %422 = vmatmul.f32.gmra.mxu0 %v168
  %v423 = vpop.f32.mrf.mxu0
  %v424 = vadd.f32 %v243, %v423
  %425 = vmatmul.f32.gmra.mxu0 %v169
  %v426 = vpop.f32.mrf.mxu0
  %v427 = vadd.f32 %v243, %v426
  %428 = vmatmul.f32.gmra.mxu0 %v170
  %v429 = vpop.f32.mrf.mxu0
  %v430 = vadd.f32 %v243, %v429
  %431 = vmatmul.f32.gmra.mxu0 %v171
  %v432 = vpop.f32.mrf.mxu0
  %v433 = vadd.f32 %v243, %v432
  %434 = vmatmul.f32.gmra.mxu0 %v172
  %v435 = vpop.f32.mrf.mxu0
  %v436 = vadd.f32 %v243, %v435
  %437 = vmatmul.f32.gmra.mxu0 %v173
  %v438 = vpop.f32.mrf.mxu0
  %v439 = vadd.f32 %v243, %v438
  %440 = vmatmul.f32.gmra.mxu0 %v174
  %v441 = vpop.f32.mrf.mxu0
  %v442 = vadd.f32 %v243, %v441
  %443 = vdwg.mxu0
  %444 = vmatpush.msra.mxu0 %v238
  %445 = vmatpush.msra.mxu0 %v234
  %446 = vmatpush.msra.mxu0 %v230
  %447 = vmatpush.msra.mxu0 %v226
  %448 = vmatpush.msra.mxu0 %v222
  %449 = vmatpush.msra.mxu0 %v218
  %450 = vmatpush.msra.mxu0 %v214
  %451 = vmatpush.msra.mxu0 %v210
  %452 = vmatpush.msra.mxu0 %v206
  %453 = vmatpush.msra.mxu0 %v202
  %454 = vmatpush.msra.mxu0 %v198
  %455 = vmatpush.msra.mxu0 %v194
  %456 = vmatpush.msra.mxu0 %v190
  %457 = vmatpush.msra.mxu0 %v186
  %458 = vmatpush.msra.mxu0 %v182
  %459 = vmatpush.msra.mxu0 %v178
  %460 = vmatmul.f32.gmra.mxu0 %v159
  %v461 = vpop.f32.mrf.mxu0
  %v462 = vadd.f32 %v244, %v461
  %463 = vmatmul.f32.gmra.mxu0 %v160
  %v464 = vpop.f32.mrf.mxu0
  %v465 = vadd.f32 %v244, %v464
  %466 = vmatmul.f32.gmra.mxu0 %v161
  %v467 = vpop.f32.mrf.mxu0
  %v468 = vadd.f32 %v244, %v467
  %469 = vmatmul.f32.gmra.mxu0 %v162
  %v470 = vpop.f32.mrf.mxu0
  %v471 = vadd.f32 %v244, %v470
  %472 = vmatmul.f32.gmra.mxu0 %v163
  %v473 = vpop.f32.mrf.mxu0
  %v474 = vadd.f32 %v244, %v473
  %475 = vmatmul.f32.gmra.mxu0 %v164
  %v476 = vpop.f32.mrf.mxu0
  %v477 = vadd.f32 %v244, %v476
  %478 = vmatmul.f32.gmra.mxu0 %v165
  %v479 = vpop.f32.mrf.mxu0
  %v480 = vadd.f32 %v244, %v479
  %481 = vmatmul.f32.gmra.mxu0 %v166
  %v482 = vpop.f32.mrf.mxu0
  %v483 = vadd.f32 %v244, %v482
  %484 = vmatmul.f32.gmra.mxu0 %v167
  %v485 = vpop.f32.mrf.mxu0
  %v486 = vadd.f32 %v244, %v485
  %487 = vmatmul.f32.gmra.mxu0 %v168
  %v488 = vpop.f32.mrf.mxu0
  %v489 = vadd.f32 %v244, %v488
  %490 = vmatmul.f32.gmra.mxu0 %v169
  %v491 = vpop.f32.mrf.mxu0
  %v492 = vadd.f32 %v244, %v491
  %493 = vmatmul.f32.gmra.mxu0 %v170
  %v494 = vpop.f32.mrf.mxu0
  %v495 = vadd.f32 %v244, %v494
  %496 = vmatmul.f32.gmra.mxu0 %v171
  %v497 = vpop.f32.mrf.mxu0
  %v498 = vadd.f32 %v244, %v497
  %499 = vmatmul.f32.gmra.mxu0 %v172
  %v500 = vpop.f32.mrf.mxu0
  %v501 = vadd.f32 %v244, %v500
  %502 = vmatmul.f32.gmra.mxu0 %v173
  %v503 = vpop.f32.mrf.mxu0
  %v504 = vadd.f32 %v244, %v503
  %505 = vmatmul.f32.gmra.mxu0 %v174
  %v506 = vpop.f32.mrf.mxu0
  %v507 = vadd.f32 %v244, %v506
  %508 = vdwg.mxu0
  %509 = vst [vmem:[%s5] sm:$0xff] %v267
  %510 = vst [vmem:[%s5 + $0x8] sm:$0xff] %v332
  %511 = vst [vmem:[%s5 + $0x10] sm:$0xff] %v397
  %512 = vst [vmem:[%s5 + $0x18] sm:$0xff] %v462
  %513 = vst [vmem:[%s5 + $0x20] sm:$0xff] %v270
  %514 = vst [vmem:[%s5 + $0x28] sm:$0xff] %v335
  %515 = vst [vmem:[%s5 + $0x30] sm:$0xff] %v400
  %516 = vst [vmem:[%s5 + $0x38] sm:$0xff] %v465
  %517 = vst [vmem:[%s5 + $0x40] sm:$0xff] %v273
  %518 = vst [vmem:[%s5 + $0x48] sm:$0xff] %v338
  %519 = vst [vmem:[%s5 + $0x50] sm:$0xff] %v403
  %520 = vst [vmem:[%s5 + $0x58] sm:$0xff] %v468
  %521 = vst [vmem:[%s5 + $0x60] sm:$0xff] %v276
  %522 = vst [vmem:[%s5 + $0x68] sm:$0xff] %v341
  %523 = vst [vmem:[%s5 + $0x70] sm:$0xff] %v406
  %524 = vst [vmem:[%s5 + $0x78] sm:$0xff] %v471
  %525 = vst [vmem:[%s5 + $0x80] sm:$0xff] %v279
  %526 = vst [vmem:[%s5 + $0x88] sm:$0xff] %v344
  %527 = vst [vmem:[%s5 + $0x90] sm:$0xff] %v409
  %528 = vst [vmem:[%s5 + $0x98] sm:$0xff] %v474
  %529 = vst [vmem:[%s5 + $0xa0] sm:$0xff] %v282
  %530 = vst [vmem:[%s5 + $0xa8] sm:$0xff] %v347
  %531 = vst [vmem:[%s5 + $0xb0] sm:$0xff] %v412
  %532 = vst [vmem:[%s5 + $0xb8] sm:$0xff] %v477
  %533 = vst [vmem:[%s5 + $0xc0] sm:$0xff] %v285
  %534 = vst [vmem:[%s5 + $0xc8] sm:$0xff] %v350
  %535 = vst [vmem:[%s5 + $0xd0] sm:$0xff] %v415
  %536 = vst [vmem:[%s5 + $0xd8] sm:$0xff] %v480
  %537 = vst [vmem:[%s5 + $0xe0] sm:$0xff] %v288
  %538 = vst [vmem:[%s5 + $0xe8] sm:$0xff] %v353
  %539 = vst [vmem:[%s5 + $0xf0] sm:$0xff] %v418
  %540 = vst [vmem:[%s5 + $0xf8] sm:$0xff] %v483
  %541 = vst [vmem:[%s5 + $0x100] sm:$0xff] %v291
  %542 = vst [vmem:[%s5 + $0x108] sm:$0xff] %v356
  %543 = vst [vmem:[%s5 + $0x110] sm:$0xff] %v421
  %544 = vst [vmem:[%s5 + $0x118] sm:$0xff] %v486
  %545 = vst [vmem:[%s5 + $0x120] sm:$0xff] %v294
  %546 = vst [vmem:[%s5 + $0x128] sm:$0xff] %v359
  %547 = vst [vmem:[%s5 + $0x130] sm:$0xff] %v424
  %548 = vst [vmem:[%s5 + $0x138] sm:$0xff] %v489
  %549 = vst [vmem:[%s5 + $0x140] sm:$0xff] %v297
  %550 = vst [vmem:[%s5 + $0x148] sm:$0xff] %v362
  %551 = vst [vmem:[%s5 + $0x150] sm:$0xff] %v427
  %552 = vst [vmem:[%s5 + $0x158] sm:$0xff] %v492
  %553 = vst [vmem:[%s5 + $0x160] sm:$0xff] %v300
  %554 = vst [vmem:[%s5 + $0x168] sm:$0xff] %v365
  %555 = vst [vmem:[%s5 + $0x170] sm:$0xff] %v430
  %556 = vst [vmem:[%s5 + $0x178] sm:$0xff] %v495
  %557 = vst [vmem:[%s5 + $0x180] sm:$0xff] %v303
  %558 = vst [vmem:[%s5 + $0x188] sm:$0xff] %v368
  %559 = vst [vmem:[%s5 + $0x190] sm:$0xff] %v433
  %560 = vst [vmem:[%s5 + $0x198] sm:$0xff] %v498
  %561 = vst [vmem:[%s5 + $0x1a0] sm:$0xff] %v306
  %562 = vst [vmem:[%s5 + $0x1a8] sm:$0xff] %v371
  %563 = vst [vmem:[%s5 + $0x1b0] sm:$0xff] %v436
  %564 = vst [vmem:[%s5 + $0x1b8] sm:$0xff] %v501
  %565 = vst [vmem:[%s5 + $0x1c0] sm:$0xff] %v309
  %566 = vst [vmem:[%s5 + $0x1c8] sm:$0xff] %v374
  %567 = vst [vmem:[%s5 + $0x1d0] sm:$0xff] %v439
  %568 = vst [vmem:[%s5 + $0x1d8] sm:$0xff] %v504
  %569 = vst [vmem:[%s5 + $0x1e0] sm:$0xff] %v312
  %570 = vst [vmem:[%s5 + $0x1e8] sm:$0xff] %v377
  %571 = vst [vmem:[%s5 + $0x1f0] sm:$0xff] %v442
  %572 = vst [vmem:[%s5 + $0x1f8] sm:$0xff] %v507
  // Predicated region
  $region22: #{kuai_lstm_forward.2} parent=0 // pred_check
    _
  $region23: #{kuai_lstm_forward.2} parent=0 // pred_check_branch
    %574 = sbr.rel (0) target = $region25
  $region24: #{kuai_lstm_forward.2} parent=0 // pred_region
    _
  $region25: #{kuai_lstm_forward.2} parent=0 // pred_fallthru
    _
  // Predicated region
  $region26: #{kuai_lstm_forward.2} parent=0 // pred_check
    _
  $region27: #{kuai_lstm_forward.2} parent=0 // pred_check_branch
    %576 = sbr.rel (0) target = $region29
  $region28: #{kuai_lstm_forward.2} parent=0 // pred_region
    _
  $region29: #{kuai_lstm_forward.2} parent=0 // pred_fallthru
    _

// kernel: kuai_lstm_forward.3
$region0: #{kuai_lstm_forward.3}
  #allocation0 [shape = 'u32[]', space=smem, size = 0x4, offset = 0x4, fixed_abs, tag = 'smem constant byte address 0x4 - core index']
  #allocation1 [shape = 'u32[72,128]{1,0:T(1,128)}', space=vmem, size = 0x9000, scoped, tag = 'internal scratch']
  #allocation2 [shape = 'f32[16,128]{1,0:T(8,128)}', space=vmem, size = 0x2000, scoped, tag = 'scratch operand']
  #allocation3 [shape = 'f32[16,128]{1,0:T(8,128)}', space=vmem, size = 0x2000, scoped, tag = 'scratch operand']
  %s0 = inlined_call_operand.vmem [shape: f32[8,16,512], index: 0, kind: input, shape index: {}]
  %s1 = inlined_call_operand.vmem [shape: f32[128,512], index: 1, kind: input, shape index: {}]
  %s2 = inlined_call_operand.vmem [shape: f32[8,16,128], index: 2, kind: output, shape index: {}]
  %s3 = sld [smem:[#allocation0]]
  $region22: #{kuai_lstm_forward.3} parent=0
    _
  %s5 = ssub.s32 1, %s3
  %s6 = scalar_select 0, %s5, %s3
  // Predicated region
  $region2: #{kuai_lstm_forward.3} parent=0 // pred_check
    _
  $region3: #{kuai_lstm_forward.3} parent=0 // pred_check_branch
    %8 = sbr.rel (0) target = $region5
  $region4: #{kuai_lstm_forward.3} parent=0 // pred_region
    _
  $region5: #{kuai_lstm_forward.3} parent=0 // pred_fallthru
    _
  // Predicated region
  $region6: #{kuai_lstm_forward.3} parent=0 // pred_check
    _
  $region7: #{kuai_lstm_forward.3} parent=0 // pred_check_branch
    %10 = sbr.rel (0) target = $region9
  $region8: #{kuai_lstm_forward.3} parent=0 // pred_region
    _
  $region9: #{kuai_lstm_forward.3} parent=0 // pred_fallthru
    _
  %p11 = scmp.eq.s32.totalorder 0, 0
  // Predicated region
  $region10: #{kuai_lstm_forward.3} parent=0 // pred_check
    %p12 = pneg %p11
  $region11: #{kuai_lstm_forward.3} parent=0 // pred_check_branch
    %14 = sbr.rel (%p12) target = $region13
  $region12: #{kuai_lstm_forward.3} parent=0 // pred_region
    %15 = vst [vmem:[#allocation2] sm:$0xff] 0.0
    %16 = vst [vmem:[#allocation2 + $0x8] sm:$0xff] 0.0
    %17 = vst [vmem:[#allocation3] sm:$0xff] 0.0
    %18 = vst [vmem:[#allocation3 + $0x8] sm:$0xff] 0.0
  $region13: #{kuai_lstm_forward.3} parent=0 // pred_fallthru
    _
  %v19 = vld [vmem:[%s1] sm:$0xff]
  %v20 = vld [vmem:[%s1 + $0x8] sm:$0xff]
  %v21 = vld [vmem:[%s1 + $0x10] sm:$0xff]
  %v22 = vld [vmem:[%s1 + $0x18] sm:$0xff]
  %v23 = vld [vmem:[%s1 + $0x20] sm:$0xff]
  %v24 = vld [vmem:[%s1 + $0x28] sm:$0xff]
  %v25 = vld [vmem:[%s1 + $0x30] sm:$0xff]
  %v26 = vld [vmem:[%s1 + $0x38] sm:$0xff]
  %v27 = vld [vmem:[%s1 + $0x40] sm:$0xff]
  %v28 = vld [vmem:[%s1 + $0x48] sm:$0xff]
  %v29 = vld [vmem:[%s1 + $0x50] sm:$0xff]
  %v30 = vld [vmem:[%s1 + $0x58] sm:$0xff]
  %v31 = vld [vmem:[%s1 + $0x60] sm:$0xff]
  %v32 = vld [vmem:[%s1 + $0x68] sm:$0xff]
  %v33 = vld [vmem:[%s1 + $0x70] sm:$0xff]
  %v34 = vld [vmem:[%s1 + $0x78] sm:$0xff]
  %v35 = vld [vmem:[%s1 + $0x80] sm:$0xff]
  %v36 = vld [vmem:[%s1 + $0x88] sm:$0xff]
  %v37 = vld [vmem:[%s1 + $0x90] sm:$0xff]
  %v38 = vld [vmem:[%s1 + $0x98] sm:$0xff]
  %v39 = vld [vmem:[%s1 + $0xa0] sm:$0xff]
  %v40 = vld [vmem:[%s1 + $0xa8] sm:$0xff]
  %v41 = vld [vmem:[%s1 + $0xb0] sm:$0xff]
  %v42 = vld [vmem:[%s1 + $0xb8] sm:$0xff]
  %v43 = vld [vmem:[%s1 + $0xc0] sm:$0xff]
  %v44 = vld [vmem:[%s1 + $0xc8] sm:$0xff]
  %v45 = vld [vmem:[%s1 + $0xd0] sm:$0xff]
  %v46 = vld [vmem:[%s1 + $0xd8] sm:$0xff]
  %v47 = vld [vmem:[%s1 + $0xe0] sm:$0xff]
  %v48 = vld [vmem:[%s1 + $0xe8] sm:$0xff]
  %v49 = vld [vmem:[%s1 + $0xf0] sm:$0xff]
  %v50 = vld [vmem:[%s1 + $0xf8] sm:$0xff]
  %v51 = vld [vmem:[%s1 + $0x100] sm:$0xff]
  %v52 = vld [vmem:[%s1 + $0x108] sm:$0xff]
  %v53 = vld [vmem:[%s1 + $0x110] sm:$0xff]
  %v54 = vld [vmem:[%s1 + $0x118] sm:$0xff]
  %v55 = vld [vmem:[%s1 + $0x120] sm:$0xff]
  %v56 = vld [vmem:[%s1 + $0x128] sm:$0xff]
  %v57 = vld [vmem:[%s1 + $0x130] sm:$0xff]
  %v58 = vld [vmem:[%s1 + $0x138] sm:$0xff]
  %v59 = vld [vmem:[%s1 + $0x140] sm:$0xff]
  %v60 = vld [vmem:[%s1 + $0x148] sm:$0xff]
  %v61 = vld [vmem:[%s1 + $0x150] sm:$0xff]
  %v62 = vld [vmem:[%s1 + $0x158] sm:$0xff]
  %v63 = vld [vmem:[%s1 + $0x160] sm:$0xff]
  %v64 = vld [vmem:[%s1 + $0x168] sm:$0xff]
  %v65 = vld [vmem:[%s1 + $0x170] sm:$0xff]
  %v66 = vld [vmem:[%s1 + $0x178] sm:$0xff]
  %v67 = vld [vmem:[%s1 + $0x180] sm:$0xff]
  %v68 = vld [vmem:[%s1 + $0x188] sm:$0xff]
  %v69 = vld [vmem:[%s1 + $0x190] sm:$0xff]
  %v70 = vld [vmem:[%s1 + $0x198] sm:$0xff]
  %v71 = vld [vmem:[%s1 + $0x1a0] sm:$0xff]
  %v72 = vld [vmem:[%s1 + $0x1a8] sm:$0xff]
  %v73 = vld [vmem:[%s1 + $0x1b0] sm:$0xff]
  %v74 = vld [vmem:[%s1 + $0x1b8] sm:$0xff]
  %v75 = vld [vmem:[%s1 + $0x1c0] sm:$0xff]
  %v76 = vld [vmem:[%s1 + $0x1c8] sm:$0xff]
  %v77 = vld [vmem:[%s1 + $0x1d0] sm:$0xff]
  %v78 = vld [vmem:[%s1 + $0x1d8] sm:$0xff]
  %v79 = vld [vmem:[%s1 + $0x1e0] sm:$0xff]
  %v80 = vld [vmem:[%s1 + $0x1e8] sm:$0xff]
  %v81 = vld [vmem:[%s1 + $0x1f0] sm:$0xff]
  %v82 = vld [vmem:[%s1 + $0x1f8] sm:$0xff]
  %v83 = vld [vmem:[%s0] sm:$0xff]
  %v84 = vld [vmem:[%s0 + $0x8] sm:$0xff]
  %v85 = vld [vmem:[%s0 + $0x10] sm:$0xff]
  %v86 = vld [vmem:[%s0 + $0x18] sm:$0xff]
  %v87 = vld [vmem:[%s0 + $0x20] sm:$0xff]
  %v88 = vld [vmem:[%s0 + $0x28] sm:$0xff]
  %v89 = vld [vmem:[%s0 + $0x30] sm:$0xff]
  %v90 = vld [vmem:[%s0 + $0x38] sm:$0xff]
  %v91 = vld [vmem:[#allocation2] sm:$0xff]
  %v92 = vld [vmem:[#allocation2 + $0x8] sm:$0xff]
  %93 = vmatpush.msra.mxu0 %v79
  %94 = vmatpush.msra.mxu0 %v75
  %95 = vmatpush.msra.mxu0 %v71
  %96 = vmatpush.msra.mxu0 %v67
  %97 = vmatpush.msra.mxu0 %v63
  %98 = vmatpush.msra.mxu0 %v59
  %99 = vmatpush.msra.mxu0 %v55
  %100 = vmatpush.msra.mxu0 %v51
  %101 = vmatpush.msra.mxu0 %v47
  %102 = vmatpush.msra.mxu0 %v43
  %103 = vmatpush.msra.mxu0 %v39
  %104 = vmatpush.msra.mxu0 %v35
  %105 = vmatpush.msra.mxu0 %v31
  %106 = vmatpush.msra.mxu0 %v27
  %107 = vmatpush.msra.mxu0 %v23
  %108 = vmatpush.msra.mxu0 %v19
  %109 = vmatmul.f32.gmra.mxu0 %v91
  %v110 = vpop.f32.mrf.mxu0
  %v111 = vadd.f32 0.0, %v110
  %112 = vmatmul.f32.gmra.mxu0 %v92
  %v113 = vpop.f32.mrf.mxu0
  %v114 = vadd.f32 0.0, %v113
  %115 = vdwg.mxu0
  %116 = vmatpush.msra.mxu0 %v80
  %117 = vmatpush.msra.mxu0 %v76
  %118 = vmatpush.msra.mxu0 %v72
  %119 = vmatpush.msra.mxu0 %v68
  %120 = vmatpush.msra.mxu0 %v64
  %121 = vmatpush.msra.mxu0 %v60
  %122 = vmatpush.msra.mxu0 %v56
  %123 = vmatpush.msra.mxu0 %v52
  %124 = vmatpush.msra.mxu0 %v48
  %125 = vmatpush.msra.mxu0 %v44
  %126 = vmatpush.msra.mxu0 %v40
  %127 = vmatpush.msra.mxu0 %v36
  %128 = vmatpush.msra.mxu0 %v32
  %129 = vmatpush.msra.mxu0 %v28
  %130 = vmatpush.msra.mxu0 %v24
  %131 = vmatpush.msra.mxu0 %v20
  %132 = vmatmul.f32.gmra.mxu0 %v91
  %v133 = vpop.f32.mrf.mxu0
  %v134 = vadd.f32 0.0, %v133
  %135 = vmatmul.f32.gmra.mxu0 %v92
  %v136 = vpop.f32.mrf.mxu0
  %v137 = vadd.f32 0.0, %v136
  %138 = vdwg.mxu0
  %139 = vmatpush.msra.mxu0 %v81
  %140 = vmatpush.msra.mxu0 %v77
  %141 = vmatpush.msra.mxu0 %v73
  %142 = vmatpush.msra.mxu0 %v69
  %143 = vmatpush.msra.mxu0 %v65
  %144 = vmatpush.msra.mxu0 %v61
  %145 = vmatpush.msra.mxu0 %v57
  %146 = vmatpush.msra.mxu0 %v53
  %147 = vmatpush.msra.mxu0 %v49
  %148 = vmatpush.msra.mxu0 %v45
  %149 = vmatpush.msra.mxu0 %v41
  %150 = vmatpush.msra.mxu0 %v37
  %151 = vmatpush.msra.mxu0 %v33
  %152 = vmatpush.msra.mxu0 %v29
  %153 = vmatpush.msra.mxu0 %v25
  %154 = vmatpush.msra.mxu0 %v21
  %155 = vmatmul.f32.gmra.mxu0 %v91
  %v156 = vpop.f32.mrf.mxu0
  %v157 = vadd.f32 0.0, %v156
  %158 = vmatmul.f32.gmra.mxu0 %v92
  %v159 = vpop.f32.mrf.mxu0
  %v160 = vadd.f32 0.0, %v159
  %161 = vdwg.mxu0
  %162 = vmatpush.msra.mxu0 %v82
  %163 = vmatpush.msra.mxu0 %v78
  %164 = vmatpush.msra.mxu0 %v74
  %165 = vmatpush.msra.mxu0 %v70
  %166 = vmatpush.msra.mxu0 %v66
  %167 = vmatpush.msra.mxu0 %v62
  %168 = vmatpush.msra.mxu0 %v58
  %169 = vmatpush.msra.mxu0 %v54
  %170 = vmatpush.msra.mxu0 %v50
  %171 = vmatpush.msra.mxu0 %v46
  %172 = vmatpush.msra.mxu0 %v42
  %173 = vmatpush.msra.mxu0 %v38
  %174 = vmatpush.msra.mxu0 %v34
  %175 = vmatpush.msra.mxu0 %v30
  %176 = vmatpush.msra.mxu0 %v26
  %177 = vmatpush.msra.mxu0 %v22
  %178 = vmatmul.f32.gmra.mxu0 %v91
  %v179 = vpop.f32.mrf.mxu0
  %v180 = vadd.f32 0.0, %v179
  %181 = vmatmul.f32.gmra.mxu0 %v92
  %v182 = vpop.f32.mrf.mxu0
  %v183 = vadd.f32 0.0, %v182
  %184 = vdwg.mxu0
  %v185 = vadd.f32 %v83, %v111
  %v186 = vadd.f32 %v84, %v134
  %v187 = vadd.f32 %v85, %v157
  %v188 = vadd.f32 %v86, %v180
  %v189 = vadd.f32 %v87, %v114
  %v190 = vadd.f32 %v88, %v137
  %v191 = vadd.f32 %v89, %v160
  %v192 = vadd.f32 %v90, %v183
  %v193 = vxor.u32 %v185, 2147483648
  %v194 = vxor.u32 %v189, 2147483648
  %v195 = vmul.f32 %v193, 1.442695
  %v196 = vpow.pop %v195
  %v197 = vmul.f32 %v194, 1.442695
  %v198 = vpow.pop %v197
  %v199 = vadd.f32 %v196, 1.0
  %v200 = vadd.f32 %v198, 1.0
  %v201 = vrcp.pop %v199
  %v202 = vmul.f32 %v199, %v201
  %v203 = vsub.f32 1.0, %v202
  %v204 = vmul.f32 %v201, %v203
  %v205 = vadd.f32 %v201, %v204
  %vm206 = vweird.f32 %v199
  %vm207 = vweird.f32 %v201
  %vm208 = vmor %vm206, %vm207
  %v209 = vsel %vm208, %v201, %v205
  %v210 = vand.u32 2147483647, %v199
  %vm211 = vcmp.eq.f32.partialorder %v210, 8.507059e+37
  %v212 = vand.u32 %v199, 2147483648
  %v213 = vor.u32 1.1754944e-38, %v212
  %v214 = vsel %vm211, %v213, %v209
  %v215 = vmul.f32 1.0, %v214
  %v216 = vrcp.pop %v200
  %v217 = vmul.f32 %v200, %v216
  %v218 = vsub.f32 1.0, %v217
  %v219 = vmul.f32 %v216, %v218
  %v220 = vadd.f32 %v216, %v219
  %vm221 = vweird.f32 %v200
  %vm222 = vweird.f32 %v216
  %vm223 = vmor %vm221, %vm222
  %v224 = vsel %vm223, %v216, %v220
  %v225 = vand.u32 2147483647, %v200
  %vm226 = vcmp.eq.f32.partialorder %v225, 8.507059e+37
  %v227 = vand.u32 %v200, 2147483648
  %v228 = vor.u32 1.1754944e-38, %v227
  %v229 = vsel %vm226, %v228, %v224
  %v230 = vmul.f32 1.0, %v229
  %v231 = vxor.u32 %v186, 2147483648
  %v232 = vxor.u32 %v190, 2147483648
  %v233 = vmul.f32 %v231, 1.442695
  %v234 = vpow.pop %v233
  %v235 = vmul.f32 %v232, 1.442695
  %v236 = vpow.pop %v235
  %v237 = vadd.f32 %v234, 1.0
  %v238 = vadd.f32 %v236, 1.0
  %v239 = vrcp.pop %v237
  %v240 = vmul.f32 %v237, %v239
  %v241 = vsub.f32 1.0, %v240
  %v242 = vmul.f32 %v239, %v241
  %v243 = vadd.f32 %v239, %v242
  %vm244 = vweird.f32 %v237
  %vm245 = vweird.f32 %v239
  %vm246 = vmor %vm244, %vm245
  %v247 = vsel %vm246, %v239, %v243
  %v248 = vand.u32 2147483647, %v237
  %vm249 = vcmp.eq.f32.partialorder %v248, 8.507059e+37
  %v250 = vand.u32 %v237, 2147483648
  %v251 = vor.u32 1.1754944e-38, %v250
  %v252 = vsel %vm249, %v251, %v247
  %v253 = vmul.f32 1.0, %v252
  %v254 = vrcp.pop %v238
  %v255 = vmul.f32 %v238, %v254
  %v256 = vsub.f32 1.0, %v255
  %v257 = vmul.f32 %v254, %v256
  %v258 = vadd.f32 %v254, %v257
  %vm259 = vweird.f32 %v238
  %vm260 = vweird.f32 %v254
  %vm261 = vmor %vm259, %vm260
  %v262 = vsel %vm261, %v254, %v258
  %v263 = vand.u32 2147483647, %v238
  %vm264 = vcmp.eq.f32.partialorder %v263, 8.507059e+37
  %v265 = vand.u32 %v238, 2147483648
  %v266 = vor.u32 1.1754944e-38, %v265
  %v267 = vsel %vm264, %v266, %v262
  %v268 = vmul.f32 1.0, %v267
  %v269 = vtanh.pop %v187
  %v270 = vtanh.pop %v191
  %v271 = vxor.u32 %v188, 2147483648
  %v272 = vxor.u32 %v192, 2147483648
  %v273 = vmul.f32 %v271, 1.442695
  %v274 = vpow.pop %v273
  %v275 = vmul.f32 %v272, 1.442695
  %v276 = vpow.pop %v275
  %v277 = vadd.f32 %v274, 1.0
  %v278 = vadd.f32 %v276, 1.0
  %v279 = vrcp.pop %v277
  %v280 = vmul.f32 %v277, %v279
  %v281 = vsub.f32 1.0, %v280
  %v282 = vmul.f32 %v279, %v281
  %v283 = vadd.f32 %v279, %v282
  %vm284 = vweird.f32 %v277
  %vm285 = vweird.f32 %v279
  %vm286 = vmor %vm284, %vm285
  %v287 = vsel %vm286, %v279, %v283
  %v288 = vand.u32 2147483647, %v277
  %vm289 = vcmp.eq.f32.partialorder %v288, 8.507059e+37
  %v290 = vand.u32 %v277, 2147483648
  %v291 = vor.u32 1.1754944e-38, %v290
  %v292 = vsel %vm289, %v291, %v287
  %v293 = vmul.f32 1.0, %v292
  %v294 = vrcp.pop %v278
  %v295 = vmul.f32 %v278, %v294
  %v296 = vsub.f32 1.0, %v295
  %v297 = vmul.f32 %v294, %v296
  %v298 = vadd.f32 %v294, %v297
  %vm299 = vweird.f32 %v278
  %vm300 = vweird.f32 %v294
  %vm301 = vmor %vm299, %vm300
  %v302 = vsel %vm301, %v294, %v298
  %v303 = vand.u32 2147483647, %v278
  %vm304 = vcmp.eq.f32.partialorder %v303, 8.507059e+37
  %v305 = vand.u32 %v278, 2147483648
  %v306 = vor.u32 1.1754944e-38, %v305
  %v307 = vsel %vm304, %v306, %v302
  %v308 = vmul.f32 1.0, %v307
  %v309 = vld [vmem:[#allocation3] sm:$0xff]
  %v310 = vld [vmem:[#allocation3 + $0x8] sm:$0xff]
  %v311 = vmul.f32 %v253, %v309
  %v312 = vmul.f32 %v268, %v310
  %v313 = vmul.f32 %v215, %v269
  %v314 = vmul.f32 %v230, %v270
  %v315 = vadd.f32 %v311, %v313
  %v316 = vadd.f32 %v312, %v314
  %v317 = vtanh.pop %v315
  %v318 = vtanh.pop %v316
  %v319 = vmul.f32 %v293, %v317
  %v320 = vmul.f32 %v308, %v318
  %321 = vst [vmem:[#allocation2] sm:$0xff] %v319
  %322 = vst [vmem:[#allocation2 + $0x8] sm:$0xff] %v320
  %323 = vst [vmem:[#allocation3] sm:$0xff] %v315
  %324 = vst [vmem:[#allocation3 + $0x8] sm:$0xff] %v316
  %325 = vst [vmem:[%s2] sm:$0xff] %v319
  %326 = vst [vmem:[%s2 + $0x8] sm:$0xff] %v320
  %s327 = scalar_lea.vmem %s0, 64
  %v328 = vld [vmem:[%s327] sm:$0xff]
  %v329 = vld [vmem:[%s327 + $0x8] sm:$0xff]
  %v330 = vld [vmem:[%s327 + $0x10] sm:$0xff]
  %v331 = vld [vmem:[%s327 + $0x18] sm:$0xff]
  %v332 = vld [vmem:[%s327 + $0x20] sm:$0xff]
  %v333 = vld [vmem:[%s327 + $0x28] sm:$0xff]
  %v334 = vld [vmem:[%s327 + $0x30] sm:$0xff]
  %v335 = vld [vmem:[%s327 + $0x38] sm:$0xff]
  %v336 = vld [vmem:[#allocation2] sm:$0xff]
  %v337 = vld [vmem:[#allocation2 + $0x8] sm:$0xff]
  %338 = vmatpush.msra.mxu0 %v79
  %339 = vmatpush.msra.mxu0 %v75
  %340 = vmatpush.msra.mxu0 %v71
  %341 = vmatpush.msra.mxu0 %v67
  %342 = vmatpush.msra.mxu0 %v63
  %343 = vmatpush.msra.mxu0 %v59
  %344 = vmatpush.msra.mxu0 %v55
  %345 = vmatpush.msra.mxu0 %v51
  %346 = vmatpush.msra.mxu0 %v47
  %347 = vmatpush.msra.mxu0 %v43
  %348 = vmatpush.msra.mxu0 %v39
  %349 = vmatpush.msra.mxu0 %v35
  %350 = vmatpush.msra.mxu0 %v31
  %351 = vmatpush.msra.mxu0 %v27
  %352 = vmatpush.msra.mxu0 %v23
  %353 = vmatpush.msra.mxu0 %v19
  %354 = vmatmul.f32.gmra.mxu0 %v336
  %v355 = vpop.f32.mrf.mxu0
  %v356 = vadd.f32 0.0, %v355
  %357 = vmatmul.f32.gmra.mxu0 %v337
  %v358 = vpop.f32.mrf.mxu0
  %v359 = vadd.f32 0.0, %v358
  %360 = vdwg.mxu0
  %361 = vmatpush.msra.mxu0 %v80
  %362 = vmatpush.msra.mxu0 %v76
  %363 = vmatpush.msra.mxu0 %v72
  %364 = vmatpush.msra.mxu0 %v68
  %365 = vmatpush.msra.mxu0 %v64
  %366 = vmatpush.msra.mxu0 %v60
  %367 = vmatpush.msra.mxu0 %v56
  %368 = vmatpush.msra.mxu0 %v52
  %369 = vmatpush.msra.mxu0 %v48
  %370 = vmatpush.msra.mxu0 %v44
  %371 = vmatpush.msra.mxu0 %v40
  %372 = vmatpush.msra.mxu0 %v36
  %373 = vmatpush.msra.mxu0 %v32
  %374 = vmatpush.msra.mxu0 %v28
  %375 = vmatpush.msra.mxu0 %v24
  %376 = vmatpush.msra.mxu0 %v20
  %377 = vmatmul.f32.gmra.mxu0 %v336
  %v378 = vpop.f32.mrf.mxu0
  %v379 = vadd.f32 0.0, %v378
  %380 = vmatmul.f32.gmra.mxu0 %v337
  %v381 = vpop.f32.mrf.mxu0
  %v382 = vadd.f32 0.0, %v381
  %383 = vdwg.mxu0
  %384 = vmatpush.msra.mxu0 %v81
  %385 = vmatpush.msra.mxu0 %v77
  %386 = vmatpush.msra.mxu0 %v73
  %387 = vmatpush.msra.mxu0 %v69
  %388 = vmatpush.msra.mxu0 %v65
  %389 = vmatpush.msra.mxu0 %v61
  %390 = vmatpush.msra.mxu0 %v57
  %391 = vmatpush.msra.mxu0 %v53
  %392 = vmatpush.msra.mxu0 %v49
  %393 = vmatpush.msra.mxu0 %v45
  %394 = vmatpush.msra.mxu0 %v41
  %395 = vmatpush.msra.mxu0 %v37
  %396 = vmatpush.msra.mxu0 %v33
  %397 = vmatpush.msra.mxu0 %v29
  %398 = vmatpush.msra.mxu0 %v25
  %399 = vmatpush.msra.mxu0 %v21
  %400 = vmatmul.f32.gmra.mxu0 %v336
  %v401 = vpop.f32.mrf.mxu0
  %v402 = vadd.f32 0.0, %v401
  %403 = vmatmul.f32.gmra.mxu0 %v337
  %v404 = vpop.f32.mrf.mxu0
  %v405 = vadd.f32 0.0, %v404
  %406 = vdwg.mxu0
  %407 = vmatpush.msra.mxu0 %v82
  %408 = vmatpush.msra.mxu0 %v78
  %409 = vmatpush.msra.mxu0 %v74
  %410 = vmatpush.msra.mxu0 %v70
  %411 = vmatpush.msra.mxu0 %v66
  %412 = vmatpush.msra.mxu0 %v62
  %413 = vmatpush.msra.mxu0 %v58
  %414 = vmatpush.msra.mxu0 %v54
  %415 = vmatpush.msra.mxu0 %v50
  %416 = vmatpush.msra.mxu0 %v46
  %417 = vmatpush.msra.mxu0 %v42
  %418 = vmatpush.msra.mxu0 %v38
  %419 = vmatpush.msra.mxu0 %v34
  %420 = vmatpush.msra.mxu0 %v30
  %421 = vmatpush.msra.mxu0 %v26
  %422 = vmatpush.msra.mxu0 %v22
  %423 = vmatmul.f32.gmra.mxu0 %v336
  %v424 = vpop.f32.mrf.mxu0
  %v425 = vadd.f32 0.0, %v424
  %426 = vmatmul.f32.gmra.mxu0 %v337
  %v427 = vpop.f32.mrf.mxu0
  %v428 = vadd.f32 0.0, %v427
  %429 = vdwg.mxu0
  %v430 = vadd.f32 %v328, %v356
  %v431 = vadd.f32 %v329, %v379
  %v432 = vadd.f32 %v330, %v402
  %v433 = vadd.f32 %v331, %v425
  %v434 = vadd.f32 %v332, %v359
  %v435 = vadd.f32 %v333, %v382
  %v436 = vadd.f32 %v334, %v405
  %v437 = vadd.f32 %v335, %v428
  %v438 = vxor.u32 %v430, 2147483648
  %v439 = vxor.u32 %v434, 2147483648
  %v440 = vmul.f32 %v438, 1.442695
  %v441 = vpow.pop %v440
  %v442 = vmul.f32 %v439, 1.442695
  %v443 = vpow.pop %v442
  %v444 = vadd.f32 %v441, 1.0
  %v445 = vadd.f32 %v443, 1.0
  %v446 = vrcp.pop %v444
  %v447 = vmul.f32 %v444, %v446
  %v448 = vsub.f32 1.0, %v447
  %v449 = vmul.f32 %v446, %v448
  %v450 = vadd.f32 %v446, %v449
  %vm451 = vweird.f32 %v444
  %vm452 = vweird.f32 %v446
  %vm453 = vmor %vm451, %vm452
  %v454 = vsel %vm453, %v446, %v450
  %v455 = vand.u32 2147483647, %v444
  %vm456 = vcmp.eq.f32.partialorder %v455, 8.507059e+37
  %v457 = vand.u32 %v444, 2147483648
  %v458 = vor.u32 1.1754944e-38, %v457
  %v459 = vsel %vm456, %v458, %v454
  %v460 = vmul.f32 1.0, %v459
  %v461 = vrcp.pop %v445
  %v462 = vmul.f32 %v445, %v461
  %v463 = vsub.f32 1.0, %v462
  %v464 = vmul.f32 %v461, %v463
  %v465 = vadd.f32 %v461, %v464
  %vm466 = vweird.f32 %v445
  %vm467 = vweird.f32 %v461
  %vm468 = vmor %vm466, %vm467
  %v469 = vsel %vm468, %v461, %v465
  %v470 = vand.u32 2147483647, %v445
  %vm471 = vcmp.eq.f32.partialorder %v470, 8.507059e+37
  %v472 = vand.u32 %v445, 2147483648
  %v473 = vor.u32 1.1754944e-38, %v472
  %v474 = vsel %vm471, %v473, %v469
  %v475 = vmul.f32 1.0, %v474
  %v476 = vxor.u32 %v431, 2147483648
  %v477 = vxor.u32 %v435, 2147483648
  %v478 = vmul.f32 %v476, 1.442695
  %v479 = vpow.pop %v478
  %v480 = vmul.f32 %v477, 1.442695
  %v481 = vpow.pop %v480
  %v482 = vadd.f32 %v479, 1.0
  %v483 = vadd.f32 %v481, 1.0
  %v484 = vrcp.pop %v482
  %v485 = vmul.f32 %v482, %v484
  %v486 = vsub.f32 1.0, %v485
  %v487 = vmul.f32 %v484, %v486
  %v488 = vadd.f32 %v484, %v487
  %vm489 = vweird.f32 %v482
  %vm490 = vweird.f32 %v484
  %vm491 = vmor %vm489, %vm490
  %v492 = vsel %vm491, %v484, %v488
  %v493 = vand.u32 2147483647, %v482
  %vm494 = vcmp.eq.f32.partialorder %v493, 8.507059e+37
  %v495 = vand.u32 %v482, 2147483648
  %v496 = vor.u32 1.1754944e-38, %v495
  %v497 = vsel %vm494, %v496, %v492
  %v498 = vmul.f32 1.0, %v497
  %v499 = vrcp.pop %v483
  %v500 = vmul.f32 %v483, %v499
  %v501 = vsub.f32 1.0, %v500
  %v502 = vmul.f32 %v499, %v501
  %v503 = vadd.f32 %v499, %v502
  %vm504 = vweird.f32 %v483
  %vm505 = vweird.f32 %v499
  %vm506 = vmor %vm504, %vm505
  %v507 = vsel %vm506, %v499, %v503
  %v508 = vand.u32 2147483647, %v483
  %vm509 = vcmp.eq.f32.partialorder %v508, 8.507059e+37
  %v510 = vand.u32 %v483, 2147483648
  %v511 = vor.u32 1.1754944e-38, %v510
  %v512 = vsel %vm509, %v511, %v507
  %v513 = vmul.f32 1.0, %v512
  %v514 = vtanh.pop %v432
  %v515 = vtanh.pop %v436
  %v516 = vxor.u32 %v433, 2147483648
  %v517 = vxor.u32 %v437, 2147483648
  %v518 = vmul.f32 %v516, 1.442695
  %v519 = vpow.pop %v518
  %v520 = vmul.f32 %v517, 1.442695
  %v521 = vpow.pop %v520
  %v522 = vadd.f32 %v519, 1.0
  %v523 = vadd.f32 %v521, 1.0
  %v524 = vrcp.pop %v522
  %v525 = vmul.f32 %v522, %v524
  %v526 = vsub.f32 1.0, %v525
  %v527 = vmul.f32 %v524, %v526
  %v528 = vadd.f32 %v524, %v527
  %vm529 = vweird.f32 %v522
  %vm530 = vweird.f32 %v524
  %vm531 = vmor %vm529, %vm530
  %v532 = vsel %vm531, %v524, %v528
  %v533 = vand.u32 2147483647, %v522
  %vm534 = vcmp.eq.f32.partialorder %v533, 8.507059e+37
  %v535 = vand.u32 %v522, 2147483648
  %v536 = vor.u32 1.1754944e-38, %v535
  %v537 = vsel %vm534, %v536, %v532
  %v538 = vmul.f32 1.0, %v537
  %v539 = vrcp.pop %v523
  %v540 = vmul.f32 %v523, %v539
  %v541 = vsub.f32 1.0, %v540
  %v542 = vmul.f32 %v539, %v541
  %v543 = vadd.f32 %v539, %v542
  %vm544 = vweird.f32 %v523
  %vm545 = vweird.f32 %v539
  %vm546 = vmor %vm544, %vm545
  %v547 = vsel %vm546, %v539, %v543
  %v548 = vand.u32 2147483647, %v523
  %vm549 = vcmp.eq.f32.partialorder %v548, 8.507059e+37
  %v550 = vand.u32 %v523, 2147483648
  %v551 = vor.u32 1.1754944e-38, %v550
  %v552 = vsel %vm549, %v551, %v547
  %v553 = vmul.f32 1.0, %v552
  %v554 = vld [vmem:[#allocation3] sm:$0xff]
  %v555 = vld [vmem:[#allocation3 + $0x8] sm:$0xff]
  %v556 = vmul.f32 %v498, %v554
  %v557 = vmul.f32 %v513, %v555
  %v558 = vmul.f32 %v460, %v514
  %v559 = vmul.f32 %v475, %v515
  %v560 = vadd.f32 %v556, %v558
  %v561 = vadd.f32 %v557, %v559
  %v562 = vtanh.pop %v560
  %v563 = vtanh.pop %v561
  %v564 = vmul.f32 %v538, %v562
  %v565 = vmul.f32 %v553, %v563
  %566 = vst [vmem:[#allocation2] sm:$0xff] %v564
  %567 = vst [vmem:[#allocation2 + $0x8] sm:$0xff] %v565
  %568 = vst [vmem:[#allocation3] sm:$0xff] %v560
  %569 = vst [vmem:[#allocation3 + $0x8] sm:$0xff] %v561
  %s570 = scalar_lea.vmem %s2, 16
  %571 = vst [vmem:[%s570] sm:$0xff] %v564
  %572 = vst [vmem:[%s570 + $0x8] sm:$0xff] %v565
  %s573 = scalar_lea.vmem %s0, 128
  %v574 = vld [vmem:[%s573] sm:$0xff]
  %v575 = vld [vmem:[%s573 + $0x8] sm:$0xff]
  %v576 = vld [vmem:[%s573 + $0x10] sm:$0xff]
  %v577 = vld [vmem:[%s573 + $0x18] sm:$0xff]
  %v578 = vld [vmem:[%s573 + $0x20] sm:$0xff]
  %v579 = vld [vmem:[%s573 + $0x28] sm:$0xff]
  %v580 = vld [vmem:[%s573 + $0x30] sm:$0xff]
  %v581 = vld [vmem:[%s573 + $0x38] sm:$0xff]
  %v582 = vld [vmem:[#allocation2] sm:$0xff]
  %v583 = vld [vmem:[#allocation2 + $0x8] sm:$0xff]
  %584 = vmatpush.msra.mxu0 %v79
  %585 = vmatpush.msra.mxu0 %v75
  %586 = vmatpush.msra.mxu0 %v71
  %587 = vmatpush.msra.mxu0 %v67
  %588 = vmatpush.msra.mxu0 %v63
  %589 = vmatpush.msra.mxu0 %v59
  %590 = vmatpush.msra.mxu0 %v55
  %591 = vmatpush.msra.mxu0 %v51
  %592 = vmatpush.msra.mxu0 %v47
  %593 = vmatpush.msra.mxu0 %v43
  %594 = vmatpush.msra.mxu0 %v39
  %595 = vmatpush.msra.mxu0 %v35
  %596 = vmatpush.msra.mxu0 %v31
  %597 = vmatpush.msra.mxu0 %v27
  %598 = vmatpush.msra.mxu0 %v23
  %599 = vmatpush.msra.mxu0 %v19
  %600 = vmatmul.f32.gmra.mxu0 %v582
  %v601 = vpop.f32.mrf.mxu0
  %v602 = vadd.f32 0.0, %v601
  %603 = vmatmul.f32.gmra.mxu0 %v583
  %v604 = vpop.f32.mrf.mxu0
  %v605 = vadd.f32 0.0, %v604
  %606 = vdwg.mxu0
  %607 = vmatpush.msra.mxu0 %v80
  %608 = vmatpush.msra.mxu0 %v76
  %609 = vmatpush.msra.mxu0 %v72
  %610 = vmatpush.msra.mxu0 %v68
  %611 = vmatpush.msra.mxu0 %v64
  %612 = vmatpush.msra.mxu0 %v60
  %613 = vmatpush.msra.mxu0 %v56
  %614 = vmatpush.msra.mxu0 %v52
  %615 = vmatpush.msra.mxu0 %v48
  %616 = vmatpush.msra.mxu0 %v44
  %617 = vmatpush.msra.mxu0 %v40
  %618 = vmatpush.msra.mxu0 %v36
  %619 = vmatpush.msra.mxu0 %v32
  %620 = vmatpush.msra.mxu0 %v28
  %621 = vmatpush.msra.mxu0 %v24
  %622 = vmatpush.msra.mxu0 %v20
  %623 = vmatmul.f32.gmra.mxu0 %v582
  %v624 = vpop.f32.mrf.mxu0
  %v625 = vadd.f32 0.0, %v624
  %626 = vmatmul.f32.gmra.mxu0 %v583
  %v627 = vpop.f32.mrf.mxu0
  %v628 = vadd.f32 0.0, %v627
  %629 = vdwg.mxu0
  %630 = vmatpush.msra.mxu0 %v81
  %631 = vmatpush.msra.mxu0 %v77
  %632 = vmatpush.msra.mxu0 %v73
  %633 = vmatpush.msra.mxu0 %v69
  %634 = vmatpush.msra.mxu0 %v65
  %635 = vmatpush.msra.mxu0 %v61
  %636 = vmatpush.msra.mxu0 %v57
  %637 = vmatpush.msra.mxu0 %v53
  %638 = vmatpush.msra.mxu0 %v49
  %639 = vmatpush.msra.mxu0 %v45
  %640 = vmatpush.msra.mxu0 %v41
  %641 = vmatpush.msra.mxu0 %v37
  %642 = vmatpush.msra.mxu0 %v33
  %643 = vmatpush.msra.mxu0 %v29
  %644 = vmatpush.msra.mxu0 %v25
  %645 = vmatpush.msra.mxu0 %v21
  %646 = vmatmul.f32.gmra.mxu0 %v582
  %v647 = vpop.f32.mrf.mxu0
  %v648 = vadd.f32 0.0, %v647
  %649 = vmatmul.f32.gmra.mxu0 %v583
  %v650 = vpop.f32.mrf.mxu0
  %v651 = vadd.f32 0.0, %v650
  %652 = vdwg.mxu0
  %653 = vmatpush.msra.mxu0 %v82
  %654 = vmatpush.msra.mxu0 %v78
  %655 = vmatpush.msra.mxu0 %v74
  %656 = vmatpush.msra.mxu0 %v70
  %657 = vmatpush.msra.mxu0 %v66
  %658 = vmatpush.msra.mxu0 %v62
  %659 = vmatpush.msra.mxu0 %v58
  %660 = vmatpush.msra.mxu0 %v54
  %661 = vmatpush.msra.mxu0 %v50
  %662 = vmatpush.msra.mxu0 %v46
  %663 = vmatpush.msra.mxu0 %v42
  %664 = vmatpush.msra.mxu0 %v38
  %665 = vmatpush.msra.mxu0 %v34
  %666 = vmatpush.msra.mxu0 %v30
  %667 = vmatpush.msra.mxu0 %v26
  %668 = vmatpush.msra.mxu0 %v22
  %669 = vmatmul.f32.gmra.mxu0 %v582
  %v670 = vpop.f32.mrf.mxu0
  %v671 = vadd.f32 0.0, %v670
  %672 = vmatmul.f32.gmra.mxu0 %v583
  %v673 = vpop.f32.mrf.mxu0
  %v674 = vadd.f32 0.0, %v673
  %675 = vdwg.mxu0
  %v676 = vadd.f32 %v574, %v602
  %v677 = vadd.f32 %v575, %v625
  %v678 = vadd.f32 %v576, %v648
  %v679 = vadd.f32 %v577, %v671
  %v680 = vadd.f32 %v578, %v605
  %v681 = vadd.f32 %v579, %v628
  %v682 = vadd.f32 %v580, %v651
  %v683 = vadd.f32 %v581, %v674
  %v684 = vxor.u32 %v676, 2147483648
  %v685 = vxor.u32 %v680, 2147483648
  %v686 = vmul.f32 %v684, 1.442695
  %v687 = vpow.pop %v686
  %v688 = vmul.f32 %v685, 1.442695
  %v689 = vpow.pop %v688
  %v690 = vadd.f32 %v687, 1.0
  %v691 = vadd.f32 %v689, 1.0
  %v692 = vrcp.pop %v690
  %v693 = vmul.f32 %v690, %v692
  %v694 = vsub.f32 1.0, %v693
  %v695 = vmul.f32 %v692, %v694
  %v696 = vadd.f32 %v692, %v695
  %vm697 = vweird.f32 %v690
  %vm698 = vweird.f32 %v692
  %vm699 = vmor %vm697, %vm698
  %v700 = vsel %vm699, %v692, %v696
  %v701 = vand.u32 2147483647, %v690
  %vm702 = vcmp.eq.f32.partialorder %v701, 8.507059e+37
  %v703 = vand.u32 %v690, 2147483648
  %v704 = vor.u32 1.1754944e-38, %v703
  %v705 = vsel %vm702, %v704, %v700
  %v706 = vmul.f32 1.0, %v705
  %v707 = vrcp.pop %v691
  %v708 = vmul.f32 %v691, %v707
  %v709 = vsub.f32 1.0, %v708
  %v710 = vmul.f32 %v707, %v709
  %v711 = vadd.f32 %v707, %v710
  %vm712 = vweird.f32 %v691
  %vm713 = vweird.f32 %v707
  %vm714 = vmor %vm712, %vm713
  %v715 = vsel %vm714, %v707, %v711
  %v716 = vand.u32 2147483647, %v691
  %vm717 = vcmp.eq.f32.partialorder %v716, 8.507059e+37
  %v718 = vand.u32 %v691, 2147483648
  %v719 = vor.u32 1.1754944e-38, %v718
  %v720 = vsel %vm717, %v719, %v715
  %v721 = vmul.f32 1.0, %v720
  %v722 = vxor.u32 %v677, 2147483648
  %v723 = vxor.u32 %v681, 2147483648
  %v724 = vmul.f32 %v722, 1.442695
  %v725 = vpow.pop %v724
  %v726 = vmul.f32 %v723, 1.442695
  %v727 = vpow.pop %v726
  %v728 = vadd.f32 %v725, 1.0
  %v729 = vadd.f32 %v727, 1.0
  %v730 = vrcp.pop %v728
  %v731 = vmul.f32 %v728, %v730
  %v732 = vsub.f32 1.0, %v731
  %v733 = vmul.f32 %v730, %v732
  %v734 = vadd.f32 %v730, %v733
  %vm735 = vweird.f32 %v728
  %vm736 = vweird.f32 %v730
  %vm737 = vmor %vm735, %vm736
  %v738 = vsel %vm737, %v730, %v734
  %v739 = vand.u32 2147483647, %v728
  %vm740 = vcmp.eq.f32.partialorder %v739, 8.507059e+37
  %v741 = vand.u32 %v728, 2147483648
  %v742 = vor.u32 1.1754944e-38, %v741
  %v743 = vsel %vm740, %v742, %v738
  %v744 = vmul.f32 1.0, %v743
  %v745 = vrcp.pop %v729
  %v746 = vmul.f32 %v729, %v745
  %v747 = vsub.f32 1.0, %v746
  %v748 = vmul.f32 %v745, %v747
  %v749 = vadd.f32 %v745, %v748
  %vm750 = vweird.f32 %v729
  %vm751 = vweird.f32 %v745
  %vm752 = vmor %vm750, %vm751
  %v753 = vsel %vm752, %v745, %v749
  %v754 = vand.u32 2147483647, %v729
  %vm755 = vcmp.eq.f32.partialorder %v754, 8.507059e+37
  %v756 = vand.u32 %v729, 2147483648
  %v757 = vor.u32 1.1754944e-38, %v756
  %v758 = vsel %vm755, %v757, %v753
  %v759 = vmul.f32 1.0, %v758
  %v760 = vtanh.pop %v678
  %v761 = vtanh.pop %v682
  %v762 = vxor.u32 %v679, 2147483648
  %v763 = vxor.u32 %v683, 2147483648
  %v764 = vmul.f32 %v762, 1.442695
  %v765 = vpow.pop %v764
  %v766 = vmul.f32 %v763, 1.442695
  %v767 = vpow.pop %v766
  %v768 = vadd.f32 %v765, 1.0
  %v769 = vadd.f32 %v767, 1.0
  %v770 = vrcp.pop %v768
  %v771 = vmul.f32 %v768, %v770
  %v772 = vsub.f32 1.0, %v771
  %v773 = vmul.f32 %v770, %v772
  %v774 = vadd.f32 %v770, %v773
  %vm775 = vweird.f32 %v768
  %vm776 = vweird.f32 %v770
  %vm777 = vmor %vm775, %vm776
  %v778 = vsel %vm777, %v770, %v774
  %v779 = vand.u32 2147483647, %v768
  %vm780 = vcmp.eq.f32.partialorder %v779, 8.507059e+37
  %v781 = vand.u32 %v768, 2147483648
  %v782 = vor.u32 1.1754944e-38, %v781
  %v783 = vsel %vm780, %v782, %v778
  %v784 = vmul.f32 1.0, %v783
  %v785 = vrcp.pop %v769
  %v786 = vmul.f32 %v769, %v785
  %v787 = vsub.f32 1.0, %v786
  %v788 = vmul.f32 %v785, %v787
  %v789 = vadd.f32 %v785, %v788
  %vm790 = vweird.f32 %v769
  %vm791 = vweird.f32 %v785
  %vm792 = vmor %vm790, %vm791
  %v793 = vsel %vm792, %v785, %v789
  %v794 = vand.u32 2147483647, %v769
  %vm795 = vcmp.eq.f32.partialorder %v794, 8.507059e+37
  %v796 = vand.u32 %v769, 2147483648
  %v797 = vor.u32 1.1754944e-38, %v796
  %v798 = vsel %vm795, %v797, %v793
  %v799 = vmul.f32 1.0, %v798
  %v800 = vld [vmem:[#allocation3] sm:$0xff]
  %v801 = vld [vmem:[#allocation3 + $0x8] sm:$0xff]
  %v802 = vmul.f32 %v744, %v800
  %v803 = vmul.f32 %v759, %v801
  %v804 = vmul.f32 %v706, %v760
  %v805 = vmul.f32 %v721, %v761
  %v806 = vadd.f32 %v802, %v804
  %v807 = vadd.f32 %v803, %v805
  %v808 = vtanh.pop %v806
  %v809 = vtanh.pop %v807
  %v810 = vmul.f32 %v784, %v808
  %v811 = vmul.f32 %v799, %v809
  %812 = vst [vmem:[#allocation2] sm:$0xff] %v810
  %813 = vst [vmem:[#allocation2 + $0x8] sm:$0xff] %v811
  %814 = vst [vmem:[#allocation3] sm:$0xff] %v806
  %815 = vst [vmem:[#allocation3 + $0x8] sm:$0xff] %v807
  %s816 = scalar_lea.vmem %s2, 32
  %817 = vst [vmem:[%s816] sm:$0xff] %v810
  %818 = vst [vmem:[%s816 + $0x8] sm:$0xff] %v811
  %s819 = scalar_lea.vmem %s0, 192
  %v820 = vld [vmem:[%s819] sm:$0xff]
  %v821 = vld [vmem:[%s819 + $0x8] sm:$0xff]
  %v822 = vld [vmem:[%s819 + $0x10] sm:$0xff]
  %v823 = vld [vmem:[%s819 + $0x18] sm:$0xff]
  %v824 = vld [vmem:[%s819 + $0x20] sm:$0xff]
  %v825 = vld [vmem:[%s819 + $0x28] sm:$0xff]
  %v826 = vld [vmem:[%s819 + $0x30] sm:$0xff]
  %v827 = vld [vmem:[%s819 + $0x38] sm:$0xff]
  %v828 = vld [vmem:[#allocation2] sm:$0xff]
  %v829 = vld [vmem:[#allocation2 + $0x8] sm:$0xff]
  %830 = vmatpush.msra.mxu0 %v79
  %831 = vmatpush.msra.mxu0 %v75
  %832 = vmatpush.msra.mxu0 %v71
  %833 = vmatpush.msra.mxu0 %v67
  %834 = vmatpush.msra.mxu0 %v63
  %835 = vmatpush.msra.mxu0 %v59
  %836 = vmatpush.msra.mxu0 %v55
  %837 = vmatpush.msra.mxu0 %v51
  %838 = vmatpush.msra.mxu0 %v47
  %839 = vmatpush.msra.mxu0 %v43
  %840 = vmatpush.msra.mxu0 %v39
  %841 = vmatpush.msra.mxu0 %v35
  %842 = vmatpush.msra.mxu0 %v31
  %843 = vmatpush.msra.mxu0 %v27
  %844 = vmatpush.msra.mxu0 %v23
  %845 = vmatpush.msra.mxu0 %v19
  %846 = vmatmul.f32.gmra.mxu0 %v828
  %v847 = vpop.f32.mrf.mxu0
  %v848 = vadd.f32 0.0, %v847
  %849 = vmatmul.f32.gmra.mxu0 %v829
  %v850 = vpop.f32.mrf.mxu0
  %v851 = vadd.f32 0.0, %v850
  %852 = vdwg.mxu0
  %853 = vmatpush.msra.mxu0 %v80
  %854 = vmatpush.msra.mxu0 %v76
  %855 = vmatpush.msra.mxu0 %v72
  %856 = vmatpush.msra.mxu0 %v68
  %857 = vmatpush.msra.mxu0 %v64
  %858 = vmatpush.msra.mxu0 %v60
  %859 = vmatpush.msra.mxu0 %v56
  %860 = vmatpush.msra.mxu0 %v52
  %861 = vmatpush.msra.mxu0 %v48
  %862 = vmatpush.msra.mxu0 %v44
  %863 = vmatpush.msra.mxu0 %v40
  %864 = vmatpush.msra.mxu0 %v36
  %865 = vmatpush.msra.mxu0 %v32
  %866 = vmatpush.msra.mxu0 %v28
  %867 = vmatpush.msra.mxu0 %v24
  %868 = vmatpush.msra.mxu0 %v20
  %869 = vmatmul.f32.gmra.mxu0 %v828
  %v870 = vpop.f32.mrf.mxu0
  %v871 = vadd.f32 0.0, %v870
  %872 = vmatmul.f32.gmra.mxu0 %v829
  %v873 = vpop.f32.mrf.mxu0
  %v874 = vadd.f32 0.0, %v873
  %875 = vdwg.mxu0
  %876 = vmatpush.msra.mxu0 %v81
  %877 = vmatpush.msra.mxu0 %v77
  %878 = vmatpush.msra.mxu0 %v73
  %879 = vmatpush.msra.mxu0 %v69
  %880 = vmatpush.msra.mxu0 %v65
  %881 = vmatpush.msra.mxu0 %v61
  %882 = vmatpush.msra.mxu0 %v57
  %883 = vmatpush.msra.mxu0 %v53
  %884 = vmatpush.msra.mxu0 %v49
  %885 = vmatpush.msra.mxu0 %v45
  %886 = vmatpush.msra.mxu0 %v41
  %887 = vmatpush.msra.mxu0 %v37
  %888 = vmatpush.msra.mxu0 %v33
  %889 = vmatpush.msra.mxu0 %v29
  %890 = vmatpush.msra.mxu0 %v25
  %891 = vmatpush.msra.mxu0 %v21
  %892 = vmatmul.f32.gmra.mxu0 %v828
  %v893 = vpop.f32.mrf.mxu0
  %v894 = vadd.f32 0.0, %v893
  %895 = vmatmul.f32.gmra.mxu0 %v829
  %v896 = vpop.f32.mrf.mxu0
  %v897 = vadd.f32 0.0, %v896
  %898 = vdwg.mxu0
  %899 = vmatpush.msra.mxu0 %v82
  %900 = vmatpush.msra.mxu0 %v78
  %901 = vmatpush.msra.mxu0 %v74
  %902 = vmatpush.msra.mxu0 %v70
  %903 = vmatpush.msra.mxu0 %v66
  %904 = vmatpush.msra.mxu0 %v62
  %905 = vmatpush.msra.mxu0 %v58
  %906 = vmatpush.msra.mxu0 %v54
  %907 = vmatpush.msra.mxu0 %v50
  %908 = vmatpush.msra.mxu0 %v46
  %909 = vmatpush.msra.mxu0 %v42
  %910 = vmatpush.msra.mxu0 %v38
  %911 = vmatpush.msra.mxu0 %v34
  %912 = vmatpush.msra.mxu0 %v30
  %913 = vmatpush.msra.mxu0 %v26
  %914 = vmatpush.msra.mxu0 %v22
  %915 = vmatmul.f32.gmra.mxu0 %v828
  %v916 = vpop.f32.mrf.mxu0
  %v917 = vadd.f32 0.0, %v916
  %918 = vmatmul.f32.gmra.mxu0 %v829
  %v919 = vpop.f32.mrf.mxu0
  %v920 = vadd.f32 0.0, %v919
  %921 = vdwg.mxu0
  %v922 = vadd.f32 %v820, %v848
  %v923 = vadd.f32 %v821, %v871
  %v924 = vadd.f32 %v822, %v894
  %v925 = vadd.f32 %v823, %v917
  %v926 = vadd.f32 %v824, %v851
  %v927 = vadd.f32 %v825, %v874
  %v928 = vadd.f32 %v826, %v897
  %v929 = vadd.f32 %v827, %v920
  %v930 = vxor.u32 %v922, 2147483648
  %v931 = vxor.u32 %v926, 2147483648
  %v932 = vmul.f32 %v930, 1.442695
  %v933 = vpow.pop %v932
  %v934 = vmul.f32 %v931, 1.442695
  %v935 = vpow.pop %v934
  %v936 = vadd.f32 %v933, 1.0
  %v937 = vadd.f32 %v935, 1.0
  %v938 = vrcp.pop %v936
  %v939 = vmul.f32 %v936, %v938
  %v940 = vsub.f32 1.0, %v939
  %v941 = vmul.f32 %v938, %v940
  %v942 = vadd.f32 %v938, %v941
  %vm943 = vweird.f32 %v936
  %vm944 = vweird.f32 %v938
  %vm945 = vmor %vm943, %vm944
  %v946 = vsel %vm945, %v938, %v942
  %v947 = vand.u32 2147483647, %v936
  %vm948 = vcmp.eq.f32.partialorder %v947, 8.507059e+37
  %v949 = vand.u32 %v936, 2147483648
  %v950 = vor.u32 1.1754944e-38, %v949
  %v951 = vsel %vm948, %v950, %v946
  %v952 = vmul.f32 1.0, %v951
  %v953 = vrcp.pop %v937
  %v954 = vmul.f32 %v937, %v953
  %v955 = vsub.f32 1.0, %v954
  %v956 = vmul.f32 %v953, %v955
  %v957 = vadd.f32 %v953, %v956
  %vm958 = vweird.f32 %v937
  %vm959 = vweird.f32 %v953
  %vm960 = vmor %vm958, %vm959
  %v961 = vsel %vm960, %v953, %v957
  %v962 = vand.u32 2147483647, %v937
  %vm963 = vcmp.eq.f32.partialorder %v962, 8.507059e+37
  %v964 = vand.u32 %v937, 2147483648
  %v965 = vor.u32 1.1754944e-38, %v964
  %v966 = vsel %vm963, %v965, %v961
  %v967 = vmul.f32 1.0, %v966
  %v968 = vxor.u32 %v923, 2147483648
  %v969 = vxor.u32 %v927, 2147483648
  %v970 = vmul.f32 %v968, 1.442695
  %v971 = vpow.pop %v970
  %v972 = vmul.f32 %v969, 1.442695
  %v973 = vpow.pop %v972
  %v974 = vadd.f32 %v971, 1.0
  %v975 = vadd.f32 %v973, 1.0
  %v976 = vrcp.pop %v974
  %v977 = vmul.f32 %v974, %v976
  %v978 = vsub.f32 1.0, %v977
  %v979 = vmul.f32 %v976, %v978
  %v980 = vadd.f32 %v976, %v979
  %vm981 = vweird.f32 %v974
  %vm982 = vweird.f32 %v976
  %vm983 = vmor %vm981, %vm982
  %v984 = vsel %vm983, %v976, %v980
  %v985 = vand.u32 2147483647, %v974
  %vm986 = vcmp.eq.f32.partialorder %v985, 8.507059e+37
  %v987 = vand.u32 %v974, 2147483648
  %v988 = vor.u32 1.1754944e-38, %v987
  %v989 = vsel %vm986, %v988, %v984
  %v990 = vmul.f32 1.0, %v989
  %v991 = vrcp.pop %v975
  %v992 = vmul.f32 %v975, %v991
  %v993 = vsub.f32 1.0, %v992
  %v994 = vmul.f32 %v991, %v993
  %v995 = vadd.f32 %v991, %v994
  %vm996 = vweird.f32 %v975
  %vm997 = vweird.f32 %v991
  %vm998 = vmor %vm996, %vm997
  %v999 = vsel %vm998, %v991, %v995
  %v1000 = vand.u32 2147483647, %v975
  %vm1001 = vcmp.eq.f32.partialorder %v1000, 8.507059e+37
  %v1002 = vand.u32 %v975, 2147483648
  %v1003 = vor.u32 1.1754944e-38, %v1002
  %v1004 = vsel %vm1001, %v1003, %v999
  %v1005 = vmul.f32 1.0, %v1004
  %v1006 = vtanh.pop %v924
  %v1007 = vtanh.pop %v928
  %v1008 = vxor.u32 %v925, 2147483648
  %v1009 = vxor.u32 %v929, 2147483648
  %v1010 = vmul.f32 %v1008, 1.442695
  %v1011 = vpow.pop %v1010
  %v1012 = vmul.f32 %v1009, 1.442695
  %v1013 = vpow.pop %v1012
  %v1014 = vadd.f32 %v1011, 1.0
  %v1015 = vadd.f32 %v1013, 1.0
  %v1016 = vrcp.pop %v1014
  %v1017 = vmul.f32 %v1014, %v1016
  %v1018 = vsub.f32 1.0, %v1017
  %v1019 = vmul.f32 %v1016, %v1018
  %v1020 = vadd.f32 %v1016, %v1019
  %vm1021 = vweird.f32 %v1014
  %vm1022 = vweird.f32 %v1016
  %vm1023 = vmor %vm1021, %vm1022
  %v1024 = vsel %vm1023, %v1016, %v1020
  %v1025 = vand.u32 2147483647, %v1014
  %vm1026 = vcmp.eq.f32.partialorder %v1025, 8.507059e+37
  %v1027 = vand.u32 %v1014, 2147483648
  %v1028 = vor.u32 1.1754944e-38, %v1027
  %v1029 = vsel %vm1026, %v1028, %v1024
  %v1030 = vmul.f32 1.0, %v1029
  %v1031 = vrcp.pop %v1015
  %v1032 = vmul.f32 %v1015, %v1031
  %v1033 = vsub.f32 1.0, %v1032
  %v1034 = vmul.f32 %v1031, %v1033
  %v1035 = vadd.f32 %v1031, %v1034
  %vm1036 = vweird.f32 %v1015
  %vm1037 = vweird.f32 %v1031
  %vm1038 = vmor %vm1036, %vm1037
  %v1039 = vsel %vm1038, %v1031, %v1035
  %v1040 = vand.u32 2147483647, %v1015
  %vm1041 = vcmp.eq.f32.partialorder %v1040, 8.507059e+37
  %v1042 = vand.u32 %v1015, 2147483648
  %v1043 = vor.u32 1.1754944e-38, %v1042
  %v1044 = vsel %vm1041, %v1043, %v1039
  %v1045 = vmul.f32 1.0, %v1044
  %v1046 = vld [vmem:[#allocation3] sm:$0xff]
  %v1047 = vld [vmem:[#allocation3 + $0x8] sm:$0xff]
  %v1048 = vmul.f32 %v990, %v1046
  %v1049 = vmul.f32 %v1005, %v1047
  %v1050 = vmul.f32 %v952, %v1006
  %v1051 = vmul.f32 %v967, %v1007
  %v1052 = vadd.f32 %v1048, %v1050
  %v1053 = vadd.f32 %v1049, %v1051
  %v1054 = vtanh.pop %v1052
  %v1055 = vtanh.pop %v1053
  %v1056 = vmul.f32 %v1030, %v1054
  %v1057 = vmul.f32 %v1045, %v1055
  %1058 = vst [vmem:[#allocation2] sm:$0xff] %v1056
  %1059 = vst [vmem:[#allocation2 + $0x8] sm:$0xff] %v1057
  %1060 = vst [vmem:[#allocation3] sm:$0xff] %v1052
  %1061 = vst [vmem:[#allocation3 + $0x8] sm:$0xff] %v1053
  %s1062 = scalar_lea.vmem %s2, 48
  %1063 = vst [vmem:[%s1062] sm:$0xff] %v1056
  %1064 = vst [vmem:[%s1062 + $0x8] sm:$0xff] %v1057
  %s1065 = scalar_lea.vmem %s0, 256
  %v1066 = vld [vmem:[%s1065] sm:$0xff]
  %v1067 = vld [vmem:[%s1065 + $0x8] sm:$0xff]
  %v1068 = vld [vmem:[%s1065 + $0x10] sm:$0xff]
  %v1069 = vld [vmem:[%s1065 + $0x18] sm:$0xff]
  %v1070 = vld [vmem:[%s1065 + $0x20] sm:$0xff]
  %v1071 = vld [vmem:[%s1065 + $0x28] sm:$0xff]
  %v1072 = vld [vmem:[%s1065 + $0x30] sm:$0xff]
  %v1073 = vld [vmem:[%s1065 + $0x38] sm:$0xff]
  %v1074 = vld [vmem:[#allocation2] sm:$0xff]
  %v1075 = vld [vmem:[#allocation2 + $0x8] sm:$0xff]
  %1076 = vmatpush.msra.mxu0 %v79
  %1077 = vmatpush.msra.mxu0 %v75
  %1078 = vmatpush.msra.mxu0 %v71
  %1079 = vmatpush.msra.mxu0 %v67
  %1080 = vmatpush.msra.mxu0 %v63
  %1081 = vmatpush.msra.mxu0 %v59
  %1082 = vmatpush.msra.mxu0 %v55
  %1083 = vmatpush.msra.mxu0 %v51
  %1084 = vmatpush.msra.mxu0 %v47
  %1085 = vmatpush.msra.mxu0 %v43
  %1086 = vmatpush.msra.mxu0 %v39
  %1087 = vmatpush.msra.mxu0 %v35
  %1088 = vmatpush.msra.mxu0 %v31
  %1089 = vmatpush.msra.mxu0 %v27
  %1090 = vmatpush.msra.mxu0 %v23
  %1091 = vmatpush.msra.mxu0 %v19
  %1092 = vmatmul.f32.gmra.mxu0 %v1074
  %v1093 = vpop.f32.mrf.mxu0
  %v1094 = vadd.f32 0.0, %v1093
  %1095 = vmatmul.f32.gmra.mxu0 %v1075
  %v1096 = vpop.f32.mrf.mxu0
  %v1097 = vadd.f32 0.0, %v1096
  %1098 = vdwg.mxu0
  %1099 = vmatpush.msra.mxu0 %v80
  %1100 = vmatpush.msra.mxu0 %v76
  %1101 = vmatpush.msra.mxu0 %v72
  %1102 = vmatpush.msra.mxu0 %v68
  %1103 = vmatpush.msra.mxu0 %v64
  %1104 = vmatpush.msra.mxu0 %v60
  %1105 = vmatpush.msra.mxu0 %v56
  %1106 = vmatpush.msra.mxu0 %v52
  %1107 = vmatpush.msra.mxu0 %v48
  %1108 = vmatpush.msra.mxu0 %v44
  %1109 = vmatpush.msra.mxu0 %v40
  %1110 = vmatpush.msra.mxu0 %v36
  %1111 = vmatpush.msra.mxu0 %v32
  %1112 = vmatpush.msra.mxu0 %v28
  %1113 = vmatpush.msra.mxu0 %v24
  %1114 = vmatpush.msra.mxu0 %v20
  %1115 = vmatmul.f32.gmra.mxu0 %v1074
  %v1116 = vpop.f32.mrf.mxu0
  %v1117 = vadd.f32 0.0, %v1116
  %1118 = vmatmul.f32.gmra.mxu0 %v1075
  %v1119 = vpop.f32.mrf.mxu0
  %v1120 = vadd.f32 0.0, %v1119
  %1121 = vdwg.mxu0
  %1122 = vmatpush.msra.mxu0 %v81
  %1123 = vmatpush.msra.mxu0 %v77
  %1124 = vmatpush.msra.mxu0 %v73
  %1125 = vmatpush.msra.mxu0 %v69
  %1126 = vmatpush.msra.mxu0 %v65
  %1127 = vmatpush.msra.mxu0 %v61
  %1128 = vmatpush.msra.mxu0 %v57
  %1129 = vmatpush.msra.mxu0 %v53
  %1130 = vmatpush.msra.mxu0 %v49
  %1131 = vmatpush.msra.mxu0 %v45
  %1132 = vmatpush.msra.mxu0 %v41
  %1133 = vmatpush.msra.mxu0 %v37
  %1134 = vmatpush.msra.mxu0 %v33
  %1135 = vmatpush.msra.mxu0 %v29
  %1136 = vmatpush.msra.mxu0 %v25
  %1137 = vmatpush.msra.mxu0 %v21
  %1138 = vmatmul.f32.gmra.mxu0 %v1074
  %v1139 = vpop.f32.mrf.mxu0
  %v1140 = vadd.f32 0.0, %v1139
  %1141 = vmatmul.f32.gmra.mxu0 %v1075
  %v1142 = vpop.f32.mrf.mxu0
  %v1143 = vadd.f32 0.0, %v1142
  %1144 = vdwg.mxu0
  %1145 = vmatpush.msra.mxu0 %v82
  %1146 = vmatpush.msra.mxu0 %v78
  %1147 = vmatpush.msra.mxu0 %v74
  %1148 = vmatpush.msra.mxu0 %v70
  %1149 = vmatpush.msra.mxu0 %v66
  %1150 = vmatpush.msra.mxu0 %v62
  %1151 = vmatpush.msra.mxu0 %v58
  %1152 = vmatpush.msra.mxu0 %v54
  %1153 = vmatpush.msra.mxu0 %v50
  %1154 = vmatpush.msra.mxu0 %v46
  %1155 = vmatpush.msra.mxu0 %v42
  %1156 = vmatpush.msra.mxu0 %v38
  %1157 = vmatpush.msra.mxu0 %v34
  %1158 = vmatpush.msra.mxu0 %v30
  %1159 = vmatpush.msra.mxu0 %v26
  %1160 = vmatpush.msra.mxu0 %v22
  %1161 = vmatmul.f32.gmra.mxu0 %v1074
  %v1162 = vpop.f32.mrf.mxu0
  %v1163 = vadd.f32 0.0, %v1162
  %1164 = vmatmul.f32.gmra.mxu0 %v1075
  %v1165 = vpop.f32.mrf.mxu0
  %v1166 = vadd.f32 0.0, %v1165
  %1167 = vdwg.mxu0
  %v1168 = vadd.f32 %v1066, %v1094
  %v1169 = vadd.f32 %v1067, %v1117
  %v1170 = vadd.f32 %v1068, %v1140
  %v1171 = vadd.f32 %v1069, %v1163
  %v1172 = vadd.f32 %v1070, %v1097
  %v1173 = vadd.f32 %v1071, %v1120
  %v1174 = vadd.f32 %v1072, %v1143
  %v1175 = vadd.f32 %v1073, %v1166
  %v1176 = vxor.u32 %v1168, 2147483648
  %v1177 = vxor.u32 %v1172, 2147483648
  %v1178 = vmul.f32 %v1176, 1.442695
  %v1179 = vpow.pop %v1178
  %v1180 = vmul.f32 %v1177, 1.442695
  %v1181 = vpow.pop %v1180
  %v1182 = vadd.f32 %v1179, 1.0
  %v1183 = vadd.f32 %v1181, 1.0
  %v1184 = vrcp.pop %v1182
  %v1185 = vmul.f32 %v1182, %v1184
  %v1186 = vsub.f32 1.0, %v1185
  %v1187 = vmul.f32 %v1184, %v1186
  %v1188 = vadd.f32 %v1184, %v1187
  %vm1189 = vweird.f32 %v1182
  %vm1190 = vweird.f32 %v1184
  %vm1191 = vmor %vm1189, %vm1190
  %v1192 = vsel %vm1191, %v1184, %v1188
  %v1193 = vand.u32 2147483647, %v1182
  %vm1194 = vcmp.eq.f32.partialorder %v1193, 8.507059e+37
  %v1195 = vand.u32 %v1182, 2147483648
  %v1196 = vor.u32 1.1754944e-38, %v1195
  %v1197 = vsel %vm1194, %v1196, %v1192
  %v1198 = vmul.f32 1.0, %v1197
  %v1199 = vrcp.pop %v1183
  %v1200 = vmul.f32 %v1183, %v1199
  %v1201 = vsub.f32 1.0, %v1200
  %v1202 = vmul.f32 %v1199, %v1201
  %v1203 = vadd.f32 %v1199, %v1202
  %vm1204 = vweird.f32 %v1183
  %vm1205 = vweird.f32 %v1199
  %vm1206 = vmor %vm1204, %vm1205
  %v1207 = vsel %vm1206, %v1199, %v1203
  %v1208 = vand.u32 2147483647, %v1183
  %vm1209 = vcmp.eq.f32.partialorder %v1208, 8.507059e+37
  %v1210 = vand.u32 %v1183, 2147483648
  %v1211 = vor.u32 1.1754944e-38, %v1210
  %v1212 = vsel %vm1209, %v1211, %v1207
  %v1213 = vmul.f32 1.0, %v1212
  %v1214 = vxor.u32 %v1169, 2147483648
  %v1215 = vxor.u32 %v1173, 2147483648
  %v1216 = vmul.f32 %v1214, 1.442695
  %v1217 = vpow.pop %v1216
  %v1218 = vmul.f32 %v1215, 1.442695
  %v1219 = vpow.pop %v1218
  %v1220 = vadd.f32 %v1217, 1.0
  %v1221 = vadd.f32 %v1219, 1.0
  %v1222 = vrcp.pop %v1220
  %v1223 = vmul.f32 %v1220, %v1222
  %v1224 = vsub.f32 1.0, %v1223
  %v1225 = vmul.f32 %v1222, %v1224
  %v1226 = vadd.f32 %v1222, %v1225
  %vm1227 = vweird.f32 %v1220
  %vm1228 = vweird.f32 %v1222
  %vm1229 = vmor %vm1227, %vm1228
  %v1230 = vsel %vm1229, %v1222, %v1226
  %v1231 = vand.u32 2147483647, %v1220
  %vm1232 = vcmp.eq.f32.partialorder %v1231, 8.507059e+37
  %v1233 = vand.u32 %v1220, 2147483648
  %v1234 = vor.u32 1.1754944e-38, %v1233
  %v1235 = vsel %vm1232, %v1234, %v1230
  %v1236 = vmul.f32 1.0, %v1235
  %v1237 = vrcp.pop %v1221
  %v1238 = vmul.f32 %v1221, %v1237
  %v1239 = vsub.f32 1.0, %v1238
  %v1240 = vmul.f32 %v1237, %v1239
  %v1241 = vadd.f32 %v1237, %v1240
  %vm1242 = vweird.f32 %v1221
  %vm1243 = vweird.f32 %v1237
  %vm1244 = vmor %vm1242, %vm1243
  %v1245 = vsel %vm1244, %v1237, %v1241
  %v1246 = vand.u32 2147483647, %v1221
  %vm1247 = vcmp.eq.f32.partialorder %v1246, 8.507059e+37
  %v1248 = vand.u32 %v1221, 2147483648
  %v1249 = vor.u32 1.1754944e-38, %v1248
  %v1250 = vsel %vm1247, %v1249, %v1245
  %v1251 = vmul.f32 1.0, %v1250
  %v1252 = vtanh.pop %v1170
  %v1253 = vtanh.pop %v1174
  %v1254 = vxor.u32 %v1171, 2147483648
  %v1255 = vxor.u32 %v1175, 2147483648
  %v1256 = vmul.f32 %v1254, 1.442695
  %v1257 = vpow.pop %v1256
  %v1258 = vmul.f32 %v1255, 1.442695
  %v1259 = vpow.pop %v1258
  %v1260 = vadd.f32 %v1257, 1.0
  %v1261 = vadd.f32 %v1259, 1.0
  %v1262 = vrcp.pop %v1260
  %v1263 = vmul.f32 %v1260, %v1262
  %v1264 = vsub.f32 1.0, %v1263
  %v1265 = vmul.f32 %v1262, %v1264
  %v1266 = vadd.f32 %v1262, %v1265
  %vm1267 = vweird.f32 %v1260
  %vm1268 = vweird.f32 %v1262
  %vm1269 = vmor %vm1267, %vm1268
  %v1270 = vsel %vm1269, %v1262, %v1266
  %v1271 = vand.u32 2147483647, %v1260
  %vm1272 = vcmp.eq.f32.partialorder %v1271, 8.507059e+37
  %v1273 = vand.u32 %v1260, 2147483648
  %v1274 = vor.u32 1.1754944e-38, %v1273
  %v1275 = vsel %vm1272, %v1274, %v1270
  %v1276 = vmul.f32 1.0, %v1275
  %v1277 = vrcp.pop %v1261
  %v1278 = vmul.f32 %v1261, %v1277
  %v1279 = vsub.f32 1.0, %v1278
  %v1280 = vmul.f32 %v1277, %v1279
  %v1281 = vadd.f32 %v1277, %v1280
  %vm1282 = vweird.f32 %v1261
  %vm1283 = vweird.f32 %v1277
  %vm1284 = vmor %vm1282, %vm1283
  %v1285 = vsel %vm1284, %v1277, %v1281
  %v1286 = vand.u32 2147483647, %v1261
  %vm1287 = vcmp.eq.f32.partialorder %v1286, 8.507059e+37
  %v1288 = vand.u32 %v1261, 2147483648
  %v1289 = vor.u32 1.1754944e-38, %v1288
  %v1290 = vsel %vm1287, %v1289, %v1285
  %v1291 = vmul.f32 1.0, %v1290
  %v1292 = vld [vmem:[#allocation3] sm:$0xff]
  %v1293 = vld [vmem:[#allocation3 + $0x8] sm:$0xff]
  %v1294 = vmul.f32 %v1236, %v1292
  %v1295 = vmul.f32 %v1251, %v1293
  %v1296 = vmul.f32 %v1198, %v1252
  %v1297 = vmul.f32 %v1213, %v1253
  %v1298 = vadd.f32 %v1294, %v1296
  %v1299 = vadd.f32 %v1295, %v1297
  %v1300 = vtanh.pop %v1298
  %v1301 = vtanh.pop %v1299
  %v1302 = vmul.f32 %v1276, %v1300
  %v1303 = vmul.f32 %v1291, %v1301
  %1304 = vst [vmem:[#allocation2] sm:$0xff] %v1302
  %1305 = vst [vmem:[#allocation2 + $0x8] sm:$0xff] %v1303
  %1306 = vst [vmem:[#allocation3] sm:$0xff] %v1298
  %1307 = vst [vmem:[#allocation3 + $0x8] sm:$0xff] %v1299
  %s1308 = scalar_lea.vmem %s2, 64
  %1309 = vst [vmem:[%s1308] sm:$0xff] %v1302
  %1310 = vst [vmem:[%s1308 + $0x8] sm:$0xff] %v1303
  %s1311 = scalar_lea.vmem %s0, 320
  %v1312 = vld [vmem:[%s1311] sm:$0xff]
  %v1313 = vld [vmem:[%s1311 + $0x8] sm:$0xff]
  %v1314 = vld [vmem:[%s1311 + $0x10] sm:$0xff]
  %v1315 = vld [vmem:[%s1311 + $0x18] sm:$0xff]
  %v1316 = vld [vmem:[%s1311 + $0x20] sm:$0xff]
  %v1317 = vld [vmem:[%s1311 + $0x28] sm:$0xff]
  %v1318 = vld [vmem:[%s1311 + $0x30] sm:$0xff]
  %v1319 = vld [vmem:[%s1311 + $0x38] sm:$0xff]
  %v1320 = vld [vmem:[#allocation2] sm:$0xff]
  %v1321 = vld [vmem:[#allocation2 + $0x8] sm:$0xff]
  %1322 = vmatpush.msra.mxu0 %v79
  %1323 = vmatpush.msra.mxu0 %v75
  %1324 = vmatpush.msra.mxu0 %v71
  %1325 = vmatpush.msra.mxu0 %v67
  %1326 = vmatpush.msra.mxu0 %v63
  %1327 = vmatpush.msra.mxu0 %v59
  %1328 = vmatpush.msra.mxu0 %v55
  %1329 = vmatpush.msra.mxu0 %v51
  %1330 = vmatpush.msra.mxu0 %v47
  %1331 = vmatpush.msra.mxu0 %v43
  %1332 = vmatpush.msra.mxu0 %v39
  %1333 = vmatpush.msra.mxu0 %v35
  %1334 = vmatpush.msra.mxu0 %v31
  %1335 = vmatpush.msra.mxu0 %v27
  %1336 = vmatpush.msra.mxu0 %v23
  %1337 = vmatpush.msra.mxu0 %v19
  %1338 = vmatmul.f32.gmra.mxu0 %v1320
  %v1339 = vpop.f32.mrf.mxu0
  %v1340 = vadd.f32 0.0, %v1339
  %1341 = vmatmul.f32.gmra.mxu0 %v1321
  %v1342 = vpop.f32.mrf.mxu0
  %v1343 = vadd.f32 0.0, %v1342
  %1344 = vdwg.mxu0
  %1345 = vmatpush.msra.mxu0 %v80
  %1346 = vmatpush.msra.mxu0 %v76
  %1347 = vmatpush.msra.mxu0 %v72
  %1348 = vmatpush.msra.mxu0 %v68
  %1349 = vmatpush.msra.mxu0 %v64
  %1350 = vmatpush.msra.mxu0 %v60
  %1351 = vmatpush.msra.mxu0 %v56
  %1352 = vmatpush.msra.mxu0 %v52
  %1353 = vmatpush.msra.mxu0 %v48
  %1354 = vmatpush.msra.mxu0 %v44
  %1355 = vmatpush.msra.mxu0 %v40
  %1356 = vmatpush.msra.mxu0 %v36
  %1357 = vmatpush.msra.mxu0 %v32
  %1358 = vmatpush.msra.mxu0 %v28
  %1359 = vmatpush.msra.mxu0 %v24
  %1360 = vmatpush.msra.mxu0 %v20
  %1361 = vmatmul.f32.gmra.mxu0 %v1320
  %v1362 = vpop.f32.mrf.mxu0
  %v1363 = vadd.f32 0.0, %v1362
  %1364 = vmatmul.f32.gmra.mxu0 %v1321
  %v1365 = vpop.f32.mrf.mxu0
  %v1366 = vadd.f32 0.0, %v1365
  %1367 = vdwg.mxu0
  %1368 = vmatpush.msra.mxu0 %v81
  %1369 = vmatpush.msra.mxu0 %v77
  %1370 = vmatpush.msra.mxu0 %v73
  %1371 = vmatpush.msra.mxu0 %v69
  %1372 = vmatpush.msra.mxu0 %v65
  %1373 = vmatpush.msra.mxu0 %v61
  %1374 = vmatpush.msra.mxu0 %v57
  %1375 = vmatpush.msra.mxu0 %v53
  %1376 = vmatpush.msra.mxu0 %v49
  %1377 = vmatpush.msra.mxu0 %v45
  %1378 = vmatpush.msra.mxu0 %v41
  %1379 = vmatpush.msra.mxu0 %v37
  %1380 = vmatpush.msra.mxu0 %v33
  %1381 = vmatpush.msra.mxu0 %v29
  %1382 = vmatpush.msra.mxu0 %v25
  %1383 = vmatpush.msra.mxu0 %v21
  %1384 = vmatmul.f32.gmra.mxu0 %v1320
  %v1385 = vpop.f32.mrf.mxu0
  %v1386 = vadd.f32 0.0, %v1385
  %1387 = vmatmul.f32.gmra.mxu0 %v1321
  %v1388 = vpop.f32.mrf.mxu0
  %v1389 = vadd.f32 0.0, %v1388
  %1390 = vdwg.mxu0
  %1391 = vmatpush.msra.mxu0 %v82
  %1392 = vmatpush.msra.mxu0 %v78
  %1393 = vmatpush.msra.mxu0 %v74
  %1394 = vmatpush.msra.mxu0 %v70
  %1395 = vmatpush.msra.mxu0 %v66
  %1396 = vmatpush.msra.mxu0 %v62
  %1397 = vmatpush.msra.mxu0 %v58
  %1398 = vmatpush.msra.mxu0 %v54
  %1399 = vmatpush.msra.mxu0 %v50
  %1400 = vmatpush.msra.mxu0 %v46
  %1401 = vmatpush.msra.mxu0 %v42
  %1402 = vmatpush.msra.mxu0 %v38
  %1403 = vmatpush.msra.mxu0 %v34
  %1404 = vmatpush.msra.mxu0 %v30
  %1405 = vmatpush.msra.mxu0 %v26
  %1406 = vmatpush.msra.mxu0 %v22
  %1407 = vmatmul.f32.gmra.mxu0 %v1320
  %v1408 = vpop.f32.mrf.mxu0
  %v1409 = vadd.f32 0.0, %v1408
  %1410 = vmatmul.f32.gmra.mxu0 %v1321
  %v1411 = vpop.f32.mrf.mxu0
  %v1412 = vadd.f32 0.0, %v1411
  %1413 = vdwg.mxu0
  %v1414 = vadd.f32 %v1312, %v1340
  %v1415 = vadd.f32 %v1313, %v1363
  %v1416 = vadd.f32 %v1314, %v1386
  %v1417 = vadd.f32 %v1315, %v1409
  %v1418 = vadd.f32 %v1316, %v1343
  %v1419 = vadd.f32 %v1317, %v1366
  %v1420 = vadd.f32 %v1318, %v1389
  %v1421 = vadd.f32 %v1319, %v1412
  %v1422 = vxor.u32 %v1414, 2147483648
  %v1423 = vxor.u32 %v1418, 2147483648
  %v1424 = vmul.f32 %v1422, 1.442695
  %v1425 = vpow.pop %v1424
  %v1426 = vmul.f32 %v1423, 1.442695
  %v1427 = vpow.pop %v1426
  %v1428 = vadd.f32 %v1425, 1.0
  %v1429 = vadd.f32 %v1427, 1.0
  %v1430 = vrcp.pop %v1428
  %v1431 = vmul.f32 %v1428, %v1430
  %v1432 = vsub.f32 1.0, %v1431
  %v1433 = vmul.f32 %v1430, %v1432
  %v1434 = vadd.f32 %v1430, %v1433
  %vm1435 = vweird.f32 %v1428
  %vm1436 = vweird.f32 %v1430
  %vm1437 = vmor %vm1435, %vm1436
  %v1438 = vsel %vm1437, %v1430, %v1434
  %v1439 = vand.u32 2147483647, %v1428
  %vm1440 = vcmp.eq.f32.partialorder %v1439, 8.507059e+37
  %v1441 = vand.u32 %v1428, 2147483648
  %v1442 = vor.u32 1.1754944e-38, %v1441
  %v1443 = vsel %vm1440, %v1442, %v1438
  %v1444 = vmul.f32 1.0, %v1443
  %v1445 = vrcp.pop %v1429
  %v1446 = vmul.f32 %v1429, %v1445
  %v1447 = vsub.f32 1.0, %v1446
  %v1448 = vmul.f32 %v1445, %v1447
  %v1449 = vadd.f32 %v1445, %v1448
  %vm1450 = vweird.f32 %v1429
  %vm1451 = vweird.f32 %v1445
  %vm1452 = vmor %vm1450, %vm1451
  %v1453 = vsel %vm1452, %v1445, %v1449
  %v1454 = vand.u32 2147483647, %v1429
  %vm1455 = vcmp.eq.f32.partialorder %v1454, 8.507059e+37
  %v1456 = vand.u32 %v1429, 2147483648
  %v1457 = vor.u32 1.1754944e-38, %v1456
  %v1458 = vsel %vm1455, %v1457, %v1453
  %v1459 = vmul.f32 1.0, %v1458
  %v1460 = vxor.u32 %v1415, 2147483648
  %v1461 = vxor.u32 %v1419, 2147483648
  %v1462 = vmul.f32 %v1460, 1.442695
  %v1463 = vpow.pop %v1462
  %v1464 = vmul.f32 %v1461, 1.442695
  %v1465 = vpow.pop %v1464
  %v1466 = vadd.f32 %v1463, 1.0
  %v1467 = vadd.f32 %v1465, 1.0
  %v1468 = vrcp.pop %v1466
  %v1469 = vmul.f32 %v1466, %v1468
  %v1470 = vsub.f32 1.0, %v1469
  %v1471 = vmul.f32 %v1468, %v1470
  %v1472 = vadd.f32 %v1468, %v1471
  %vm1473 = vweird.f32 %v1466
  %vm1474 = vweird.f32 %v1468
  %vm1475 = vmor %vm1473, %vm1474
  %v1476 = vsel %vm1475, %v1468, %v1472
  %v1477 = vand.u32 2147483647, %v1466
  %vm1478 = vcmp.eq.f32.partialorder %v1477, 8.507059e+37
  %v1479 = vand.u32 %v1466, 2147483648
  %v1480 = vor.u32 1.1754944e-38, %v1479
  %v1481 = vsel %vm1478, %v1480, %v1476
  %v1482 = vmul.f32 1.0, %v1481
  %v1483 = vrcp.pop %v1467
  %v1484 = vmul.f32 %v1467, %v1483
  %v1485 = vsub.f32 1.0, %v1484
  %v1486 = vmul.f32 %v1483, %v1485
  %v1487 = vadd.f32 %v1483, %v1486
  %vm1488 = vweird.f32 %v1467
  %vm1489 = vweird.f32 %v1483
  %vm1490 = vmor %vm1488, %vm1489
  %v1491 = vsel %vm1490, %v1483, %v1487
  %v1492 = vand.u32 2147483647, %v1467
  %vm1493 = vcmp.eq.f32.partialorder %v1492, 8.507059e+37
  %v1494 = vand.u32 %v1467, 2147483648
  %v1495 = vor.u32 1.1754944e-38, %v1494
  %v1496 = vsel %vm1493, %v1495, %v1491
  %v1497 = vmul.f32 1.0, %v1496
  %v1498 = vtanh.pop %v1416
  %v1499 = vtanh.pop %v1420
  %v1500 = vxor.u32 %v1417, 2147483648
  %v1501 = vxor.u32 %v1421, 2147483648
  %v1502 = vmul.f32 %v1500, 1.442695
  %v1503 = vpow.pop %v1502
  %v1504 = vmul.f32 %v1501, 1.442695
  %v1505 = vpow.pop %v1504
  %v1506 = vadd.f32 %v1503, 1.0
  %v1507 = vadd.f32 %v1505, 1.0
  %v1508 = vrcp.pop %v1506
  %v1509 = vmul.f32 %v1506, %v1508
  %v1510 = vsub.f32 1.0, %v1509
  %v1511 = vmul.f32 %v1508, %v1510
  %v1512 = vadd.f32 %v1508, %v1511
  %vm1513 = vweird.f32 %v1506
  %vm1514 = vweird.f32 %v1508
  %vm1515 = vmor %vm1513, %vm1514
  %v1516 = vsel %vm1515, %v1508, %v1512
  %v1517 = vand.u32 2147483647, %v1506
  %vm1518 = vcmp.eq.f32.partialorder %v1517, 8.507059e+37
  %v1519 = vand.u32 %v1506, 2147483648
  %v1520 = vor.u32 1.1754944e-38, %v1519
  %v1521 = vsel %vm1518, %v1520, %v1516
  %v1522 = vmul.f32 1.0, %v1521
  %v1523 = vrcp.pop %v1507
  %v1524 = vmul.f32 %v1507, %v1523
  %v1525 = vsub.f32 1.0, %v1524
  %v1526 = vmul.f32 %v1523, %v1525
  %v1527 = vadd.f32 %v1523, %v1526
  %vm1528 = vweird.f32 %v1507
  %vm1529 = vweird.f32 %v1523
  %vm1530 = vmor %vm1528, %vm1529
  %v1531 = vsel %vm1530, %v1523, %v1527
  %v1532 = vand.u32 2147483647, %v1507
  %vm1533 = vcmp.eq.f32.partialorder %v1532, 8.507059e+37
  %v1534 = vand.u32 %v1507, 2147483648
  %v1535 = vor.u32 1.1754944e-38, %v1534
  %v1536 = vsel %vm1533, %v1535, %v1531
  %v1537 = vmul.f32 1.0, %v1536
  %v1538 = vld [vmem:[#allocation3] sm:$0xff]
  %v1539 = vld [vmem:[#allocation3 + $0x8] sm:$0xff]
  %v1540 = vmul.f32 %v1482, %v1538
  %v1541 = vmul.f32 %v1497, %v1539
  %v1542 = vmul.f32 %v1444, %v1498
  %v1543 = vmul.f32 %v1459, %v1499
  %v1544 = vadd.f32 %v1540, %v1542
  %v1545 = vadd.f32 %v1541, %v1543
  %v1546 = vtanh.pop %v1544
  %v1547 = vtanh.pop %v1545
  %v1548 = vmul.f32 %v1522, %v1546
  %v1549 = vmul.f32 %v1537, %v1547
  %1550 = vst [vmem:[#allocation2] sm:$0xff] %v1548
  %1551 = vst [vmem:[#allocation2 + $0x8] sm:$0xff] %v1549
  %1552 = vst [vmem:[#allocation3] sm:$0xff] %v1544
  %1553 = vst [vmem:[#allocation3 + $0x8] sm:$0xff] %v1545
  %s1554 = scalar_lea.vmem %s2, 80
  %1555 = vst [vmem:[%s1554] sm:$0xff] %v1548
  %1556 = vst [vmem:[%s1554 + $0x8] sm:$0xff] %v1549
  %s1557 = scalar_lea.vmem %s0, 384
  %v1558 = vld [vmem:[%s1557] sm:$0xff]
  %v1559 = vld [vmem:[%s1557 + $0x8] sm:$0xff]
  %v1560 = vld [vmem:[%s1557 + $0x10] sm:$0xff]
  %v1561 = vld [vmem:[%s1557 + $0x18] sm:$0xff]
  %v1562 = vld [vmem:[%s1557 + $0x20] sm:$0xff]
  %v1563 = vld [vmem:[%s1557 + $0x28] sm:$0xff]
  %v1564 = vld [vmem:[%s1557 + $0x30] sm:$0xff]
  %v1565 = vld [vmem:[%s1557 + $0x38] sm:$0xff]
  %v1566 = vld [vmem:[#allocation2] sm:$0xff]
  %v1567 = vld [vmem:[#allocation2 + $0x8] sm:$0xff]
  %1568 = vmatpush.msra.mxu0 %v79
  %1569 = vmatpush.msra.mxu0 %v75
  %1570 = vmatpush.msra.mxu0 %v71
  %1571 = vmatpush.msra.mxu0 %v67
  %1572 = vmatpush.msra.mxu0 %v63
  %1573 = vmatpush.msra.mxu0 %v59
  %1574 = vmatpush.msra.mxu0 %v55
  %1575 = vmatpush.msra.mxu0 %v51
  %1576 = vmatpush.msra.mxu0 %v47
  %1577 = vmatpush.msra.mxu0 %v43
  %1578 = vmatpush.msra.mxu0 %v39
  %1579 = vmatpush.msra.mxu0 %v35
  %1580 = vmatpush.msra.mxu0 %v31
  %1581 = vmatpush.msra.mxu0 %v27
  %1582 = vmatpush.msra.mxu0 %v23
  %1583 = vmatpush.msra.mxu0 %v19
  %1584 = vmatmul.f32.gmra.mxu0 %v1566
  %v1585 = vpop.f32.mrf.mxu0
  %v1586 = vadd.f32 0.0, %v1585
  %1587 = vmatmul.f32.gmra.mxu0 %v1567
  %v1588 = vpop.f32.mrf.mxu0
  %v1589 = vadd.f32 0.0, %v1588
  %1590 = vdwg.mxu0
  %1591 = vmatpush.msra.mxu0 %v80
  %1592 = vmatpush.msra.mxu0 %v76
  %1593 = vmatpush.msra.mxu0 %v72
  %1594 = vmatpush.msra.mxu0 %v68
  %1595 = vmatpush.msra.mxu0 %v64
  %1596 = vmatpush.msra.mxu0 %v60
  %1597 = vmatpush.msra.mxu0 %v56
  %1598 = vmatpush.msra.mxu0 %v52
  %1599 = vmatpush.msra.mxu0 %v48
  %1600 = vmatpush.msra.mxu0 %v44
  %1601 = vmatpush.msra.mxu0 %v40
  %1602 = vmatpush.msra.mxu0 %v36
  %1603 = vmatpush.msra.mxu0 %v32
  %1604 = vmatpush.msra.mxu0 %v28
  %1605 = vmatpush.msra.mxu0 %v24
  %1606 = vmatpush.msra.mxu0 %v20
  %1607 = vmatmul.f32.gmra.mxu0 %v1566
  %v1608 = vpop.f32.mrf.mxu0
  %v1609 = vadd.f32 0.0, %v1608
  %1610 = vmatmul.f32.gmra.mxu0 %v1567
  %v1611 = vpop.f32.mrf.mxu0
  %v1612 = vadd.f32 0.0, %v1611
  %1613 = vdwg.mxu0
  %1614 = vmatpush.msra.mxu0 %v81
  %1615 = vmatpush.msra.mxu0 %v77
  %1616 = vmatpush.msra.mxu0 %v73
  %1617 = vmatpush.msra.mxu0 %v69
  %1618 = vmatpush.msra.mxu0 %v65
  %1619 = vmatpush.msra.mxu0 %v61
  %1620 = vmatpush.msra.mxu0 %v57
  %1621 = vmatpush.msra.mxu0 %v53
  %1622 = vmatpush.msra.mxu0 %v49
  %1623 = vmatpush.msra.mxu0 %v45
  %1624 = vmatpush.msra.mxu0 %v41
  %1625 = vmatpush.msra.mxu0 %v37
  %1626 = vmatpush.msra.mxu0 %v33
  %1627 = vmatpush.msra.mxu0 %v29
  %1628 = vmatpush.msra.mxu0 %v25
  %1629 = vmatpush.msra.mxu0 %v21
  %1630 = vmatmul.f32.gmra.mxu0 %v1566
  %v1631 = vpop.f32.mrf.mxu0
  %v1632 = vadd.f32 0.0, %v1631
  %1633 = vmatmul.f32.gmra.mxu0 %v1567
  %v1634 = vpop.f32.mrf.mxu0
  %v1635 = vadd.f32 0.0, %v1634
  %1636 = vdwg.mxu0
  %1637 = vmatpush.msra.mxu0 %v82
  %1638 = vmatpush.msra.mxu0 %v78
  %1639 = vmatpush.msra.mxu0 %v74
  %1640 = vmatpush.msra.mxu0 %v70
  %1641 = vmatpush.msra.mxu0 %v66
  %1642 = vmatpush.msra.mxu0 %v62
  %1643 = vmatpush.msra.mxu0 %v58
  %1644 = vmatpush.msra.mxu0 %v54
  %1645 = vmatpush.msra.mxu0 %v50
  %1646 = vmatpush.msra.mxu0 %v46
  %1647 = vmatpush.msra.mxu0 %v42
  %1648 = vmatpush.msra.mxu0 %v38
  %1649 = vmatpush.msra.mxu0 %v34
  %1650 = vmatpush.msra.mxu0 %v30
  %1651 = vmatpush.msra.mxu0 %v26
  %1652 = vmatpush.msra.mxu0 %v22
  %1653 = vmatmul.f32.gmra.mxu0 %v1566
  %v1654 = vpop.f32.mrf.mxu0
  %v1655 = vadd.f32 0.0, %v1654
  %1656 = vmatmul.f32.gmra.mxu0 %v1567
  %v1657 = vpop.f32.mrf.mxu0
  %v1658 = vadd.f32 0.0, %v1657
  %1659 = vdwg.mxu0
  %v1660 = vadd.f32 %v1558, %v1586
  %v1661 = vadd.f32 %v1559, %v1609
  %v1662 = vadd.f32 %v1560, %v1632
  %v1663 = vadd.f32 %v1561, %v1655
  %v1664 = vadd.f32 %v1562, %v1589
  %v1665 = vadd.f32 %v1563, %v1612
  %v1666 = vadd.f32 %v1564, %v1635
  %v1667 = vadd.f32 %v1565, %v1658
  %v1668 = vxor.u32 %v1660, 2147483648
  %v1669 = vxor.u32 %v1664, 2147483648
  %v1670 = vmul.f32 %v1668, 1.442695
  %v1671 = vpow.pop %v1670
  %v1672 = vmul.f32 %v1669, 1.442695
  %v1673 = vpow.pop %v1672
  %v1674 = vadd.f32 %v1671, 1.0
  %v1675 = vadd.f32 %v1673, 1.0
  %v1676 = vrcp.pop %v1674
  %v1677 = vmul.f32 %v1674, %v1676
  %v1678 = vsub.f32 1.0, %v1677
  %v1679 = vmul.f32 %v1676, %v1678
  %v1680 = vadd.f32 %v1676, %v1679
  %vm1681 = vweird.f32 %v1674
  %vm1682 = vweird.f32 %v1676
  %vm1683 = vmor %vm1681, %vm1682
  %v1684 = vsel %vm1683, %v1676, %v1680
  %v1685 = vand.u32 2147483647, %v1674
  %vm1686 = vcmp.eq.f32.partialorder %v1685, 8.507059e+37
  %v1687 = vand.u32 %v1674, 2147483648
  %v1688 = vor.u32 1.1754944e-38, %v1687
  %v1689 = vsel %vm1686, %v1688, %v1684
  %v1690 = vmul.f32 1.0, %v1689
  %v1691 = vrcp.pop %v1675
  %v1692 = vmul.f32 %v1675, %v1691
  %v1693 = vsub.f32 1.0, %v1692
  %v1694 = vmul.f32 %v1691, %v1693
  %v1695 = vadd.f32 %v1691, %v1694
  %vm1696 = vweird.f32 %v1675
  %vm1697 = vweird.f32 %v1691
  %vm1698 = vmor %vm1696, %vm1697
  %v1699 = vsel %vm1698, %v1691, %v1695
  %v1700 = vand.u32 2147483647, %v1675
  %vm1701 = vcmp.eq.f32.partialorder %v1700, 8.507059e+37
  %v1702 = vand.u32 %v1675, 2147483648
  %v1703 = vor.u32 1.1754944e-38, %v1702
  %v1704 = vsel %vm1701, %v1703, %v1699
  %v1705 = vmul.f32 1.0, %v1704
  %v1706 = vxor.u32 %v1661, 2147483648
  %v1707 = vxor.u32 %v1665, 2147483648
  %v1708 = vmul.f32 %v1706, 1.442695
  %v1709 = vpow.pop %v1708
  %v1710 = vmul.f32 %v1707, 1.442695
  %v1711 = vpow.pop %v1710
  %v1712 = vadd.f32 %v1709, 1.0
  %v1713 = vadd.f32 %v1711, 1.0
  %v1714 = vrcp.pop %v1712
  %v1715 = vmul.f32 %v1712, %v1714
  %v1716 = vsub.f32 1.0, %v1715
  %v1717 = vmul.f32 %v1714, %v1716
  %v1718 = vadd.f32 %v1714, %v1717
  %vm1719 = vweird.f32 %v1712
  %vm1720 = vweird.f32 %v1714
  %vm1721 = vmor %vm1719, %vm1720
  %v1722 = vsel %vm1721, %v1714, %v1718
  %v1723 = vand.u32 2147483647, %v1712
  %vm1724 = vcmp.eq.f32.partialorder %v1723, 8.507059e+37
  %v1725 = vand.u32 %v1712, 2147483648
  %v1726 = vor.u32 1.1754944e-38, %v1725
  %v1727 = vsel %vm1724, %v1726, %v1722
  %v1728 = vmul.f32 1.0, %v1727
  %v1729 = vrcp.pop %v1713
  %v1730 = vmul.f32 %v1713, %v1729
  %v1731 = vsub.f32 1.0, %v1730
  %v1732 = vmul.f32 %v1729, %v1731
  %v1733 = vadd.f32 %v1729, %v1732
  %vm1734 = vweird.f32 %v1713
  %vm1735 = vweird.f32 %v1729
  %vm1736 = vmor %vm1734, %vm1735
  %v1737 = vsel %vm1736, %v1729, %v1733
  %v1738 = vand.u32 2147483647, %v1713
  %vm1739 = vcmp.eq.f32.partialorder %v1738, 8.507059e+37
  %v1740 = vand.u32 %v1713, 2147483648
  %v1741 = vor.u32 1.1754944e-38, %v1740
  %v1742 = vsel %vm1739, %v1741, %v1737
  %v1743 = vmul.f32 1.0, %v1742
  %v1744 = vtanh.pop %v1662
  %v1745 = vtanh.pop %v1666
  %v1746 = vxor.u32 %v1663, 2147483648
  %v1747 = vxor.u32 %v1667, 2147483648
  %v1748 = vmul.f32 %v1746, 1.442695
  %v1749 = vpow.pop %v1748
  %v1750 = vmul.f32 %v1747, 1.442695
  %v1751 = vpow.pop %v1750
  %v1752 = vadd.f32 %v1749, 1.0
  %v1753 = vadd.f32 %v1751, 1.0
  %v1754 = vrcp.pop %v1752
  %v1755 = vmul.f32 %v1752, %v1754
  %v1756 = vsub.f32 1.0, %v1755
  %v1757 = vmul.f32 %v1754, %v1756
  %v1758 = vadd.f32 %v1754, %v1757
  %vm1759 = vweird.f32 %v1752
  %vm1760 = vweird.f32 %v1754
  %vm1761 = vmor %vm1759, %vm1760
  %v1762 = vsel %vm1761, %v1754, %v1758
  %v1763 = vand.u32 2147483647, %v1752
  %vm1764 = vcmp.eq.f32.partialorder %v1763, 8.507059e+37
  %v1765 = vand.u32 %v1752, 2147483648
  %v1766 = vor.u32 1.1754944e-38, %v1765
  %v1767 = vsel %vm1764, %v1766, %v1762
  %v1768 = vmul.f32 1.0, %v1767
  %v1769 = vrcp.pop %v1753
  %v1770 = vmul.f32 %v1753, %v1769
  %v1771 = vsub.f32 1.0, %v1770
  %v1772 = vmul.f32 %v1769, %v1771
  %v1773 = vadd.f32 %v1769, %v1772
  %vm1774 = vweird.f32 %v1753
  %vm1775 = vweird.f32 %v1769
  %vm1776 = vmor %vm1774, %vm1775
  %v1777 = vsel %vm1776, %v1769, %v1773
  %v1778 = vand.u32 2147483647, %v1753
  %vm1779 = vcmp.eq.f32.partialorder %v1778, 8.507059e+37
  %v1780 = vand.u32 %v1753, 2147483648
  %v1781 = vor.u32 1.1754944e-38, %v1780
  %v1782 = vsel %vm1779, %v1781, %v1777
  %v1783 = vmul.f32 1.0, %v1782
  %v1784 = vld [vmem:[#allocation3] sm:$0xff]
  %v1785 = vld [vmem:[#allocation3 + $0x8] sm:$0xff]
  %v1786 = vmul.f32 %v1728, %v1784
  %v1787 = vmul.f32 %v1743, %v1785
  %v1788 = vmul.f32 %v1690, %v1744
  %v1789 = vmul.f32 %v1705, %v1745
  %v1790 = vadd.f32 %v1786, %v1788
  %v1791 = vadd.f32 %v1787, %v1789
  %v1792 = vtanh.pop %v1790
  %v1793 = vtanh.pop %v1791
  %v1794 = vmul.f32 %v1768, %v1792
  %v1795 = vmul.f32 %v1783, %v1793
  %1796 = vst [vmem:[#allocation2] sm:$0xff] %v1794
  %1797 = vst [vmem:[#allocation2 + $0x8] sm:$0xff] %v1795
  %1798 = vst [vmem:[#allocation3] sm:$0xff] %v1790
  %1799 = vst [vmem:[#allocation3 + $0x8] sm:$0xff] %v1791
  %s1800 = scalar_lea.vmem %s2, 96
  %1801 = vst [vmem:[%s1800] sm:$0xff] %v1794
  %1802 = vst [vmem:[%s1800 + $0x8] sm:$0xff] %v1795
  %s1803 = scalar_lea.vmem %s0, 448
  %v1804 = vld [vmem:[%s1803] sm:$0xff]
  %v1805 = vld [vmem:[%s1803 + $0x8] sm:$0xff]
  %v1806 = vld [vmem:[%s1803 + $0x10] sm:$0xff]
  %v1807 = vld [vmem:[%s1803 + $0x18] sm:$0xff]
  %v1808 = vld [vmem:[%s1803 + $0x20] sm:$0xff]
  %v1809 = vld [vmem:[%s1803 + $0x28] sm:$0xff]
  %v1810 = vld [vmem:[%s1803 + $0x30] sm:$0xff]
  %v1811 = vld [vmem:[%s1803 + $0x38] sm:$0xff]
  %v1812 = vld [vmem:[#allocation2] sm:$0xff]
  %v1813 = vld [vmem:[#allocation2 + $0x8] sm:$0xff]
  %1814 = vmatpush.msra.mxu0 %v79
  %1815 = vmatpush.msra.mxu0 %v75
  %1816 = vmatpush.msra.mxu0 %v71
  %1817 = vmatpush.msra.mxu0 %v67
  %1818 = vmatpush.msra.mxu0 %v63
  %1819 = vmatpush.msra.mxu0 %v59
  %1820 = vmatpush.msra.mxu0 %v55
  %1821 = vmatpush.msra.mxu0 %v51
  %1822 = vmatpush.msra.mxu0 %v47
  %1823 = vmatpush.msra.mxu0 %v43
  %1824 = vmatpush.msra.mxu0 %v39
  %1825 = vmatpush.msra.mxu0 %v35
  %1826 = vmatpush.msra.mxu0 %v31
  %1827 = vmatpush.msra.mxu0 %v27
  %1828 = vmatpush.msra.mxu0 %v23
  %1829 = vmatpush.msra.mxu0 %v19
  %1830 = vmatmul.f32.gmra.mxu0 %v1812
  %v1831 = vpop.f32.mrf.mxu0
  %v1832 = vadd.f32 0.0, %v1831
  %1833 = vmatmul.f32.gmra.mxu0 %v1813
  %v1834 = vpop.f32.mrf.mxu0
  %v1835 = vadd.f32 0.0, %v1834
  %1836 = vdwg.mxu0
  %1837 = vmatpush.msra.mxu0 %v80
  %1838 = vmatpush.msra.mxu0 %v76
  %1839 = vmatpush.msra.mxu0 %v72
  %1840 = vmatpush.msra.mxu0 %v68
  %1841 = vmatpush.msra.mxu0 %v64
  %1842 = vmatpush.msra.mxu0 %v60
  %1843 = vmatpush.msra.mxu0 %v56
  %1844 = vmatpush.msra.mxu0 %v52
  %1845 = vmatpush.msra.mxu0 %v48
  %1846 = vmatpush.msra.mxu0 %v44
  %1847 = vmatpush.msra.mxu0 %v40
  %1848 = vmatpush.msra.mxu0 %v36
  %1849 = vmatpush.msra.mxu0 %v32
  %1850 = vmatpush.msra.mxu0 %v28
  %1851 = vmatpush.msra.mxu0 %v24
  %1852 = vmatpush.msra.mxu0 %v20
  %1853 = vmatmul.f32.gmra.mxu0 %v1812
  %v1854 = vpop.f32.mrf.mxu0
  %v1855 = vadd.f32 0.0, %v1854
  %1856 = vmatmul.f32.gmra.mxu0 %v1813
  %v1857 = vpop.f32.mrf.mxu0
  %v1858 = vadd.f32 0.0, %v1857
  %1859 = vdwg.mxu0
  %1860 = vmatpush.msra.mxu0 %v81
  %1861 = vmatpush.msra.mxu0 %v77
  %1862 = vmatpush.msra.mxu0 %v73
  %1863 = vmatpush.msra.mxu0 %v69
  %1864 = vmatpush.msra.mxu0 %v65
  %1865 = vmatpush.msra.mxu0 %v61
  %1866 = vmatpush.msra.mxu0 %v57
  %1867 = vmatpush.msra.mxu0 %v53
  %1868 = vmatpush.msra.mxu0 %v49
  %1869 = vmatpush.msra.mxu0 %v45
  %1870 = vmatpush.msra.mxu0 %v41
  %1871 = vmatpush.msra.mxu0 %v37
  %1872 = vmatpush.msra.mxu0 %v33
  %1873 = vmatpush.msra.mxu0 %v29
  %1874 = vmatpush.msra.mxu0 %v25
  %1875 = vmatpush.msra.mxu0 %v21
  %1876 = vmatmul.f32.gmra.mxu0 %v1812
  %v1877 = vpop.f32.mrf.mxu0
  %v1878 = vadd.f32 0.0, %v1877
  %1879 = vmatmul.f32.gmra.mxu0 %v1813
  %v1880 = vpop.f32.mrf.mxu0
  %v1881 = vadd.f32 0.0, %v1880
  %1882 = vdwg.mxu0
  %1883 = vmatpush.msra.mxu0 %v82
  %1884 = vmatpush.msra.mxu0 %v78
  %1885 = vmatpush.msra.mxu0 %v74
  %1886 = vmatpush.msra.mxu0 %v70
  %1887 = vmatpush.msra.mxu0 %v66
  %1888 = vmatpush.msra.mxu0 %v62
  %1889 = vmatpush.msra.mxu0 %v58
  %1890 = vmatpush.msra.mxu0 %v54
  %1891 = vmatpush.msra.mxu0 %v50
  %1892 = vmatpush.msra.mxu0 %v46
  %1893 = vmatpush.msra.mxu0 %v42
  %1894 = vmatpush.msra.mxu0 %v38
  %1895 = vmatpush.msra.mxu0 %v34
  %1896 = vmatpush.msra.mxu0 %v30
  %1897 = vmatpush.msra.mxu0 %v26
  %1898 = vmatpush.msra.mxu0 %v22
  %1899 = vmatmul.f32.gmra.mxu0 %v1812
  %v1900 = vpop.f32.mrf.mxu0
  %v1901 = vadd.f32 0.0, %v1900
  %1902 = vmatmul.f32.gmra.mxu0 %v1813
  %v1903 = vpop.f32.mrf.mxu0
  %v1904 = vadd.f32 0.0, %v1903
  %1905 = vdwg.mxu0
  %v1906 = vadd.f32 %v1804, %v1832
  %v1907 = vadd.f32 %v1805, %v1855
  %v1908 = vadd.f32 %v1806, %v1878
  %v1909 = vadd.f32 %v1807, %v1901
  %v1910 = vadd.f32 %v1808, %v1835
  %v1911 = vadd.f32 %v1809, %v1858
  %v1912 = vadd.f32 %v1810, %v1881
  %v1913 = vadd.f32 %v1811, %v1904
  %v1914 = vxor.u32 %v1906, 2147483648
  %v1915 = vxor.u32 %v1910, 2147483648
  %v1916 = vmul.f32 %v1914, 1.442695
  %v1917 = vpow.pop %v1916
  %v1918 = vmul.f32 %v1915, 1.442695
  %v1919 = vpow.pop %v1918
  %v1920 = vadd.f32 %v1917, 1.0
  %v1921 = vadd.f32 %v1919, 1.0
  %v1922 = vrcp.pop %v1920
  %v1923 = vmul.f32 %v1920, %v1922
  %v1924 = vsub.f32 1.0, %v1923
  %v1925 = vmul.f32 %v1922, %v1924
  %v1926 = vadd.f32 %v1922, %v1925
  %vm1927 = vweird.f32 %v1920
  %vm1928 = vweird.f32 %v1922
  %vm1929 = vmor %vm1927, %vm1928
  %v1930 = vsel %vm1929, %v1922, %v1926
  %v1931 = vand.u32 2147483647, %v1920
  %vm1932 = vcmp.eq.f32.partialorder %v1931, 8.507059e+37
  %v1933 = vand.u32 %v1920, 2147483648
  %v1934 = vor.u32 1.1754944e-38, %v1933
  %v1935 = vsel %vm1932, %v1934, %v1930
  %v1936 = vmul.f32 1.0, %v1935
  %v1937 = vrcp.pop %v1921
  %v1938 = vmul.f32 %v1921, %v1937
  %v1939 = vsub.f32 1.0, %v1938
  %v1940 = vmul.f32 %v1937, %v1939
  %v1941 = vadd.f32 %v1937, %v1940
  %vm1942 = vweird.f32 %v1921
  %vm1943 = vweird.f32 %v1937
  %vm1944 = vmor %vm1942, %vm1943
  %v1945 = vsel %vm1944, %v1937, %v1941
  %v1946 = vand.u32 2147483647, %v1921
  %vm1947 = vcmp.eq.f32.partialorder %v1946, 8.507059e+37
  %v1948 = vand.u32 %v1921, 2147483648
  %v1949 = vor.u32 1.1754944e-38, %v1948
  %v1950 = vsel %vm1947, %v1949, %v1945
  %v1951 = vmul.f32 1.0, %v1950
  %v1952 = vxor.u32 %v1907, 2147483648
  %v1953 = vxor.u32 %v1911, 2147483648
  %v1954 = vmul.f32 %v1952, 1.442695
  %v1955 = vpow.pop %v1954
  %v1956 = vmul.f32 %v1953, 1.442695
  %v1957 = vpow.pop %v1956
  %v1958 = vadd.f32 %v1955, 1.0
  %v1959 = vadd.f32 %v1957, 1.0
  %v1960 = vrcp.pop %v1958
  %v1961 = vmul.f32 %v1958, %v1960
  %v1962 = vsub.f32 1.0, %v1961
  %v1963 = vmul.f32 %v1960, %v1962
  %v1964 = vadd.f32 %v1960, %v1963
  %vm1965 = vweird.f32 %v1958
  %vm1966 = vweird.f32 %v1960
  %vm1967 = vmor %vm1965, %vm1966
  %v1968 = vsel %vm1967, %v1960, %v1964
  %v1969 = vand.u32 2147483647, %v1958
  %vm1970 = vcmp.eq.f32.partialorder %v1969, 8.507059e+37
  %v1971 = vand.u32 %v1958, 2147483648
  %v1972 = vor.u32 1.1754944e-38, %v1971
  %v1973 = vsel %vm1970, %v1972, %v1968
  %v1974 = vmul.f32 1.0, %v1973
  %v1975 = vrcp.pop %v1959
  %v1976 = vmul.f32 %v1959, %v1975
  %v1977 = vsub.f32 1.0, %v1976
  %v1978 = vmul.f32 %v1975, %v1977
  %v1979 = vadd.f32 %v1975, %v1978
  %vm1980 = vweird.f32 %v1959
  %vm1981 = vweird.f32 %v1975
  %vm1982 = vmor %vm1980, %vm1981
  %v1983 = vsel %vm1982, %v1975, %v1979
  %v1984 = vand.u32 2147483647, %v1959
  %vm1985 = vcmp.eq.f32.partialorder %v1984, 8.507059e+37
  %v1986 = vand.u32 %v1959, 2147483648
  %v1987 = vor.u32 1.1754944e-38, %v1986
  %v1988 = vsel %vm1985, %v1987, %v1983
  %v1989 = vmul.f32 1.0, %v1988
  %v1990 = vtanh.pop %v1908
  %v1991 = vtanh.pop %v1912
  %v1992 = vxor.u32 %v1909, 2147483648
  %v1993 = vxor.u32 %v1913, 2147483648
  %v1994 = vmul.f32 %v1992, 1.442695
  %v1995 = vpow.pop %v1994
  %v1996 = vmul.f32 %v1993, 1.442695
  %v1997 = vpow.pop %v1996
  %v1998 = vadd.f32 %v1995, 1.0
  %v1999 = vadd.f32 %v1997, 1.0
  %v2000 = vrcp.pop %v1998
  %v2001 = vmul.f32 %v1998, %v2000
  %v2002 = vsub.f32 1.0, %v2001
  %v2003 = vmul.f32 %v2000, %v2002
  %v2004 = vadd.f32 %v2000, %v2003
  %vm2005 = vweird.f32 %v1998
  %vm2006 = vweird.f32 %v2000
  %vm2007 = vmor %vm2005, %vm2006
  %v2008 = vsel %vm2007, %v2000, %v2004
  %v2009 = vand.u32 2147483647, %v1998
  %vm2010 = vcmp.eq.f32.partialorder %v2009, 8.507059e+37
  %v2011 = vand.u32 %v1998, 2147483648
  %v2012 = vor.u32 1.1754944e-38, %v2011
  %v2013 = vsel %vm2010, %v2012, %v2008
  %v2014 = vmul.f32 1.0, %v2013
  %v2015 = vrcp.pop %v1999
  %v2016 = vmul.f32 %v1999, %v2015
  %v2017 = vsub.f32 1.0, %v2016
  %v2018 = vmul.f32 %v2015, %v2017
  %v2019 = vadd.f32 %v2015, %v2018
  %vm2020 = vweird.f32 %v1999
  %vm2021 = vweird.f32 %v2015
  %vm2022 = vmor %vm2020, %vm2021
  %v2023 = vsel %vm2022, %v2015, %v2019
  %v2024 = vand.u32 2147483647, %v1999
  %vm2025 = vcmp.eq.f32.partialorder %v2024, 8.507059e+37
  %v2026 = vand.u32 %v1999, 2147483648
  %v2027 = vor.u32 1.1754944e-38, %v2026
  %v2028 = vsel %vm2025, %v2027, %v2023
  %v2029 = vmul.f32 1.0, %v2028
  %v2030 = vld [vmem:[#allocation3] sm:$0xff]
  %v2031 = vld [vmem:[#allocation3 + $0x8] sm:$0xff]
  %v2032 = vmul.f32 %v1974, %v2030
  %v2033 = vmul.f32 %v1989, %v2031
  %v2034 = vmul.f32 %v1936, %v1990
  %v2035 = vmul.f32 %v1951, %v1991
  %v2036 = vadd.f32 %v2032, %v2034
  %v2037 = vadd.f32 %v2033, %v2035
  %v2038 = vtanh.pop %v2036
  %v2039 = vtanh.pop %v2037
  %v2040 = vmul.f32 %v2014, %v2038
  %v2041 = vmul.f32 %v2029, %v2039
  %2042 = vst [vmem:[#allocation2] sm:$0xff] %v2040
  %2043 = vst [vmem:[#allocation2 + $0x8] sm:$0xff] %v2041
  %2044 = vst [vmem:[#allocation3] sm:$0xff] %v2036
  %2045 = vst [vmem:[#allocation3 + $0x8] sm:$0xff] %v2037
  %s2046 = scalar_lea.vmem %s2, 112
  %2047 = vst [vmem:[%s2046] sm:$0xff] %v2040
  %2048 = vst [vmem:[%s2046 + $0x8] sm:$0xff] %v2041
  // Predicated region
  $region14: #{kuai_lstm_forward.3} parent=0 // pred_check
    _
  $region15: #{kuai_lstm_forward.3} parent=0 // pred_check_branch
    %2050 = sbr.rel (0) target = $region17
  $region16: #{kuai_lstm_forward.3} parent=0 // pred_region
    _
  $region17: #{kuai_lstm_forward.3} parent=0 // pred_fallthru
    _
  // Predicated region
  $region18: #{kuai_lstm_forward.3} parent=0 // pred_check
    _
  $region19: #{kuai_lstm_forward.3} parent=0 // pred_check_branch
    %2052 = sbr.rel (0) target = $region21
  $region20: #{kuai_lstm_forward.3} parent=0 // pred_region
    _
  $region21: #{kuai_lstm_forward.3} parent=0 // pred_fallthru
    _

</llo_original>
